<compile_context>
chip_gen: v7x
topology: tpu7x:2x2x1
jax: 0.10.0
libtpu: 0.0.40
codegen_flags: <defaults>
</compile_context>

<pallas_src>
import functools

import jax
import jax.numpy as jnp
from jax.experimental import pallas as pl
from jax.experimental.pallas import tpu as pltpu


def _round_up(x, m):
    return (x + m - 1) // m * m


# ----------------------------------------------------------------------------
# Fused DoubleConv Pallas kernel
# ----------------------------------------------------------------------------
def _double_conv_kernel(x_ref, code_ref, w1_ref, g1_ref, b1_ref,
                        w2_ref, g2_ref, b2_ref, o_ref,
                        slab1_ref, slab2_ref, *, height, width, p_true, eps):
    """Conv3x3 -> BN(train) -> ReLU -> Conv3x3 -> BN(train) -> ReLU.

    x_ref    : (C_in_pad, P_pad)        f32   activation slab, pixels lane-dense
    code_ref : (1, P_pad)               int32 packed (row<<16 | col); padded
                                              lanes hold a sentinel row
    wX_ref   : (C_out, 9*C_in_pad)      bf16  im2col weight matrix
    gX/bX    : (C, 1)                   f32   BatchNorm gamma / beta
    o_ref    : (C_out, P_pad)           f32
    slabX_ref: (9*C_in_pad, P_pad)      f32   VMEM im2col scratch
    """
    p_pad = x_ref.shape[-1]
    inv_n = 1.0 / float(p_true)          # true 1/(N*H*W); padded lanes excluded
    taps = [(oy, ox) for oy in (-1, 0, 1) for ox in (-1, 0, 1)]

    # Decode per-pixel coordinates in-kernel (no 9*P f32 mask tensor in HBM).
    code = code_ref[...]                               # (1, P) int32
    hh = code >> 16
    ww = code & 0xFFFF
    masks = []
    for oy, ox in taps:                                # conv zero-padding masks
        masks.append((hh + oy >= 0) & (hh + oy < height) &
                     (ww + ox >= 0) & (ww + ox < width))
    valid_f = (hh < height).astype(jnp.float32)        # real (non-padded) lanes

    def conv_bn_relu(act, slab_ref, w_ref, g_ref, b_ref):
        c = act.shape[0]
        # Build the im2col slab: 9 lane-rolls of the (C, P) activation slab,
        # zero-masked, written at 8-aligned sublane offsets.
        for t, (oy, ox) in enumerate(taps):
            d = oy * width + ox                        # flat pixel offset of tap
            shifted = act if d == 0 else pltpu.roll(act, (-d) % p_pad, 1)
            slab_ref[t * c:(t + 1) * c, :] = jnp.where(masks[t], shifted, 0.0)
        # One MXU matmul per conv (K = 9*C), bf16 operands, f32 accumulation.
        z = jnp.dot(w_ref[...], slab_ref[...].astype(jnp.bfloat16),
                    preferred_element_type=jnp.float32)
        # Training-mode BatchNorm (biased variance), two-pass/shifted stats to
        # avoid E[x^2]-E[x]^2 cancellation; fused affine + ReLU epilogue.
        mean = jnp.sum(z * valid_f, axis=1, keepdims=True) * inv_n      # (C,1)
        centered = (z - mean) * valid_f
        var = jnp.sum(centered * centered, axis=1, keepdims=True) * inv_n
        scale = g_ref[...] * jax.lax.rsqrt(var + eps)
        bias = b_ref[...] - mean * scale
        return jnp.maximum(z * scale + bias, 0.0)

    h1 = conv_bn_relu(x_ref[...], slab1_ref, w1_ref, g1_ref, b1_ref)
    h2 = conv_bn_relu(h1, slab2_ref, w2_ref, g2_ref, b2_ref)
    o_ref[...] = h2.astype(o_ref.dtype)


def double_conv_forward(params, x_nchw, eps=1e-5):
    """Forward pass of DoubleConv.  x_nchw: (N, C_in, H, W) -> (N, C_out, H, W)."""
    n, c_in, h, w = x_nchw.shape
    c_mid = params["w1"].shape[0]
    c_out = params["w2"].shape[0]

    p_true = n * h * w
    p_pad = _round_up(p_true, 128)        # lane-dense, unmasked stores
    c_in_pad = _round_up(c_in, 8)         # aligned sublane offsets in the slab
    c_mid_pad = _round_up(c_mid, 8)

    # (N, C, H, W) -> (C, N*H*W): channels on sublanes, pixels lane-dense.
    # TODO(synk): in a full UNet keep activations in this channel-major slab
    # layout across layers so the NCHW <-> slab transposes are paid once.
    x2d = jnp.transpose(x_nchw, (1, 0, 2, 3)).reshape(c_in, p_true)
    x2d = jnp.pad(x2d.astype(jnp.float32),
                  ((0, c_in_pad - c_in), (0, p_pad - p_true)))

    # Packed per-pixel coordinates (row in high 16 bits, col in low 16 bits).
    # Padded lanes get a sentinel row (32767) so every tap mask rejects them.
    idx = jnp.arange(p_true, dtype=jnp.int32)
    code = ((idx // w) % h) * 65536 + (idx % w)
    code = jnp.pad(code, (0, p_pad - p_true), constant_values=32767 * 65536)
    code = code.reshape(1, p_pad)

    # PyTorch OIHW weights -> (C_out, 9*C_in_pad) im2col matrices (tap-major,
    # channel-minor, matching the slab row order), cast once to bf16.
    def im2col_weights(w_oihw, rows_pad, cin_pad):
        c_o, c_i = w_oihw.shape[0], w_oihw.shape[1]
        wt = jnp.pad(w_oihw.astype(jnp.float32),
                     ((0, rows_pad - c_o), (0, cin_pad - c_i), (0, 0), (0, 0)))
        wt = jnp.transpose(wt, (0, 2, 3, 1)).reshape(rows_pad, 9 * cin_pad)
        return wt.astype(jnp.bfloat16)

    w1m = im2col_weights(params["w1"], c_mid_pad, c_in_pad)
    w2m = im2col_weights(params["w2"], c_out, c_mid_pad)
    g1 = jnp.pad(params["g1"].astype(jnp.float32),
                 (0, c_mid_pad - c_mid)).reshape(c_mid_pad, 1)
    b1 = jnp.pad(params["b1"].astype(jnp.float32),
                 (0, c_mid_pad - c_mid)).reshape(c_mid_pad, 1)
    g2 = params["g2"].reshape(c_out, 1).astype(jnp.float32)
    b2 = params["b2"].reshape(c_out, 1).astype(jnp.float32)

    out = pl.pallas_call(
        functools.partial(_double_conv_kernel,
                          height=h, width=w, p_true=p_true, eps=eps),
        out_shape=jax.ShapeDtypeStruct((c_out, p_pad), jnp.float32),
        grid=(1,),
        in_specs=[
            pl.BlockSpec((c_in_pad, p_pad), lambda i: (0, 0)),
            pl.BlockSpec((1, p_pad), lambda i: (0, 0)),
            pl.BlockSpec((c_mid_pad, 9 * c_in_pad), lambda i: (0, 0)),
            pl.BlockSpec((c_mid_pad, 1), lambda i: (0, 0)),
            pl.BlockSpec((c_mid_pad, 1), lambda i: (0, 0)),
            pl.BlockSpec((c_out, 9 * c_mid_pad), lambda i: (0, 0)),
            pl.BlockSpec((c_out, 1), lambda i: (0, 0)),
            pl.BlockSpec((c_out, 1), lambda i: (0, 0)),
        ],
        out_specs=pl.BlockSpec((c_out, p_pad), lambda i: (0, 0)),
        scratch_shapes=[
            pltpu.VMEM((9 * c_in_pad, p_pad), jnp.float32),
            pltpu.VMEM((9 * c_mid_pad, p_pad), jnp.float32),
        ],
        compiler_params=pltpu.CompilerParams(
            dimension_semantics=("arbitrary",),
            vmem_limit_bytes=32 * 1024 * 1024),
    )(x2d, code, w1m, g1, b1, w2m, g2, b2)

    # (C_out, P_pad) -> (N, C_out, H, W); drop padded lanes.
    out = out[:, :p_true].reshape(c_out, n, h, w)
    return jnp.transpose(out, (1, 0, 2, 3))


# ----------------------------------------------------------------------------
# Pure-JAX reference (f32) for validation
# ----------------------------------------------------------------------------
def reference_double_conv(params, x, eps=1e-5):
    def conv(x, w):
        return jax.lax.conv_general_dilated(
            x, w, window_strides=(1, 1), padding=((1, 1), (1, 1)),
            dimension_numbers=("NCHW", "OIHW", "NCHW"),
            precision=jax.lax.Precision.HIGHEST)

    def bn_relu(x, g, b):
        mean = jnp.mean(x, axis=(0, 2, 3), keepdims=True)
        var = jnp.mean((x - mean) ** 2, axis=(0, 2, 3), keepdims=True)
        y = (x - mean) * jax.lax.rsqrt(var + eps)
        y = y * g.reshape(1, -1, 1, 1) + b.reshape(1, -1, 1, 1)
        return jnp.maximum(y, 0.0)

    x = bn_relu(conv(x, params["w1"]), params["g1"], params["b1"])
    x = bn_relu(conv(x, params["w2"]), params["g2"], params["b2"])
    return x


# ----------------------------------------------------------------------------
# Deterministic parameter initialization (shapes match DoubleConv.__init__)
# ----------------------------------------------------------------------------
def init_double_conv_params(key, in_channels, out_channels, mid_channels=None):
    mid_channels = mid_channels or out_channels
    k1, k2, k3, k4, k5, k6 = jax.random.split(key, 6)

    def conv_w(k, c_out, c_in):
        fan_in = c_in * 9
        return (jax.random.normal(k, (c_out, c_in, 3, 3), jnp.float32)
                / jnp.sqrt(jnp.float32(fan_in)))

    return dict(
        w1=conv_w(k1, mid_channels, in_channels),
        g1=1.0 + 0.1 * jax.random.normal(k2, (mid_channels,), jnp.float32),
        b1=0.1 * jax.random.normal(k3, (mid_channels,), jnp.float32),
        w2=conv_w(k4, out_channels, mid_channels),
        g2=1.0 + 0.1 * jax.random.normal(k5, (out_channels,), jnp.float32),
        b2=0.1 * jax.random.normal(k6, (out_channels,), jnp.float32),
    )


if __name__ == "__main__":
    key = jax.random.PRNGKey(0)
    pkey, xkey = jax.random.split(key)

    in_channels, out_channels = 4, 32
    params = init_double_conv_params(pkey, in_channels, out_channels)
    x = jax.random.normal(xkey, (2, in_channels, 16, 16), jnp.float32)  # NCHW

    fwd = jax.jit(double_conv_forward)
    out = jax.block_until_ready(fwd(params, x))

    assert out.shape == (2, out_channels, 16, 16), out.shape
    assert bool(jnp.all(jnp.isfinite(out)))

    # bf16 matmul operands (f32 accumulation, f32 two-pass BN stats) vs a full
    # f32 reference: check both worst-case and RMS error.
    ref = jax.block_until_ready(reference_double_conv(params, x))
    max_err = float(jnp.max(jnp.abs(out - ref)))
    rms_err = float(jnp.sqrt(jnp.mean((out - ref) ** 2)))
    assert max_err < 1e-1, f"max abs error vs f32 reference: {max_err}"
    assert rms_err < 1e-2, f"rms error vs f32 reference: {rms_err}"

    print("KERNEL_OK")
</pallas_src>

<mosaic_0001>
module attributes {stable_mosaic.version = 11 : i64} {
  func.func @_double_conv_kernel(%arg0: i32, %arg1: memref<8x512xf32, #tpu.memory_space<vmem>>, %arg2: memref<1x512xi32, #tpu.memory_space<vmem>>, %arg3: memref<32x72xbf16, #tpu.memory_space<vmem>>, %arg4: memref<32x1xf32, #tpu.memory_space<vmem>>, %arg5: memref<32x1xf32, #tpu.memory_space<vmem>>, %arg6: memref<32x288xbf16, #tpu.memory_space<vmem>>, %arg7: memref<32x1xf32, #tpu.memory_space<vmem>>, %arg8: memref<32x1xf32, #tpu.memory_space<vmem>>, %arg9: memref<32x512xf32, #tpu.memory_space<vmem>>, %arg10: memref<72x512xf32, #tpu.memory_space<vmem>>, %arg11: memref<288x512xf32, #tpu.memory_space<vmem>>) attributes {dimension_semantics = [#tpu.dimension_semantics<arbitrary>], iteration_bounds = array<i64: 1>, scalar_prefetch = 0 : i64, scratch_operands = 2 : i64, tpu.core_type = #tpu.core_type<tc>, window_params = [{pipeline_mode = #tpu.pipeline_mode<synchronous>, transform_indices = @transform_0, window_bounds = array<i64: 8, 512>}, {pipeline_mode = #tpu.pipeline_mode<synchronous>, transform_indices = @transform_1, window_bounds = array<i64: 1, 512>}, {pipeline_mode = #tpu.pipeline_mode<synchronous>, transform_indices = @transform_2, window_bounds = array<i64: 32, 72>}, {pipeline_mode = #tpu.pipeline_mode<synchronous>, transform_indices = @transform_3, window_bounds = array<i64: 32, 1>}, {pipeline_mode = #tpu.pipeline_mode<synchronous>, transform_indices = @transform_4, window_bounds = array<i64: 32, 1>}, {pipeline_mode = #tpu.pipeline_mode<synchronous>, transform_indices = @transform_5, window_bounds = array<i64: 32, 288>}, {pipeline_mode = #tpu.pipeline_mode<synchronous>, transform_indices = @transform_6, window_bounds = array<i64: 32, 1>}, {pipeline_mode = #tpu.pipeline_mode<synchronous>, transform_indices = @transform_7, window_bounds = array<i64: 32, 1>}, {pipeline_mode = #tpu.pipeline_mode<synchronous>, transform_indices = @transform_8, window_bounds = array<i64: 32, 512>}]} {
    %c0 = arith.constant 0 : index
    %c0_0 = arith.constant 0 : index
    %0 = vector.load %arg2[%c0, %c0_0] : memref<1x512xi32, #tpu.memory_space<vmem>>, vector<1x512xi32>
    %c16_i32 = arith.constant 16 : i32
    %1 = vector.broadcast %c16_i32 : i32 to vector<1x512xi32>
    %2 = arith.shrsi %0, %1 : vector<1x512xi32>
    %c65535_i32 = arith.constant 65535 : i32
    %3 = vector.broadcast %c65535_i32 : i32 to vector<1x512xi32>
    %4 = arith.andi %0, %3 : vector<1x512xi32>
    %c-1_i32 = arith.constant -1 : i32
    %5 = vector.broadcast %c-1_i32 : i32 to vector<1x512xi32>
    %6 = arith.addi %2, %5 : vector<1x512xi32>
    %c0_i32 = arith.constant 0 : i32
    %7 = vector.broadcast %c0_i32 : i32 to vector<1x512xi32>
    %8 = arith.cmpi sge, %6, %7 : vector<1x512xi32>
    %c-1_i32_1 = arith.constant -1 : i32
    %9 = vector.broadcast %c-1_i32_1 : i32 to vector<1x512xi32>
    %10 = arith.addi %2, %9 : vector<1x512xi32>
    %c16_i32_2 = arith.constant 16 : i32
    %11 = vector.broadcast %c16_i32_2 : i32 to vector<1x512xi32>
    %12 = arith.cmpi slt, %10, %11 : vector<1x512xi32>
    %13 = arith.andi %8, %12 : vector<1x512xi1>
    %c-1_i32_3 = arith.constant -1 : i32
    %14 = vector.broadcast %c-1_i32_3 : i32 to vector<1x512xi32>
    %15 = arith.addi %4, %14 : vector<1x512xi32>
    %c0_i32_4 = arith.constant 0 : i32
    %16 = vector.broadcast %c0_i32_4 : i32 to vector<1x512xi32>
    %17 = arith.cmpi sge, %15, %16 : vector<1x512xi32>
    %18 = arith.andi %13, %17 : vector<1x512xi1>
    %c-1_i32_5 = arith.constant -1 : i32
    %19 = vector.broadcast %c-1_i32_5 : i32 to vector<1x512xi32>
    %20 = arith.addi %4, %19 : vector<1x512xi32>
    %c16_i32_6 = arith.constant 16 : i32
    %21 = vector.broadcast %c16_i32_6 : i32 to vector<1x512xi32>
    %22 = arith.cmpi slt, %20, %21 : vector<1x512xi32>
    %23 = arith.andi %18, %22 : vector<1x512xi1>
    %c-1_i32_7 = arith.constant -1 : i32
    %24 = vector.broadcast %c-1_i32_7 : i32 to vector<1x512xi32>
    %25 = arith.addi %2, %24 : vector<1x512xi32>
    %c0_i32_8 = arith.constant 0 : i32
    %26 = vector.broadcast %c0_i32_8 : i32 to vector<1x512xi32>
    %27 = arith.cmpi sge, %25, %26 : vector<1x512xi32>
    %c-1_i32_9 = arith.constant -1 : i32
    %28 = vector.broadcast %c-1_i32_9 : i32 to vector<1x512xi32>
    %29 = arith.addi %2, %28 : vector<1x512xi32>
    %c16_i32_10 = arith.constant 16 : i32
    %30 = vector.broadcast %c16_i32_10 : i32 to vector<1x512xi32>
    %31 = arith.cmpi slt, %29, %30 : vector<1x512xi32>
    %32 = arith.andi %27, %31 : vector<1x512xi1>
    %c0_i32_11 = arith.constant 0 : i32
    %33 = vector.broadcast %c0_i32_11 : i32 to vector<1x512xi32>
    %34 = arith.addi %4, %33 : vector<1x512xi32>
    %c0_i32_12 = arith.constant 0 : i32
    %35 = vector.broadcast %c0_i32_12 : i32 to vector<1x512xi32>
    %36 = arith.cmpi sge, %34, %35 : vector<1x512xi32>
    %37 = arith.andi %32, %36 : vector<1x512xi1>
    %c0_i32_13 = arith.constant 0 : i32
    %38 = vector.broadcast %c0_i32_13 : i32 to vector<1x512xi32>
    %39 = arith.addi %4, %38 : vector<1x512xi32>
    %c16_i32_14 = arith.constant 16 : i32
    %40 = vector.broadcast %c16_i32_14 : i32 to vector<1x512xi32>
    %41 = arith.cmpi slt, %39, %40 : vector<1x512xi32>
    %42 = arith.andi %37, %41 : vector<1x512xi1>
    %c-1_i32_15 = arith.constant -1 : i32
    %43 = vector.broadcast %c-1_i32_15 : i32 to vector<1x512xi32>
    %44 = arith.addi %2, %43 : vector<1x512xi32>
    %c0_i32_16 = arith.constant 0 : i32
    %45 = vector.broadcast %c0_i32_16 : i32 to vector<1x512xi32>
    %46 = arith.cmpi sge, %44, %45 : vector<1x512xi32>
    %c-1_i32_17 = arith.constant -1 : i32
    %47 = vector.broadcast %c-1_i32_17 : i32 to vector<1x512xi32>
    %48 = arith.addi %2, %47 : vector<1x512xi32>
    %c16_i32_18 = arith.constant 16 : i32
    %49 = vector.broadcast %c16_i32_18 : i32 to vector<1x512xi32>
    %50 = arith.cmpi slt, %48, %49 : vector<1x512xi32>
    %51 = arith.andi %46, %50 : vector<1x512xi1>
    %c1_i32 = arith.constant 1 : i32
    %52 = vector.broadcast %c1_i32 : i32 to vector<1x512xi32>
    %53 = arith.addi %4, %52 : vector<1x512xi32>
    %c0_i32_19 = arith.constant 0 : i32
    %54 = vector.broadcast %c0_i32_19 : i32 to vector<1x512xi32>
    %55 = arith.cmpi sge, %53, %54 : vector<1x512xi32>
    %56 = arith.andi %51, %55 : vector<1x512xi1>
    %c1_i32_20 = arith.constant 1 : i32
    %57 = vector.broadcast %c1_i32_20 : i32 to vector<1x512xi32>
    %58 = arith.addi %4, %57 : vector<1x512xi32>
    %c16_i32_21 = arith.constant 16 : i32
    %59 = vector.broadcast %c16_i32_21 : i32 to vector<1x512xi32>
    %60 = arith.cmpi slt, %58, %59 : vector<1x512xi32>
    %61 = arith.andi %56, %60 : vector<1x512xi1>
    %c0_i32_22 = arith.constant 0 : i32
    %62 = vector.broadcast %c0_i32_22 : i32 to vector<1x512xi32>
    %63 = arith.addi %2, %62 : vector<1x512xi32>
    %c0_i32_23 = arith.constant 0 : i32
    %64 = vector.broadcast %c0_i32_23 : i32 to vector<1x512xi32>
    %65 = arith.cmpi sge, %63, %64 : vector<1x512xi32>
    %c0_i32_24 = arith.constant 0 : i32
    %66 = vector.broadcast %c0_i32_24 : i32 to vector<1x512xi32>
    %67 = arith.addi %2, %66 : vector<1x512xi32>
    %c16_i32_25 = arith.constant 16 : i32
    %68 = vector.broadcast %c16_i32_25 : i32 to vector<1x512xi32>
    %69 = arith.cmpi slt, %67, %68 : vector<1x512xi32>
    %70 = arith.andi %65, %69 : vector<1x512xi1>
    %c-1_i32_26 = arith.constant -1 : i32
    %71 = vector.broadcast %c-1_i32_26 : i32 to vector<1x512xi32>
    %72 = arith.addi %4, %71 : vector<1x512xi32>
    %c0_i32_27 = arith.constant 0 : i32
    %73 = vector.broadcast %c0_i32_27 : i32 to vector<1x512xi32>
    %74 = arith.cmpi sge, %72, %73 : vector<1x512xi32>
    %75 = arith.andi %70, %74 : vector<1x512xi1>
    %c-1_i32_28 = arith.constant -1 : i32
    %76 = vector.broadcast %c-1_i32_28 : i32 to vector<1x512xi32>
    %77 = arith.addi %4, %76 : vector<1x512xi32>
    %c16_i32_29 = arith.constant 16 : i32
    %78 = vector.broadcast %c16_i32_29 : i32 to vector<1x512xi32>
    %79 = arith.cmpi slt, %77, %78 : vector<1x512xi32>
    %80 = arith.andi %75, %79 : vector<1x512xi1>
    %c0_i32_30 = arith.constant 0 : i32
    %81 = vector.broadcast %c0_i32_30 : i32 to vector<1x512xi32>
    %82 = arith.addi %2, %81 : vector<1x512xi32>
    %c0_i32_31 = arith.constant 0 : i32
    %83 = vector.broadcast %c0_i32_31 : i32 to vector<1x512xi32>
    %84 = arith.cmpi sge, %82, %83 : vector<1x512xi32>
    %c0_i32_32 = arith.constant 0 : i32
    %85 = vector.broadcast %c0_i32_32 : i32 to vector<1x512xi32>
    %86 = arith.addi %2, %85 : vector<1x512xi32>
    %c16_i32_33 = arith.constant 16 : i32
    %87 = vector.broadcast %c16_i32_33 : i32 to vector<1x512xi32>
    %88 = arith.cmpi slt, %86, %87 : vector<1x512xi32>
    %89 = arith.andi %84, %88 : vector<1x512xi1>
    %c0_i32_34 = arith.constant 0 : i32
    %90 = vector.broadcast %c0_i32_34 : i32 to vector<1x512xi32>
    %91 = arith.addi %4, %90 : vector<1x512xi32>
    %c0_i32_35 = arith.constant 0 : i32
    %92 = vector.broadcast %c0_i32_35 : i32 to vector<1x512xi32>
    %93 = arith.cmpi sge, %91, %92 : vector<1x512xi32>
    %94 = arith.andi %89, %93 : vector<1x512xi1>
    %c0_i32_36 = arith.constant 0 : i32
    %95 = vector.broadcast %c0_i32_36 : i32 to vector<1x512xi32>
    %96 = arith.addi %4, %95 : vector<1x512xi32>
    %c16_i32_37 = arith.constant 16 : i32
    %97 = vector.broadcast %c16_i32_37 : i32 to vector<1x512xi32>
    %98 = arith.cmpi slt, %96, %97 : vector<1x512xi32>
    %99 = arith.andi %94, %98 : vector<1x512xi1>
    %c0_i32_38 = arith.constant 0 : i32
    %100 = vector.broadcast %c0_i32_38 : i32 to vector<1x512xi32>
    %101 = arith.addi %2, %100 : vector<1x512xi32>
    %c0_i32_39 = arith.constant 0 : i32
    %102 = vector.broadcast %c0_i32_39 : i32 to vector<1x512xi32>
    %103 = arith.cmpi sge, %101, %102 : vector<1x512xi32>
    %c0_i32_40 = arith.constant 0 : i32
    %104 = vector.broadcast %c0_i32_40 : i32 to vector<1x512xi32>
    %105 = arith.addi %2, %104 : vector<1x512xi32>
    %c16_i32_41 = arith.constant 16 : i32
    %106 = vector.broadcast %c16_i32_41 : i32 to vector<1x512xi32>
    %107 = arith.cmpi slt, %105, %106 : vector<1x512xi32>
    %108 = arith.andi %103, %107 : vector<1x512xi1>
    %c1_i32_42 = arith.constant 1 : i32
    %109 = vector.broadcast %c1_i32_42 : i32 to vector<1x512xi32>
    %110 = arith.addi %4, %109 : vector<1x512xi32>
    %c0_i32_43 = arith.constant 0 : i32
    %111 = vector.broadcast %c0_i32_43 : i32 to vector<1x512xi32>
    %112 = arith.cmpi sge, %110, %111 : vector<1x512xi32>
    %113 = arith.andi %108, %112 : vector<1x512xi1>
    %c1_i32_44 = arith.constant 1 : i32
    %114 = vector.broadcast %c1_i32_44 : i32 to vector<1x512xi32>
    %115 = arith.addi %4, %114 : vector<1x512xi32>
    %c16_i32_45 = arith.constant 16 : i32
    %116 = vector.broadcast %c16_i32_45 : i32 to vector<1x512xi32>
    %117 = arith.cmpi slt, %115, %116 : vector<1x512xi32>
    %118 = arith.andi %113, %117 : vector<1x512xi1>
    %c1_i32_46 = arith.constant 1 : i32
    %119 = vector.broadcast %c1_i32_46 : i32 to vector<1x512xi32>
    %120 = arith.addi %2, %119 : vector<1x512xi32>
    %c0_i32_47 = arith.constant 0 : i32
    %121 = vector.broadcast %c0_i32_47 : i32 to vector<1x512xi32>
    %122 = arith.cmpi sge, %120, %121 : vector<1x512xi32>
    %c1_i32_48 = arith.constant 1 : i32
    %123 = vector.broadcast %c1_i32_48 : i32 to vector<1x512xi32>
    %124 = arith.addi %2, %123 : vector<1x512xi32>
    %c16_i32_49 = arith.constant 16 : i32
    %125 = vector.broadcast %c16_i32_49 : i32 to vector<1x512xi32>
    %126 = arith.cmpi slt, %124, %125 : vector<1x512xi32>
    %127 = arith.andi %122, %126 : vector<1x512xi1>
    %c-1_i32_50 = arith.constant -1 : i32
    %128 = vector.broadcast %c-1_i32_50 : i32 to vector<1x512xi32>
    %129 = arith.addi %4, %128 : vector<1x512xi32>
    %c0_i32_51 = arith.constant 0 : i32
    %130 = vector.broadcast %c0_i32_51 : i32 to vector<1x512xi32>
    %131 = arith.cmpi sge, %129, %130 : vector<1x512xi32>
    %132 = arith.andi %127, %131 : vector<1x512xi1>
    %c-1_i32_52 = arith.constant -1 : i32
    %133 = vector.broadcast %c-1_i32_52 : i32 to vector<1x512xi32>
    %134 = arith.addi %4, %133 : vector<1x512xi32>
    %c16_i32_53 = arith.constant 16 : i32
    %135 = vector.broadcast %c16_i32_53 : i32 to vector<1x512xi32>
    %136 = arith.cmpi slt, %134, %135 : vector<1x512xi32>
    %137 = arith.andi %132, %136 : vector<1x512xi1>
    %c1_i32_54 = arith.constant 1 : i32
    %138 = vector.broadcast %c1_i32_54 : i32 to vector<1x512xi32>
    %139 = arith.addi %2, %138 : vector<1x512xi32>
    %c0_i32_55 = arith.constant 0 : i32
    %140 = vector.broadcast %c0_i32_55 : i32 to vector<1x512xi32>
    %141 = arith.cmpi sge, %139, %140 : vector<1x512xi32>
    %c1_i32_56 = arith.constant 1 : i32
    %142 = vector.broadcast %c1_i32_56 : i32 to vector<1x512xi32>
    %143 = arith.addi %2, %142 : vector<1x512xi32>
    %c16_i32_57 = arith.constant 16 : i32
    %144 = vector.broadcast %c16_i32_57 : i32 to vector<1x512xi32>
    %145 = arith.cmpi slt, %143, %144 : vector<1x512xi32>
    %146 = arith.andi %141, %145 : vector<1x512xi1>
    %c0_i32_58 = arith.constant 0 : i32
    %147 = vector.broadcast %c0_i32_58 : i32 to vector<1x512xi32>
    %148 = arith.addi %4, %147 : vector<1x512xi32>
    %c0_i32_59 = arith.constant 0 : i32
    %149 = vector.broadcast %c0_i32_59 : i32 to vector<1x512xi32>
    %150 = arith.cmpi sge, %148, %149 : vector<1x512xi32>
    %151 = arith.andi %146, %150 : vector<1x512xi1>
    %c0_i32_60 = arith.constant 0 : i32
    %152 = vector.broadcast %c0_i32_60 : i32 to vector<1x512xi32>
    %153 = arith.addi %4, %152 : vector<1x512xi32>
    %c16_i32_61 = arith.constant 16 : i32
    %154 = vector.broadcast %c16_i32_61 : i32 to vector<1x512xi32>
    %155 = arith.cmpi slt, %153, %154 : vector<1x512xi32>
    %156 = arith.andi %151, %155 : vector<1x512xi1>
    %c1_i32_62 = arith.constant 1 : i32
    %157 = vector.broadcast %c1_i32_62 : i32 to vector<1x512xi32>
    %158 = arith.addi %2, %157 : vector<1x512xi32>
    %c0_i32_63 = arith.constant 0 : i32
    %159 = vector.broadcast %c0_i32_63 : i32 to vector<1x512xi32>
    %160 = arith.cmpi sge, %158, %159 : vector<1x512xi32>
    %c1_i32_64 = arith.constant 1 : i32
    %161 = vector.broadcast %c1_i32_64 : i32 to vector<1x512xi32>
    %162 = arith.addi %2, %161 : vector<1x512xi32>
    %c16_i32_65 = arith.constant 16 : i32
    %163 = vector.broadcast %c16_i32_65 : i32 to vector<1x512xi32>
    %164 = arith.cmpi slt, %162, %163 : vector<1x512xi32>
    %165 = arith.andi %160, %164 : vector<1x512xi1>
    %c1_i32_66 = arith.constant 1 : i32
    %166 = vector.broadcast %c1_i32_66 : i32 to vector<1x512xi32>
    %167 = arith.addi %4, %166 : vector<1x512xi32>
    %c0_i32_67 = arith.constant 0 : i32
    %168 = vector.broadcast %c0_i32_67 : i32 to vector<1x512xi32>
    %169 = arith.cmpi sge, %167, %168 : vector<1x512xi32>
    %170 = arith.andi %165, %169 : vector<1x512xi1>
    %c1_i32_68 = arith.constant 1 : i32
    %171 = vector.broadcast %c1_i32_68 : i32 to vector<1x512xi32>
    %172 = arith.addi %4, %171 : vector<1x512xi32>
    %c16_i32_69 = arith.constant 16 : i32
    %173 = vector.broadcast %c16_i32_69 : i32 to vector<1x512xi32>
    %174 = arith.cmpi slt, %172, %173 : vector<1x512xi32>
    %175 = arith.andi %170, %174 : vector<1x512xi1>
    %c16_i32_70 = arith.constant 16 : i32
    %176 = vector.broadcast %c16_i32_70 : i32 to vector<1x512xi32>
    %177 = arith.cmpi slt, %2, %176 : vector<1x512xi32>
    %178 = arith.extui %177 : vector<1x512xi1> to vector<1x512xi32>
    %179 = arith.sitofp %178 : vector<1x512xi32> to vector<1x512xf32>
    %c0_71 = arith.constant 0 : index
    %c0_72 = arith.constant 0 : index
    %180 = vector.load %arg1[%c0_71, %c0_72] : memref<8x512xf32, #tpu.memory_space<vmem>>, vector<8x512xf32>
    %c17_i32 = arith.constant 17 : i32
    %181 = tpu.dynamic_rotate %180 by %c17_i32 dim 1 : vector<8x512xf32>, i32 -> vector<8x512xf32>
    %cst = arith.constant 0.000000e+00 : f32
    %182 = vector.shape_cast %23 : vector<1x512xi1> to vector<1x512xi1>
    %183 = vector.broadcast %182 : vector<1x512xi1> to vector<8x512xi1>
    %184 = vector.broadcast %cst : f32 to vector<8x512xf32>
    %185 = arith.select %183, %181, %184 : vector<8x512xi1>, vector<8x512xf32>
    %c0_73 = arith.constant 0 : index
    %c0_74 = arith.constant 0 : index
    %186 = vector.load %arg10[%c0_73, %c0_74] : memref<72x512xf32, #tpu.memory_space<vmem>>, vector<8x512xf32>
    tpu.vector_store %arg10[%c0_73, %c0_74], %185 {strides = array<i32>} : memref<72x512xf32, #tpu.memory_space<vmem>>, vector<8x512xf32>,
    %c16_i32_75 = arith.constant 16 : i32
    %187 = tpu.dynamic_rotate %180 by %c16_i32_75 dim 1 : vector<8x512xf32>, i32 -> vector<8x512xf32>
    %cst_76 = arith.constant 0.000000e+00 : f32
    %188 = vector.shape_cast %42 : vector<1x512xi1> to vector<1x512xi1>
    %189 = vector.broadcast %188 : vector<1x512xi1> to vector<8x512xi1>
    %190 = vector.broadcast %cst_76 : f32 to vector<8x512xf32>
    %191 = arith.select %189, %187, %190 : vector<8x512xi1>, vector<8x512xf32>
    %c8 = arith.constant 8 : index
    %c0_77 = arith.constant 0 : index
    %192 = vector.load %arg10[%c8, %c0_77] : memref<72x512xf32, #tpu.memory_space<vmem>>, vector<8x512xf32>
    tpu.vector_store %arg10[%c8, %c0_77], %191 {strides = array<i32>} : memref<72x512xf32, #tpu.memory_space<vmem>>, vector<8x512xf32>,
    %c15_i32 = arith.constant 15 : i32
    %193 = tpu.dynamic_rotate %180 by %c15_i32 dim 1 : vector<8x512xf32>, i32 -> vector<8x512xf32>
    %cst_78 = arith.constant 0.000000e+00 : f32
    %194 = vector.shape_cast %61 : vector<1x512xi1> to vector<1x512xi1>
    %195 = vector.broadcast %194 : vector<1x512xi1> to vector<8x512xi1>
    %196 = vector.broadcast %cst_78 : f32 to vector<8x512xf32>
    %197 = arith.select %195, %193, %196 : vector<8x512xi1>, vector<8x512xf32>
    %c16 = arith.constant 16 : index
    %c0_79 = arith.constant 0 : index
    %198 = vector.load %arg10[%c16, %c0_79] : memref<72x512xf32, #tpu.memory_space<vmem>>, vector<8x512xf32>
    tpu.vector_store %arg10[%c16, %c0_79], %197 {strides = array<i32>} : memref<72x512xf32, #tpu.memory_space<vmem>>, vector<8x512xf32>,
    %c1_i32_80 = arith.constant 1 : i32
    %199 = tpu.dynamic_rotate %180 by %c1_i32_80 dim 1 : vector<8x512xf32>, i32 -> vector<8x512xf32>
    %cst_81 = arith.constant 0.000000e+00 : f32
    %200 = vector.shape_cast %80 : vector<1x512xi1> to vector<1x512xi1>
    %201 = vector.broadcast %200 : vector<1x512xi1> to vector<8x512xi1>
    %202 = vector.broadcast %cst_81 : f32 to vector<8x512xf32>
    %203 = arith.select %201, %199, %202 : vector<8x512xi1>, vector<8x512xf32>
    %c24 = arith.constant 24 : index
    %c0_82 = arith.constant 0 : index
    %204 = vector.load %arg10[%c24, %c0_82] : memref<72x512xf32, #tpu.memory_space<vmem>>, vector<8x512xf32>
    tpu.vector_store %arg10[%c24, %c0_82], %203 {strides = array<i32>} : memref<72x512xf32, #tpu.memory_space<vmem>>, vector<8x512xf32>,
    %cst_83 = arith.constant 0.000000e+00 : f32
    %205 = vector.shape_cast %99 : vector<1x512xi1> to vector<1x512xi1>
    %206 = vector.broadcast %205 : vector<1x512xi1> to vector<8x512xi1>
    %207 = vector.broadcast %cst_83 : f32 to vector<8x512xf32>
    %208 = arith.select %206, %180, %207 : vector<8x512xi1>, vector<8x512xf32>
    %c32 = arith.constant 32 : index
    %c0_84 = arith.constant 0 : index
    %209 = vector.load %arg10[%c32, %c0_84] : memref<72x512xf32, #tpu.memory_space<vmem>>, vector<8x512xf32>
    tpu.vector_store %arg10[%c32, %c0_84], %208 {strides = array<i32>} : memref<72x512xf32, #tpu.memory_space<vmem>>, vector<8x512xf32>,
    %c511_i32 = arith.constant 511 : i32
    %210 = tpu.dynamic_rotate %180 by %c511_i32 dim 1 : vector<8x512xf32>, i32 -> vector<8x512xf32>
    %cst_85 = arith.constant 0.000000e+00 : f32
    %211 = vector.shape_cast %118 : vector<1x512xi1> to vector<1x512xi1>
    %212 = vector.broadcast %211 : vector<1x512xi1> to vector<8x512xi1>
    %213 = vector.broadcast %cst_85 : f32 to vector<8x512xf32>
    %214 = arith.select %212, %210, %213 : vector<8x512xi1>, vector<8x512xf32>
    %c40 = arith.constant 40 : index
    %c0_86 = arith.constant 0 : index
    %215 = vector.load %arg10[%c40, %c0_86] : memref<72x512xf32, #tpu.memory_space<vmem>>, vector<8x512xf32>
    tpu.vector_store %arg10[%c40, %c0_86], %214 {strides = array<i32>} : memref<72x512xf32, #tpu.memory_space<vmem>>, vector<8x512xf32>,
    %c497_i32 = arith.constant 497 : i32
    %216 = tpu.dynamic_rotate %180 by %c497_i32 dim 1 : vector<8x512xf32>, i32 -> vector<8x512xf32>
    %cst_87 = arith.constant 0.000000e+00 : f32
    %217 = vector.shape_cast %137 : vector<1x512xi1> to vector<1x512xi1>
    %218 = vector.broadcast %217 : vector<1x512xi1> to vector<8x512xi1>
    %219 = vector.broadcast %cst_87 : f32 to vector<8x512xf32>
    %220 = arith.select %218, %216, %219 : vector<8x512xi1>, vector<8x512xf32>
    %c48 = arith.constant 48 : index
    %c0_88 = arith.constant 0 : index
    %221 = vector.load %arg10[%c48, %c0_88] : memref<72x512xf32, #tpu.memory_space<vmem>>, vector<8x512xf32>
    tpu.vector_store %arg10[%c48, %c0_88], %220 {strides = array<i32>} : memref<72x512xf32, #tpu.memory_space<vmem>>, vector<8x512xf32>,
    %c496_i32 = arith.constant 496 : i32
    %222 = tpu.dynamic_rotate %180 by %c496_i32 dim 1 : vector<8x512xf32>, i32 -> vector<8x512xf32>
    %cst_89 = arith.constant 0.000000e+00 : f32
    %223 = vector.shape_cast %156 : vector<1x512xi1> to vector<1x512xi1>
    %224 = vector.broadcast %223 : vector<1x512xi1> to vector<8x512xi1>
    %225 = vector.broadcast %cst_89 : f32 to vector<8x512xf32>
    %226 = arith.select %224, %222, %225 : vector<8x512xi1>, vector<8x512xf32>
    %c56 = arith.constant 56 : index
    %c0_90 = arith.constant 0 : index
    %227 = vector.load %arg10[%c56, %c0_90] : memref<72x512xf32, #tpu.memory_space<vmem>>, vector<8x512xf32>
    tpu.vector_store %arg10[%c56, %c0_90], %226 {strides = array<i32>} : memref<72x512xf32, #tpu.memory_space<vmem>>, vector<8x512xf32>,
    %c495_i32 = arith.constant 495 : i32
    %228 = tpu.dynamic_rotate %180 by %c495_i32 dim 1 : vector<8x512xf32>, i32 -> vector<8x512xf32>
    %cst_91 = arith.constant 0.000000e+00 : f32
    %229 = vector.shape_cast %175 : vector<1x512xi1> to vector<1x512xi1>
    %230 = vector.broadcast %229 : vector<1x512xi1> to vector<8x512xi1>
    %231 = vector.broadcast %cst_91 : f32 to vector<8x512xf32>
    %232 = arith.select %230, %228, %231 : vector<8x512xi1>, vector<8x512xf32>
    %c64 = arith.constant 64 : index
    %c0_92 = arith.constant 0 : index
    %233 = vector.load %arg10[%c64, %c0_92] : memref<72x512xf32, #tpu.memory_space<vmem>>, vector<8x512xf32>
    tpu.vector_store %arg10[%c64, %c0_92], %232 {strides = array<i32>} : memref<72x512xf32, #tpu.memory_space<vmem>>, vector<8x512xf32>,
    %c0_93 = arith.constant 0 : index
    %c0_94 = arith.constant 0 : index
    %234 = vector.load %arg3[%c0_93, %c0_94] : memref<32x72xbf16, #tpu.memory_space<vmem>>, vector<32x72xbf16>
    %c0_95 = arith.constant 0 : index
    %c0_96 = arith.constant 0 : index
    %235 = vector.load %arg10[%c0_95, %c0_96] : memref<72x512xf32, #tpu.memory_space<vmem>>, vector<72x512xf32>
    %236 = arith.truncf %235 : vector<72x512xf32> to vector<72x512xbf16>
    %cst_97 = arith.constant dense<0.000000e+00> : vector<32x512xf32>
    %237 = tpu.matmul %234, %236, %cst_97 {dimension_numbers = #tpu.dot_dimension_numbers<[1], [0], [0], [1], [0, 0, 1, 1], [], []>} : vector<32x72xbf16>, vector<72x512xbf16>, vector<32x512xf32> -> vector<32x512xf32>
    %238 = vector.broadcast %179 : vector<1x512xf32> to vector<32x512xf32>
    %239 = arith.mulf %237, %238 : vector<32x512xf32>
    %cst_98 = arith.constant dense<0.000000e+00> : vector<32xf32>
    %240 = vector.multi_reduction <add>, %239, %cst_98 [1] : vector<32x512xf32> to vector<32xf32>
    %241 = vector.shape_cast %240 : vector<32xf32> to vector<32x1xf32>
    %cst_99 = arith.constant 0.001953125 : f32
    %242 = vector.broadcast %cst_99 : f32 to vector<32x1xf32>
    %243 = arith.mulf %241, %242 : vector<32x1xf32>
    %244 = vector.broadcast %243 : vector<32x1xf32> to vector<32x512xf32>
    %245 = arith.subf %237, %244 : vector<32x512xf32>
    %246 = vector.broadcast %179 : vector<1x512xf32> to vector<32x512xf32>
    %247 = arith.mulf %245, %246 : vector<32x512xf32>
    %248 = arith.mulf %247, %247 : vector<32x512xf32>
    %cst_100 = arith.constant dense<0.000000e+00> : vector<32xf32>
    %249 = vector.multi_reduction <add>, %248, %cst_100 [1] : vector<32x512xf32> to vector<32xf32>
    %250 = vector.shape_cast %249 : vector<32xf32> to vector<32x1xf32>
    %cst_101 = arith.constant 0.001953125 : f32
    %251 = vector.broadcast %cst_101 : f32 to vector<32x1xf32>
    %252 = arith.mulf %250, %251 : vector<32x1xf32>
    %c0_102 = arith.constant 0 : index
    %c0_103 = arith.constant 0 : index
    %253 = vector.load %arg4[%c0_102, %c0_103] : memref<32x1xf32, #tpu.memory_space<vmem>>, vector<32x1xf32>
    %cst_104 = arith.constant 9.99999974E-6 : f32
    %254 = vector.broadcast %cst_104 : f32 to vector<32x1xf32>
    %255 = arith.addf %252, %254 : vector<32x1xf32>
    %256 = math.rsqrt %255 : vector<32x1xf32>
    %257 = arith.mulf %253, %256 : vector<32x1xf32>
    %c0_105 = arith.constant 0 : index
    %c0_106 = arith.constant 0 : index
    %258 = vector.load %arg5[%c0_105, %c0_106] : memref<32x1xf32, #tpu.memory_space<vmem>>, vector<32x1xf32>
    %259 = arith.mulf %243, %257 : vector<32x1xf32>
    %260 = arith.subf %258, %259 : vector<32x1xf32>
    %261 = vector.broadcast %257 : vector<32x1xf32> to vector<32x512xf32>
    %262 = arith.mulf %237, %261 : vector<32x512xf32>
    %263 = vector.broadcast %260 : vector<32x1xf32> to vector<32x512xf32>
    %264 = arith.addf %262, %263 : vector<32x512xf32>
    %cst_107 = arith.constant 0.000000e+00 : f32
    %265 = vector.broadcast %cst_107 : f32 to vector<32x512xf32>
    %266 = arith.maximumf %264, %265 : vector<32x512xf32>
    %c17_i32_108 = arith.constant 17 : i32
    %267 = tpu.dynamic_rotate %266 by %c17_i32_108 dim 1 : vector<32x512xf32>, i32 -> vector<32x512xf32>
    %cst_109 = arith.constant 0.000000e+00 : f32
    %268 = vector.shape_cast %23 : vector<1x512xi1> to vector<1x512xi1>
    %269 = vector.broadcast %268 : vector<1x512xi1> to vector<32x512xi1>
    %270 = vector.broadcast %cst_109 : f32 to vector<32x512xf32>
    %271 = arith.select %269, %267, %270 : vector<32x512xi1>, vector<32x512xf32>
    %c0_110 = arith.constant 0 : index
    %c0_111 = arith.constant 0 : index
    %272 = vector.load %arg11[%c0_110, %c0_111] : memref<288x512xf32, #tpu.memory_space<vmem>>, vector<32x512xf32>
    tpu.vector_store %arg11[%c0_110, %c0_111], %271 {strides = array<i32>} : memref<288x512xf32, #tpu.memory_space<vmem>>, vector<32x512xf32>,
    %c16_i32_112 = arith.constant 16 : i32
    %273 = tpu.dynamic_rotate %266 by %c16_i32_112 dim 1 : vector<32x512xf32>, i32 -> vector<32x512xf32>
    %cst_113 = arith.constant 0.000000e+00 : f32
    %274 = vector.shape_cast %42 : vector<1x512xi1> to vector<1x512xi1>
    %275 = vector.broadcast %274 : vector<1x512xi1> to vector<32x512xi1>
    %276 = vector.broadcast %cst_113 : f32 to vector<32x512xf32>
    %277 = arith.select %275, %273, %276 : vector<32x512xi1>, vector<32x512xf32>
    %c32_114 = arith.constant 32 : index
    %c0_115 = arith.constant 0 : index
    %278 = vector.load %arg11[%c32_114, %c0_115] : memref<288x512xf32, #tpu.memory_space<vmem>>, vector<32x512xf32>
    tpu.vector_store %arg11[%c32_114, %c0_115], %277 {strides = array<i32>} : memref<288x512xf32, #tpu.memory_space<vmem>>, vector<32x512xf32>,
    %c15_i32_116 = arith.constant 15 : i32
    %279 = tpu.dynamic_rotate %266 by %c15_i32_116 dim 1 : vector<32x512xf32>, i32 -> vector<32x512xf32>
    %cst_117 = arith.constant 0.000000e+00 : f32
    %280 = vector.shape_cast %61 : vector<1x512xi1> to vector<1x512xi1>
    %281 = vector.broadcast %280 : vector<1x512xi1> to vector<32x512xi1>
    %282 = vector.broadcast %cst_117 : f32 to vector<32x512xf32>
    %283 = arith.select %281, %279, %282 : vector<32x512xi1>, vector<32x512xf32>
    %c64_118 = arith.constant 64 : index
    %c0_119 = arith.constant 0 : index
    %284 = vector.load %arg11[%c64_118, %c0_119] : memref<288x512xf32, #tpu.memory_space<vmem>>, vector<32x512xf32>
    tpu.vector_store %arg11[%c64_118, %c0_119], %283 {strides = array<i32>} : memref<288x512xf32, #tpu.memory_space<vmem>>, vector<32x512xf32>,
    %c1_i32_120 = arith.constant 1 : i32
    %285 = tpu.dynamic_rotate %266 by %c1_i32_120 dim 1 : vector<32x512xf32>, i32 -> vector<32x512xf32>
    %cst_121 = arith.constant 0.000000e+00 : f32
    %286 = vector.shape_cast %80 : vector<1x512xi1> to vector<1x512xi1>
    %287 = vector.broadcast %286 : vector<1x512xi1> to vector<32x512xi1>
    %288 = vector.broadcast %cst_121 : f32 to vector<32x512xf32>
    %289 = arith.select %287, %285, %288 : vector<32x512xi1>, vector<32x512xf32>
    %c96 = arith.constant 96 : index
    %c0_122 = arith.constant 0 : index
    %290 = vector.load %arg11[%c96, %c0_122] : memref<288x512xf32, #tpu.memory_space<vmem>>, vector<32x512xf32>
    tpu.vector_store %arg11[%c96, %c0_122], %289 {strides = array<i32>} : memref<288x512xf32, #tpu.memory_space<vmem>>, vector<32x512xf32>,
    %cst_123 = arith.constant 0.000000e+00 : f32
    %291 = vector.shape_cast %99 : vector<1x512xi1> to vector<1x512xi1>
    %292 = vector.broadcast %291 : vector<1x512xi1> to vector<32x512xi1>
    %293 = vector.broadcast %cst_123 : f32 to vector<32x512xf32>
    %294 = arith.select %292, %266, %293 : vector<32x512xi1>, vector<32x512xf32>
    %c128 = arith.constant 128 : index
    %c0_124 = arith.constant 0 : index
    %295 = vector.load %arg11[%c128, %c0_124] : memref<288x512xf32, #tpu.memory_space<vmem>>, vector<32x512xf32>
    tpu.vector_store %arg11[%c128, %c0_124], %294 {strides = array<i32>} : memref<288x512xf32, #tpu.memory_space<vmem>>, vector<32x512xf32>,
    %c511_i32_125 = arith.constant 511 : i32
    %296 = tpu.dynamic_rotate %266 by %c511_i32_125 dim 1 : vector<32x512xf32>, i32 -> vector<32x512xf32>
    %cst_126 = arith.constant 0.000000e+00 : f32
    %297 = vector.shape_cast %118 : vector<1x512xi1> to vector<1x512xi1>
    %298 = vector.broadcast %297 : vector<1x512xi1> to vector<32x512xi1>
    %299 = vector.broadcast %cst_126 : f32 to vector<32x512xf32>
    %300 = arith.select %298, %296, %299 : vector<32x512xi1>, vector<32x512xf32>
    %c160 = arith.constant 160 : index
    %c0_127 = arith.constant 0 : index
    %301 = vector.load %arg11[%c160, %c0_127] : memref<288x512xf32, #tpu.memory_space<vmem>>, vector<32x512xf32>
    tpu.vector_store %arg11[%c160, %c0_127], %300 {strides = array<i32>} : memref<288x512xf32, #tpu.memory_space<vmem>>, vector<32x512xf32>,
    %c497_i32_128 = arith.constant 497 : i32
    %302 = tpu.dynamic_rotate %266 by %c497_i32_128 dim 1 : vector<32x512xf32>, i32 -> vector<32x512xf32>
    %cst_129 = arith.constant 0.000000e+00 : f32
    %303 = vector.shape_cast %137 : vector<1x512xi1> to vector<1x512xi1>
    %304 = vector.broadcast %303 : vector<1x512xi1> to vector<32x512xi1>
    %305 = vector.broadcast %cst_129 : f32 to vector<32x512xf32>
    %306 = arith.select %304, %302, %305 : vector<32x512xi1>, vector<32x512xf32>
    %c192 = arith.constant 192 : index
    %c0_130 = arith.constant 0 : index
    %307 = vector.load %arg11[%c192, %c0_130] : memref<288x512xf32, #tpu.memory_space<vmem>>, vector<32x512xf32>
    tpu.vector_store %arg11[%c192, %c0_130], %306 {strides = array<i32>} : memref<288x512xf32, #tpu.memory_space<vmem>>, vector<32x512xf32>,
    %c496_i32_131 = arith.constant 496 : i32
    %308 = tpu.dynamic_rotate %266 by %c496_i32_131 dim 1 : vector<32x512xf32>, i32 -> vector<32x512xf32>
    %cst_132 = arith.constant 0.000000e+00 : f32
    %309 = vector.shape_cast %156 : vector<1x512xi1> to vector<1x512xi1>
    %310 = vector.broadcast %309 : vector<1x512xi1> to vector<32x512xi1>
    %311 = vector.broadcast %cst_132 : f32 to vector<32x512xf32>
    %312 = arith.select %310, %308, %311 : vector<32x512xi1>, vector<32x512xf32>
    %c224 = arith.constant 224 : index
    %c0_133 = arith.constant 0 : index
    %313 = vector.load %arg11[%c224, %c0_133] : memref<288x512xf32, #tpu.memory_space<vmem>>, vector<32x512xf32>
    tpu.vector_store %arg11[%c224, %c0_133], %312 {strides = array<i32>} : memref<288x512xf32, #tpu.memory_space<vmem>>, vector<32x512xf32>,
    %c495_i32_134 = arith.constant 495 : i32
    %314 = tpu.dynamic_rotate %266 by %c495_i32_134 dim 1 : vector<32x512xf32>, i32 -> vector<32x512xf32>
    %cst_135 = arith.constant 0.000000e+00 : f32
    %315 = vector.shape_cast %175 : vector<1x512xi1> to vector<1x512xi1>
    %316 = vector.broadcast %315 : vector<1x512xi1> to vector<32x512xi1>
    %317 = vector.broadcast %cst_135 : f32 to vector<32x512xf32>
    %318 = arith.select %316, %314, %317 : vector<32x512xi1>, vector<32x512xf32>
    %c256 = arith.constant 256 : index
    %c0_136 = arith.constant 0 : index
    %319 = vector.load %arg11[%c256, %c0_136] : memref<288x512xf32, #tpu.memory_space<vmem>>, vector<32x512xf32>
    tpu.vector_store %arg11[%c256, %c0_136], %318 {strides = array<i32>} : memref<288x512xf32, #tpu.memory_space<vmem>>, vector<32x512xf32>,
    %c0_137 = arith.constant 0 : index
    %c0_138 = arith.constant 0 : index
    %320 = vector.load %arg6[%c0_137, %c0_138] : memref<32x288xbf16, #tpu.memory_space<vmem>>, vector<32x288xbf16>
    %c0_139 = arith.constant 0 : index
    %c0_140 = arith.constant 0 : index
    %321 = vector.load %arg11[%c0_139, %c0_140] : memref<288x512xf32, #tpu.memory_space<vmem>>, vector<288x512xf32>
    %322 = arith.truncf %321 : vector<288x512xf32> to vector<288x512xbf16>
    %cst_141 = arith.constant dense<0.000000e+00> : vector<32x512xf32>
    %323 = tpu.matmul %320, %322, %cst_141 {dimension_numbers = #tpu.dot_dimension_numbers<[1], [0], [0], [1], [0, 0, 1, 1], [], []>} : vector<32x288xbf16>, vector<288x512xbf16>, vector<32x512xf32> -> vector<32x512xf32>
    %324 = vector.broadcast %179 : vector<1x512xf32> to vector<32x512xf32>
    %325 = arith.mulf %323, %324 : vector<32x512xf32>
    %cst_142 = arith.constant dense<0.000000e+00> : vector<32xf32>
    %326 = vector.multi_reduction <add>, %325, %cst_142 [1] : vector<32x512xf32> to vector<32xf32>
    %327 = vector.shape_cast %326 : vector<32xf32> to vector<32x1xf32>
    %cst_143 = arith.constant 0.001953125 : f32
    %328 = vector.broadcast %cst_143 : f32 to vector<32x1xf32>
    %329 = arith.mulf %327, %328 : vector<32x1xf32>
    %330 = vector.broadcast %329 : vector<32x1xf32> to vector<32x512xf32>
    %331 = arith.subf %323, %330 : vector<32x512xf32>
    %332 = vector.broadcast %179 : vector<1x512xf32> to vector<32x512xf32>
    %333 = arith.mulf %331, %332 : vector<32x512xf32>
    %334 = arith.mulf %333, %333 : vector<32x512xf32>
    %cst_144 = arith.constant dense<0.000000e+00> : vector<32xf32>
    %335 = vector.multi_reduction <add>, %334, %cst_144 [1] : vector<32x512xf32> to vector<32xf32>
    %336 = vector.shape_cast %335 : vector<32xf32> to vector<32x1xf32>
    %cst_145 = arith.constant 0.001953125 : f32
    %337 = vector.broadcast %cst_145 : f32 to vector<32x1xf32>
    %338 = arith.mulf %336, %337 : vector<32x1xf32>
    %c0_146 = arith.constant 0 : index
    %c0_147 = arith.constant 0 : index
    %339 = vector.load %arg7[%c0_146, %c0_147] : memref<32x1xf32, #tpu.memory_space<vmem>>, vector<32x1xf32>
    %cst_148 = arith.constant 9.99999974E-6 : f32
    %340 = vector.broadcast %cst_148 : f32 to vector<32x1xf32>
    %341 = arith.addf %338, %340 : vector<32x1xf32>
    %342 = math.rsqrt %341 : vector<32x1xf32>
    %343 = arith.mulf %339, %342 : vector<32x1xf32>
    %c0_149 = arith.constant 0 : index
    %c0_150 = arith.constant 0 : index
    %344 = vector.load %arg8[%c0_149, %c0_150] : memref<32x1xf32, #tpu.memory_space<vmem>>, vector<32x1xf32>
    %345 = arith.mulf %329, %343 : vector<32x1xf32>
    %346 = arith.subf %344, %345 : vector<32x1xf32>
    %347 = vector.broadcast %343 : vector<32x1xf32> to vector<32x512xf32>
    %348 = arith.mulf %323, %347 : vector<32x512xf32>
    %349 = vector.broadcast %346 : vector<32x1xf32> to vector<32x512xf32>
    %350 = arith.addf %348, %349 : vector<32x512xf32>
    %cst_151 = arith.constant 0.000000e+00 : f32
    %351 = vector.broadcast %cst_151 : f32 to vector<32x512xf32>
    %352 = arith.maximumf %350, %351 : vector<32x512xf32>
    %c0_152 = arith.constant 0 : index
    %c0_153 = arith.constant 0 : index
    %353 = vector.load %arg9[%c0_152, %c0_153] : memref<32x512xf32, #tpu.memory_space<vmem>>, vector<32x512xf32>
    tpu.vector_store %arg9[%c0_152, %c0_153], %352 {strides = array<i32>} : memref<32x512xf32, #tpu.memory_space<vmem>>, vector<32x512xf32>,
    return
  }
  func.func @transform_0(%arg0: i32) -> (i32, i32) {
    %c0_i32 = arith.constant 0 : i32
    %c0_i32_0 = arith.constant 0 : i32
    %c0_i32_1 = arith.constant 0 : i32
    return %c0_i32, %c0_i32_0 : i32, i32
  }
  func.func @transform_1(%arg0: i32) -> (i32, i32) {
    %c0_i32 = arith.constant 0 : i32
    %c0_i32_0 = arith.constant 0 : i32
    %c0_i32_1 = arith.constant 0 : i32
    return %c0_i32, %c0_i32_0 : i32, i32
  }
  func.func @transform_2(%arg0: i32) -> (i32, i32) {
    %c0_i32 = arith.constant 0 : i32
    %c0_i32_0 = arith.constant 0 : i32
    %c0_i32_1 = arith.constant 0 : i32
    return %c0_i32, %c0_i32_0 : i32, i32
  }
  func.func @transform_3(%arg0: i32) -> (i32, i32) {
    %c0_i32 = arith.constant 0 : i32
    %c0_i32_0 = arith.constant 0 : i32
    %c0_i32_1 = arith.constant 0 : i32
    return %c0_i32, %c0_i32_0 : i32, i32
  }
  func.func @transform_4(%arg0: i32) -> (i32, i32) {
    %c0_i32 = arith.constant 0 : i32
    %c0_i32_0 = arith.constant 0 : i32
    %c0_i32_1 = arith.constant 0 : i32
    return %c0_i32, %c0_i32_0 : i32, i32
  }
  func.func @transform_5(%arg0: i32) -> (i32, i32) {
    %c0_i32 = arith.constant 0 : i32
    %c0_i32_0 = arith.constant 0 : i32
    %c0_i32_1 = arith.constant 0 : i32
    return %c0_i32, %c0_i32_0 : i32, i32
  }
  func.func @transform_6(%arg0: i32) -> (i32, i32) {
    %c0_i32 = arith.constant 0 : i32
    %c0_i32_0 = arith.constant 0 : i32
    %c0_i32_1 = arith.constant 0 : i32
    return %c0_i32, %c0_i32_0 : i32, i32
  }
  func.func @transform_7(%arg0: i32) -> (i32, i32) {
    %c0_i32 = arith.constant 0 : i32
    %c0_i32_0 = arith.constant 0 : i32
    %c0_i32_1 = arith.constant 0 : i32
    return %c0_i32, %c0_i32_0 : i32, i32
  }
  func.func @transform_8(%arg0: i32) -> (i32, i32) {
    %c0_i32 = arith.constant 0 : i32
    %c0_i32_0 = arith.constant 0 : i32
    %c0_i32_1 = arith.constant 0 : i32
    return %c0_i32, %c0_i32_0 : i32, i32
  }
}

</mosaic_0001>

<llo_original>
// kernel: double_conv_forward.1
$region0: #{double_conv_forward.1}
  #allocation0 [shape = 'u32[]', space=smem, size = 0x4, offset = 0x4, fixed_abs, tag = 'smem constant byte address 0x4 - core index']
  #allocation1 [shape = 'u32[144,128]{1,0:T(1,128)}', space=vmem, size = 0x12000, scoped, tag = 'internal scratch']
  #allocation2 [shape = 'f32[72,512]{1,0:T(8,128)}', space=vmem, size = 0x24000, scoped, tag = 'scratch operand']
  #allocation3 [shape = 'f32[288,512]{1,0:T(8,128)}', space=vmem, size = 0x90000, scoped, tag = 'scratch operand']
  %s0 = inlined_call_operand.vmem [shape: f32[8,512], index: 0, kind: input, shape index: {}]
  %s1 = inlined_call_operand.vmem [shape: s32[1,512], index: 1, kind: input, shape index: {}]
  %s2 = inlined_call_operand.vmem [shape: bf16[32,72], index: 2, kind: input, shape index: {}]
  %s3 = inlined_call_operand.vmem [shape: f32[32,1], index: 3, kind: input, shape index: {}]
  %s4 = inlined_call_operand.vmem [shape: f32[32,1], index: 4, kind: input, shape index: {}]
  %s5 = inlined_call_operand.vmem [shape: bf16[32,288], index: 5, kind: input, shape index: {}]
  %s6 = inlined_call_operand.vmem [shape: f32[32,1], index: 6, kind: input, shape index: {}]
  %s7 = inlined_call_operand.vmem [shape: f32[32,1], index: 7, kind: input, shape index: {}]
  %s8 = inlined_call_operand.vmem [shape: f32[32,512], index: 8, kind: output, shape index: {}]
  %s9 = sld [smem:[#allocation0]]
  $region42: #{double_conv_forward.1} parent=0
    _
  %s11 = ssub.s32 1, %s9
  %s12 = scalar_select 0, %s11, %s9
  // Predicated region
  $region2: #{double_conv_forward.1} parent=0 // pred_check
    _
  $region3: #{double_conv_forward.1} parent=0 // pred_check_branch
    %14 = sbr.rel (0) target = $region5
  $region4: #{double_conv_forward.1} parent=0 // pred_region
    _
  $region5: #{double_conv_forward.1} parent=0 // pred_fallthru
    _
  // Predicated region
  $region6: #{double_conv_forward.1} parent=0 // pred_check
    _
  $region7: #{double_conv_forward.1} parent=0 // pred_check_branch
    %16 = sbr.rel (0) target = $region9
  $region8: #{double_conv_forward.1} parent=0 // pred_region
    _
  $region9: #{double_conv_forward.1} parent=0 // pred_fallthru
    _
  // Predicated region
  $region10: #{double_conv_forward.1} parent=0 // pred_check
    _
  $region11: #{double_conv_forward.1} parent=0 // pred_check_branch
    %18 = sbr.rel (0) target = $region13
  $region12: #{double_conv_forward.1} parent=0 // pred_region
    _
  $region13: #{double_conv_forward.1} parent=0 // pred_fallthru
    _
  // Predicated region
  $region14: #{double_conv_forward.1} parent=0 // pred_check
    _
  $region15: #{double_conv_forward.1} parent=0 // pred_check_branch
    %20 = sbr.rel (0) target = $region17
  $region16: #{double_conv_forward.1} parent=0 // pred_region
    _
  $region17: #{double_conv_forward.1} parent=0 // pred_fallthru
    _
  // Predicated region
  $region18: #{double_conv_forward.1} parent=0 // pred_check
    _
  $region19: #{double_conv_forward.1} parent=0 // pred_check_branch
    %22 = sbr.rel (0) target = $region21
  $region20: #{double_conv_forward.1} parent=0 // pred_region
    _
  $region21: #{double_conv_forward.1} parent=0 // pred_fallthru
    _
  // Predicated region
  $region22: #{double_conv_forward.1} parent=0 // pred_check
    _
  $region23: #{double_conv_forward.1} parent=0 // pred_check_branch
    %24 = sbr.rel (0) target = $region25
  $region24: #{double_conv_forward.1} parent=0 // pred_region
    _
  $region25: #{double_conv_forward.1} parent=0 // pred_fallthru
    _
  // Predicated region
  $region26: #{double_conv_forward.1} parent=0 // pred_check
    _
  $region27: #{double_conv_forward.1} parent=0 // pred_check_branch
    %26 = sbr.rel (0) target = $region29
  $region28: #{double_conv_forward.1} parent=0 // pred_region
    _
  $region29: #{double_conv_forward.1} parent=0 // pred_fallthru
    _
  // Predicated region
  $region30: #{double_conv_forward.1} parent=0 // pred_check
    _
  $region31: #{double_conv_forward.1} parent=0 // pred_check_branch
    %28 = sbr.rel (0) target = $region33
  $region32: #{double_conv_forward.1} parent=0 // pred_region
    _
  $region33: #{double_conv_forward.1} parent=0 // pred_fallthru
    _
  %v30 = vld [vmem:[%s1] sm:$0xf]
  %v31 = vshra.s32 %v30, 16
  %v32 = vand.u32 %v30, 65535
  %v33 = vadd.s32 %v31, 4294967295
  %vm34 = vcmp.ge.s32.totalorder %v33, 0
  %vm35 = vcmp.lt.s32.totalorder %v33, 16
  %vm36 = vmand %vm34, %vm35
  %v37 = vadd.s32 %v32, 4294967295
  %vm38 = vcmp.ge.s32.totalorder %v37, 0
  %vm39 = vmand %vm36, %vm38
  %vm40 = vcmp.lt.s32.totalorder %v37, 16
  %vm41 = vmand %vm39, %vm40
  %vm42 = vcmp.ge.s32.totalorder %v32, 0
  %vm43 = vmand %vm36, %vm42
  %vm44 = vcmp.lt.s32.totalorder %v32, 16
  %vm45 = vmand %vm43, %vm44
  %v46 = vadd.s32 %v32, 1
  %vm47 = vcmp.ge.s32.totalorder %v46, 0
  %vm48 = vmand %vm36, %vm47
  %vm49 = vcmp.lt.s32.totalorder %v46, 16
  %vm50 = vmand %vm48, %vm49
  %vm51 = vcmp.ge.s32.totalorder %v31, 0
  %vm52 = vcmp.lt.s32.totalorder %v31, 16
  %vm53 = vmand %vm51, %vm52
  %vm54 = vmand %vm53, %vm38
  %vm55 = vmand %vm54, %vm40
  %vm56 = vmand %vm53, %vm42
  %vm57 = vmand %vm56, %vm44
  %vm58 = vmand %vm53, %vm47
  %vm59 = vmand %vm58, %vm49
  %v60 = vadd.s32 %v31, 1
  %vm61 = vcmp.ge.s32.totalorder %v60, 0
  %vm62 = vcmp.lt.s32.totalorder %v60, 16
  %vm63 = vmand %vm61, %vm62
  %vm64 = vmand %vm63, %vm38
  %vm65 = vmand %vm64, %vm40
  %vm66 = vmand %vm63, %vm42
  %vm67 = vmand %vm66, %vm44
  %vm68 = vmand %vm63, %vm47
  %vm69 = vmand %vm68, %vm49
  %v70 = vsel %vm52, 1, 0
  %v71 = vcvt.s32.f32 %v70
  %v72 = vld [vmem:[%s0] sm:$0xff]
  %v73 = vld [vmem:[%s0 + $0x8] sm:$0xff]
  %v74 = vld [vmem:[%s0 + $0x10] sm:$0xff]
  %v75 = vld [vmem:[%s0 + $0x18] sm:$0xff]
  %76 = vrot.lane.b32.xlu0 %v72, 17
  %v77 = vpop.permute.xlu0 %76
  %78 = vrot.lane.b32.xlu0 %v73, 17
  %v79 = vpop.permute.xlu0 %78
  %80 = vrot.lane.b32.xlu0 %v74, 17
  %v81 = vpop.permute.xlu0 %80
  %82 = vrot.lane.b32.xlu0 %v75, 17
  %v83 = vpop.permute.xlu0 %82
  %v84 = vlaneseq
  %v85 = vand.u32 %v84, 127
  %vm86 = vcmp.lt.s32.totalorder %v85, 17
  %v87 = vsel %vm86, %v81, %v83
  %v88 = vsel %vm86, %v79, %v81
  %v89 = vsel %vm86, %v77, %v79
  %v90 = vsel %vm86, %v83, %v77
  %v91 = vsel %vm41, 1, 0
  %v92 = vlaneseq
  %v93 = vshrl.u32 %v92, 7
  %v94 = vsub.s32 0, %v93
  %v95 = vrot.slane %v91, %v94
  %v96 = vlaneseq
  %v97 = vshrl.u32 %v96, 7
  %v98 = vsub.s32 1, %v97
  %v99 = vrot.slane %v91, %v98
  %v100 = vlaneseq
  %v101 = vshrl.u32 %v100, 7
  %v102 = vsub.s32 2, %v101
  %v103 = vrot.slane %v91, %v102
  %v104 = vlaneseq
  %v105 = vshrl.u32 %v104, 7
  %v106 = vsub.s32 3, %v105
  %v107 = vrot.slane %v91, %v106
  %vm108 = vcmp.eq.s32.totalorder %v95, 1
  %vm109 = vcmp.eq.s32.totalorder %v99, 1
  %vm110 = vcmp.eq.s32.totalorder %v103, 1
  %vm111 = vcmp.eq.s32.totalorder %v107, 1
  %v112 = vsel %vm108, %v90, 0.0
  %v113 = vsel %vm109, %v89, 0.0
  %v114 = vsel %vm110, %v88, 0.0
  %v115 = vsel %vm111, %v87, 0.0
  %116 = vst [vmem:[#allocation2] sm:$0xff] %v112
  %117 = vst [vmem:[#allocation2 + $0x8] sm:$0xff] %v113
  %118 = vst [vmem:[#allocation2 + $0x10] sm:$0xff] %v114
  %119 = vst [vmem:[#allocation2 + $0x18] sm:$0xff] %v115
  %120 = vrot.lane.b32.xlu0 %v72, 16
  %v121 = vpop.permute.xlu0 %120
  %122 = vrot.lane.b32.xlu0 %v73, 16
  %v123 = vpop.permute.xlu0 %122
  %124 = vrot.lane.b32.xlu0 %v74, 16
  %v125 = vpop.permute.xlu0 %124
  %126 = vrot.lane.b32.xlu0 %v75, 16
  %v127 = vpop.permute.xlu0 %126
  %vm128 = vcmp.lt.s32.totalorder %v85, 16
  %v129 = vsel %vm128, %v125, %v127
  %v130 = vsel %vm128, %v123, %v125
  %v131 = vsel %vm128, %v121, %v123
  %v132 = vsel %vm128, %v127, %v121
  %v133 = vsel %vm45, 1, 0
  %v134 = vlaneseq
  %v135 = vshrl.u32 %v134, 7
  %v136 = vsub.s32 0, %v135
  %v137 = vrot.slane %v133, %v136
  %v138 = vlaneseq
  %v139 = vshrl.u32 %v138, 7
  %v140 = vsub.s32 1, %v139
  %v141 = vrot.slane %v133, %v140
  %v142 = vlaneseq
  %v143 = vshrl.u32 %v142, 7
  %v144 = vsub.s32 2, %v143
  %v145 = vrot.slane %v133, %v144
  %v146 = vlaneseq
  %v147 = vshrl.u32 %v146, 7
  %v148 = vsub.s32 3, %v147
  %v149 = vrot.slane %v133, %v148
  %vm150 = vcmp.eq.s32.totalorder %v137, 1
  %vm151 = vcmp.eq.s32.totalorder %v141, 1
  %vm152 = vcmp.eq.s32.totalorder %v145, 1
  %vm153 = vcmp.eq.s32.totalorder %v149, 1
  %v154 = vsel %vm150, %v132, 0.0
  %v155 = vsel %vm151, %v131, 0.0
  %v156 = vsel %vm152, %v130, 0.0
  %v157 = vsel %vm153, %v129, 0.0
  %158 = vst [vmem:[#allocation2 + $0x20] sm:$0xff] %v154
  %159 = vst [vmem:[#allocation2 + $0x28] sm:$0xff] %v155
  %160 = vst [vmem:[#allocation2 + $0x30] sm:$0xff] %v156
  %161 = vst [vmem:[#allocation2 + $0x38] sm:$0xff] %v157
  %162 = vrot.lane.b32.xlu0 %v72, 15
  %v163 = vpop.permute.xlu0 %162
  %164 = vrot.lane.b32.xlu0 %v73, 15
  %v165 = vpop.permute.xlu0 %164
  %166 = vrot.lane.b32.xlu0 %v74, 15
  %v167 = vpop.permute.xlu0 %166
  %168 = vrot.lane.b32.xlu0 %v75, 15
  %v169 = vpop.permute.xlu0 %168
  %vm170 = vcmp.lt.s32.totalorder %v85, 15
  %v171 = vsel %vm170, %v167, %v169
  %v172 = vsel %vm170, %v165, %v167
  %v173 = vsel %vm170, %v163, %v165
  %v174 = vsel %vm170, %v169, %v163
  %v175 = vsel %vm50, 1, 0
  %v176 = vlaneseq
  %v177 = vshrl.u32 %v176, 7
  %v178 = vsub.s32 0, %v177
  %v179 = vrot.slane %v175, %v178
  %v180 = vlaneseq
  %v181 = vshrl.u32 %v180, 7
  %v182 = vsub.s32 1, %v181
  %v183 = vrot.slane %v175, %v182
  %v184 = vlaneseq
  %v185 = vshrl.u32 %v184, 7
  %v186 = vsub.s32 2, %v185
  %v187 = vrot.slane %v175, %v186
  %v188 = vlaneseq
  %v189 = vshrl.u32 %v188, 7
  %v190 = vsub.s32 3, %v189
  %v191 = vrot.slane %v175, %v190
  %vm192 = vcmp.eq.s32.totalorder %v179, 1
  %vm193 = vcmp.eq.s32.totalorder %v183, 1
  %vm194 = vcmp.eq.s32.totalorder %v187, 1
  %vm195 = vcmp.eq.s32.totalorder %v191, 1
  %v196 = vsel %vm192, %v174, 0.0
  %v197 = vsel %vm193, %v173, 0.0
  %v198 = vsel %vm194, %v172, 0.0
  %v199 = vsel %vm195, %v171, 0.0
  %200 = vst [vmem:[#allocation2 + $0x40] sm:$0xff] %v196
  %201 = vst [vmem:[#allocation2 + $0x48] sm:$0xff] %v197
  %202 = vst [vmem:[#allocation2 + $0x50] sm:$0xff] %v198
  %203 = vst [vmem:[#allocation2 + $0x58] sm:$0xff] %v199
  %204 = vrot.lane.b32.xlu0 %v72, 1
  %v205 = vpop.permute.xlu0 %204
  %206 = vrot.lane.b32.xlu0 %v73, 1
  %v207 = vpop.permute.xlu0 %206
  %208 = vrot.lane.b32.xlu0 %v74, 1
  %v209 = vpop.permute.xlu0 %208
  %210 = vrot.lane.b32.xlu0 %v75, 1
  %v211 = vpop.permute.xlu0 %210
  %vm212 = vcmp.lt.s32.totalorder %v85, 1
  %v213 = vsel %vm212, %v209, %v211
  %v214 = vsel %vm212, %v207, %v209
  %v215 = vsel %vm212, %v205, %v207
  %v216 = vsel %vm212, %v211, %v205
  %v217 = vsel %vm55, 1, 0
  %v218 = vlaneseq
  %v219 = vshrl.u32 %v218, 7
  %v220 = vsub.s32 0, %v219
  %v221 = vrot.slane %v217, %v220
  %v222 = vlaneseq
  %v223 = vshrl.u32 %v222, 7
  %v224 = vsub.s32 1, %v223
  %v225 = vrot.slane %v217, %v224
  %v226 = vlaneseq
  %v227 = vshrl.u32 %v226, 7
  %v228 = vsub.s32 2, %v227
  %v229 = vrot.slane %v217, %v228
  %v230 = vlaneseq
  %v231 = vshrl.u32 %v230, 7
  %v232 = vsub.s32 3, %v231
  %v233 = vrot.slane %v217, %v232
  %vm234 = vcmp.eq.s32.totalorder %v221, 1
  %vm235 = vcmp.eq.s32.totalorder %v225, 1
  %vm236 = vcmp.eq.s32.totalorder %v229, 1
  %vm237 = vcmp.eq.s32.totalorder %v233, 1
  %v238 = vsel %vm234, %v216, 0.0
  %v239 = vsel %vm235, %v215, 0.0
  %v240 = vsel %vm236, %v214, 0.0
  %v241 = vsel %vm237, %v213, 0.0
  %242 = vst [vmem:[#allocation2 + $0x60] sm:$0xff] %v238
  %243 = vst [vmem:[#allocation2 + $0x68] sm:$0xff] %v239
  %244 = vst [vmem:[#allocation2 + $0x70] sm:$0xff] %v240
  %245 = vst [vmem:[#allocation2 + $0x78] sm:$0xff] %v241
  %v246 = vsel %vm57, 1, 0
  %v247 = vlaneseq
  %v248 = vshrl.u32 %v247, 7
  %v249 = vsub.s32 0, %v248
  %v250 = vrot.slane %v246, %v249
  %v251 = vlaneseq
  %v252 = vshrl.u32 %v251, 7
  %v253 = vsub.s32 1, %v252
  %v254 = vrot.slane %v246, %v253
  %v255 = vlaneseq
  %v256 = vshrl.u32 %v255, 7
  %v257 = vsub.s32 2, %v256
  %v258 = vrot.slane %v246, %v257
  %v259 = vlaneseq
  %v260 = vshrl.u32 %v259, 7
  %v261 = vsub.s32 3, %v260
  %v262 = vrot.slane %v246, %v261
  %vm263 = vcmp.eq.s32.totalorder %v250, 1
  %vm264 = vcmp.eq.s32.totalorder %v254, 1
  %vm265 = vcmp.eq.s32.totalorder %v258, 1
  %vm266 = vcmp.eq.s32.totalorder %v262, 1
  %v267 = vsel %vm263, %v72, 0.0
  %v268 = vsel %vm264, %v73, 0.0
  %v269 = vsel %vm265, %v74, 0.0
  %v270 = vsel %vm266, %v75, 0.0
  %271 = vst [vmem:[#allocation2 + $0x80] sm:$0xff] %v267
  %272 = vst [vmem:[#allocation2 + $0x88] sm:$0xff] %v268
  %273 = vst [vmem:[#allocation2 + $0x90] sm:$0xff] %v269
  %274 = vst [vmem:[#allocation2 + $0x98] sm:$0xff] %v270
  %275 = vrot.lane.b32.xlu0 %v72, 127
  %v276 = vpop.permute.xlu0 %275
  %277 = vrot.lane.b32.xlu0 %v73, 127
  %v278 = vpop.permute.xlu0 %277
  %279 = vrot.lane.b32.xlu0 %v74, 127
  %v280 = vpop.permute.xlu0 %279
  %281 = vrot.lane.b32.xlu0 %v75, 127
  %v282 = vpop.permute.xlu0 %281
  %vm283 = vcmp.lt.s32.totalorder %v85, 127
  %v284 = vsel %vm283, %v280, %v282
  %v285 = vsel %vm283, %v278, %v280
  %v286 = vsel %vm283, %v276, %v278
  %v287 = vsel %vm283, %v282, %v276
  %v288 = vsel %vm59, 1, 0
  %v289 = vlaneseq
  %v290 = vshrl.u32 %v289, 7
  %v291 = vsub.s32 0, %v290
  %v292 = vrot.slane %v288, %v291
  %v293 = vlaneseq
  %v294 = vshrl.u32 %v293, 7
  %v295 = vsub.s32 1, %v294
  %v296 = vrot.slane %v288, %v295
  %v297 = vlaneseq
  %v298 = vshrl.u32 %v297, 7
  %v299 = vsub.s32 2, %v298
  %v300 = vrot.slane %v288, %v299
  %v301 = vlaneseq
  %v302 = vshrl.u32 %v301, 7
  %v303 = vsub.s32 3, %v302
  %v304 = vrot.slane %v288, %v303
  %vm305 = vcmp.eq.s32.totalorder %v292, 1
  %vm306 = vcmp.eq.s32.totalorder %v296, 1
  %vm307 = vcmp.eq.s32.totalorder %v300, 1
  %vm308 = vcmp.eq.s32.totalorder %v304, 1
  %v309 = vsel %vm305, %v286, 0.0
  %v310 = vsel %vm306, %v285, 0.0
  %v311 = vsel %vm307, %v284, 0.0
  %v312 = vsel %vm308, %v287, 0.0
  %313 = vst [vmem:[#allocation2 + $0xa0] sm:$0xff] %v309
  %314 = vst [vmem:[#allocation2 + $0xa8] sm:$0xff] %v310
  %315 = vst [vmem:[#allocation2 + $0xb0] sm:$0xff] %v311
  %316 = vst [vmem:[#allocation2 + $0xb8] sm:$0xff] %v312
  %317 = vrot.lane.b32.xlu0 %v72, 113
  %v318 = vpop.permute.xlu0 %317
  %319 = vrot.lane.b32.xlu0 %v73, 113
  %v320 = vpop.permute.xlu0 %319
  %321 = vrot.lane.b32.xlu0 %v74, 113
  %v322 = vpop.permute.xlu0 %321
  %323 = vrot.lane.b32.xlu0 %v75, 113
  %v324 = vpop.permute.xlu0 %323
  %vm325 = vcmp.lt.s32.totalorder %v85, 113
  %v326 = vsel %vm325, %v322, %v324
  %v327 = vsel %vm325, %v320, %v322
  %v328 = vsel %vm325, %v318, %v320
  %v329 = vsel %vm325, %v324, %v318
  %v330 = vsel %vm65, 1, 0
  %v331 = vlaneseq
  %v332 = vshrl.u32 %v331, 7
  %v333 = vsub.s32 0, %v332
  %v334 = vrot.slane %v330, %v333
  %v335 = vlaneseq
  %v336 = vshrl.u32 %v335, 7
  %v337 = vsub.s32 1, %v336
  %v338 = vrot.slane %v330, %v337
  %v339 = vlaneseq
  %v340 = vshrl.u32 %v339, 7
  %v341 = vsub.s32 2, %v340
  %v342 = vrot.slane %v330, %v341
  %v343 = vlaneseq
  %v344 = vshrl.u32 %v343, 7
  %v345 = vsub.s32 3, %v344
  %v346 = vrot.slane %v330, %v345
  %vm347 = vcmp.eq.s32.totalorder %v334, 1
  %vm348 = vcmp.eq.s32.totalorder %v338, 1
  %vm349 = vcmp.eq.s32.totalorder %v342, 1
  %vm350 = vcmp.eq.s32.totalorder %v346, 1
  %v351 = vsel %vm347, %v328, 0.0
  %v352 = vsel %vm348, %v327, 0.0
  %v353 = vsel %vm349, %v326, 0.0
  %v354 = vsel %vm350, %v329, 0.0
  %355 = vst [vmem:[#allocation2 + $0xc0] sm:$0xff] %v351
  %356 = vst [vmem:[#allocation2 + $0xc8] sm:$0xff] %v352
  %357 = vst [vmem:[#allocation2 + $0xd0] sm:$0xff] %v353
  %358 = vst [vmem:[#allocation2 + $0xd8] sm:$0xff] %v354
  %359 = vrot.lane.b32.xlu0 %v72, 112
  %v360 = vpop.permute.xlu0 %359
  %361 = vrot.lane.b32.xlu0 %v73, 112
  %v362 = vpop.permute.xlu0 %361
  %363 = vrot.lane.b32.xlu0 %v74, 112
  %v364 = vpop.permute.xlu0 %363
  %365 = vrot.lane.b32.xlu0 %v75, 112
  %v366 = vpop.permute.xlu0 %365
  %vm367 = vcmp.lt.s32.totalorder %v85, 112
  %v368 = vsel %vm367, %v364, %v366
  %v369 = vsel %vm367, %v362, %v364
  %v370 = vsel %vm367, %v360, %v362
  %v371 = vsel %vm367, %v366, %v360
  %v372 = vsel %vm67, 1, 0
  %v373 = vlaneseq
  %v374 = vshrl.u32 %v373, 7
  %v375 = vsub.s32 0, %v374
  %v376 = vrot.slane %v372, %v375
  %v377 = vlaneseq
  %v378 = vshrl.u32 %v377, 7
  %v379 = vsub.s32 1, %v378
  %v380 = vrot.slane %v372, %v379
  %v381 = vlaneseq
  %v382 = vshrl.u32 %v381, 7
  %v383 = vsub.s32 2, %v382
  %v384 = vrot.slane %v372, %v383
  %v385 = vlaneseq
  %v386 = vshrl.u32 %v385, 7
  %v387 = vsub.s32 3, %v386
  %v388 = vrot.slane %v372, %v387
  %vm389 = vcmp.eq.s32.totalorder %v376, 1
  %vm390 = vcmp.eq.s32.totalorder %v380, 1
  %vm391 = vcmp.eq.s32.totalorder %v384, 1
  %vm392 = vcmp.eq.s32.totalorder %v388, 1
  %v393 = vsel %vm389, %v370, 0.0
  %v394 = vsel %vm390, %v369, 0.0
  %v395 = vsel %vm391, %v368, 0.0
  %v396 = vsel %vm392, %v371, 0.0
  %397 = vst [vmem:[#allocation2 + $0xe0] sm:$0xff] %v393
  %398 = vst [vmem:[#allocation2 + $0xe8] sm:$0xff] %v394
  %399 = vst [vmem:[#allocation2 + $0xf0] sm:$0xff] %v395
  %400 = vst [vmem:[#allocation2 + $0xf8] sm:$0xff] %v396
  %401 = vrot.lane.b32.xlu0 %v72, 111
  %v402 = vpop.permute.xlu0 %401
  %403 = vrot.lane.b32.xlu0 %v73, 111
  %v404 = vpop.permute.xlu0 %403
  %405 = vrot.lane.b32.xlu0 %v74, 111
  %v406 = vpop.permute.xlu0 %405
  %407 = vrot.lane.b32.xlu0 %v75, 111
  %v408 = vpop.permute.xlu0 %407
  %vm409 = vcmp.lt.s32.totalorder %v85, 111
  %v410 = vsel %vm409, %v406, %v408
  %v411 = vsel %vm409, %v404, %v406
  %v412 = vsel %vm409, %v402, %v404
  %v413 = vsel %vm409, %v408, %v402
  %v414 = vsel %vm69, 1, 0
  %v415 = vlaneseq
  %v416 = vshrl.u32 %v415, 7
  %v417 = vsub.s32 0, %v416
  %v418 = vrot.slane %v414, %v417
  %v419 = vlaneseq
  %v420 = vshrl.u32 %v419, 7
  %v421 = vsub.s32 1, %v420
  %v422 = vrot.slane %v414, %v421
  %v423 = vlaneseq
  %v424 = vshrl.u32 %v423, 7
  %v425 = vsub.s32 2, %v424
  %v426 = vrot.slane %v414, %v425
  %v427 = vlaneseq
  %v428 = vshrl.u32 %v427, 7
  %v429 = vsub.s32 3, %v428
  %v430 = vrot.slane %v414, %v429
  %vm431 = vcmp.eq.s32.totalorder %v418, 1
  %vm432 = vcmp.eq.s32.totalorder %v422, 1
  %vm433 = vcmp.eq.s32.totalorder %v426, 1
  %vm434 = vcmp.eq.s32.totalorder %v430, 1
  %v435 = vsel %vm431, %v412, 0.0
  %v436 = vsel %vm432, %v411, 0.0
  %v437 = vsel %vm433, %v410, 0.0
  %v438 = vsel %vm434, %v413, 0.0
  %439 = vst [vmem:[#allocation2 + $0x100] sm:$0xff] %v435
  %440 = vst [vmem:[#allocation2 + $0x108] sm:$0xff] %v436
  %441 = vst [vmem:[#allocation2 + $0x110] sm:$0xff] %v437
  %442 = vst [vmem:[#allocation2 + $0x118] sm:$0xff] %v438
  %v443 = vld [vmem:[%s2] sm:$0xf]
  %v444 = vld [vmem:[%s2 + $0x4] sm:$0xf]
  %v445 = vld [vmem:[%s2 + $0x8] sm:$0xf]
  %v446 = vld [vmem:[%s2 + $0xc] sm:$0xf]
  %v447 = vld [vmem:[#allocation2] sm:$0xff]
  %v448 = vld [vmem:[#allocation2 + $0x8] sm:$0xff]
  %v449 = vld [vmem:[#allocation2 + $0x10] sm:$0xff]
  %v450 = vld [vmem:[#allocation2 + $0x18] sm:$0xff]
  %v451 = vld [vmem:[#allocation2 + $0x20] sm:$0xff]
  %v452 = vld [vmem:[#allocation2 + $0x28] sm:$0xff]
  %v453 = vld [vmem:[#allocation2 + $0x30] sm:$0xff]
  %v454 = vld [vmem:[#allocation2 + $0x38] sm:$0xff]
  %v455 = vld [vmem:[#allocation2 + $0x40] sm:$0xff]
  %v456 = vld [vmem:[#allocation2 + $0x48] sm:$0xff]
  %v457 = vld [vmem:[#allocation2 + $0x50] sm:$0xff]
  %v458 = vld [vmem:[#allocation2 + $0x58] sm:$0xff]
  %v459 = vld [vmem:[#allocation2 + $0x60] sm:$0xff]
  %v460 = vld [vmem:[#allocation2 + $0x68] sm:$0xff]
  %v461 = vld [vmem:[#allocation2 + $0x70] sm:$0xff]
  %v462 = vld [vmem:[#allocation2 + $0x78] sm:$0xff]
  %v463 = vld [vmem:[#allocation2 + $0x80] sm:$0xff]
  %v464 = vld [vmem:[#allocation2 + $0x88] sm:$0xff]
  %v465 = vld [vmem:[#allocation2 + $0x90] sm:$0xff]
  %v466 = vld [vmem:[#allocation2 + $0x98] sm:$0xff]
  %v467 = vld [vmem:[#allocation2 + $0xa0] sm:$0xff]
  %v468 = vld [vmem:[#allocation2 + $0xa8] sm:$0xff]
  %v469 = vld [vmem:[#allocation2 + $0xb0] sm:$0xff]
  %v470 = vld [vmem:[#allocation2 + $0xb8] sm:$0xff]
  %v471 = vld [vmem:[#allocation2 + $0xc0] sm:$0xff]
  %v472 = vld [vmem:[#allocation2 + $0xc8] sm:$0xff]
  %v473 = vld [vmem:[#allocation2 + $0xd0] sm:$0xff]
  %v474 = vld [vmem:[#allocation2 + $0xd8] sm:$0xff]
  %v475 = vld [vmem:[#allocation2 + $0xe0] sm:$0xff]
  %v476 = vld [vmem:[#allocation2 + $0xe8] sm:$0xff]
  %v477 = vld [vmem:[#allocation2 + $0xf0] sm:$0xff]
  %v478 = vld [vmem:[#allocation2 + $0xf8] sm:$0xff]
  %v479 = vld [vmem:[#allocation2 + $0x100] sm:$0xff]
  %v480 = vld [vmem:[#allocation2 + $0x108] sm:$0xff]
  %v481 = vld [vmem:[#allocation2 + $0x110] sm:$0xff]
  %v482 = vld [vmem:[#allocation2 + $0x118] sm:$0xff]
  %v483 = vpack.c.bf16 %v451, %v447
  %v484 = vpack.c.bf16 %v452, %v448
  %v485 = vpack.c.bf16 %v453, %v449
  %v486 = vpack.c.bf16 %v454, %v450
  %v487 = vpack.c.bf16 %v459, %v455
  %v488 = vpack.c.bf16 %v460, %v456
  %v489 = vpack.c.bf16 %v461, %v457
  %v490 = vpack.c.bf16 %v462, %v458
  %v491 = vpack.c.bf16 %v467, %v463
  %v492 = vpack.c.bf16 %v468, %v464
  %v493 = vpack.c.bf16 %v469, %v465
  %v494 = vpack.c.bf16 %v470, %v466
  %v495 = vpack.c.bf16 %v475, %v471
  %v496 = vpack.c.bf16 %v476, %v472
  %v497 = vpack.c.bf16 %v477, %v473
  %v498 = vpack.c.bf16 %v478, %v474
  %v499 = vpack.c.bf16 %v479, %v479
  %v500 = vpack.c.bf16 %v480, %v480
  %v501 = vpack.c.bf16 %v481, %v481
  %v502 = vpack.c.bf16 %v482, %v482
  %v507 = vunpack.c.l.b16 %v443
  %v508 = vunpack.c.l.b16 %v444
  %v509 = vunpack.c.l.b16 %v445
  %v510 = vunpack.c.l.b16 %v446
  %v511 = vpack.c.b16 %v508, %v507
  %v512 = vpack.c.b16 %v510, %v509
  %vm513 = vcmask 588800
  %v515 = vsel %vm513, %v511, 0
  %v518 = vsel %vm513, %v512, 0
  %vm520 = vcmask 1043456
  %v522 = vsel %vm520, %v499, 0
  %v525 = vsel %vm520, %v500, 0
  %v528 = vsel %vm520, %v501, 0
  %v531 = vsel %vm520, %v502, 0
  %533 = vmatprep.subr.bf16.mxu0 %v484
  %534 = vmatpush1.bf16.msra.mxu0 %v483
  %535 = vmatprep.subr.bf16.mxu0 %v488
  %536 = vmatpush1.bf16.msra.mxu0 %v487
  %537 = vmatprep.subr.bf16.mxu0 %v492
  %538 = vmatpush1.bf16.msra.mxu0 %v491
  %539 = vmatprep.subr.bf16.mxu0 %v496
  %540 = vmatpush1.bf16.msra.mxu0 %v495
  %541 = vmatprep.subr.bf16.mxu0 %v525
  %542 = vmatpush1.bf16.msra.mxu0 %v522
  %543 = vmatprep.subr.bf16.mxu0 0
  %544 = vmatpush1.bf16.msra.mxu0 0
  %545 = vmatprep.subr.bf16.mxu0 0
  %546 = vmatpush1.bf16.msra.mxu0 0
  %547 = vmatprep.subr.bf16.mxu0 0
  %548 = vmatpush1.bf16.msra.mxu0 0
  %549 = vmatprep.subr.bf16.mxu0 0
  %550 = vmatpush1.bf16.msra.mxu0 0
  %551 = vmatprep.subr.bf16.mxu0 0
  %552 = vmatpush1.bf16.msra.mxu0 0
  %553 = vmatprep.subr.bf16.mxu0 0
  %554 = vmatpush1.bf16.msra.mxu0 0
  %555 = vmatprep.subr.bf16.mxu0 0
  %556 = vmatpush1.bf16.msra.mxu0 0
  %557 = vmatprep.subr.bf16.mxu0 0
  %558 = vmatpush1.bf16.msra.mxu0 0
  %559 = vmatprep.subr.bf16.mxu0 0
  %560 = vmatpush1.bf16.msra.mxu0 0
  %561 = vmatprep.subr.bf16.mxu0 0
  %562 = vmatpush1.bf16.msra.mxu0 0
  %563 = vmatprep.subr.bf16.mxu0 0
  %564 = vmatpush1.bf16.msra.mxu0 0
  %565 = vmatprep.mubr.bf16.mxu0 0
  %566 = vmatmul.mubr.bf16.gmra.mrb[0].mxu0 %v515
  %v567 = vpop.f32.mrb[0].mxu0
  %v568 = vadd.f32 0.0, %v567
  %v569 = vpop.f32.mrb[0].mxu0
  %v570 = vadd.f32 0.0, %v569
  %v571 = vpop.f32.mrb[0].mxu0
  %v572 = vadd.f32 0.0, %v571
  %v573 = vpop.f32.mrb[0].mxu0
  %v574 = vadd.f32 0.0, %v573
  %575 = vmatprep.mubr.bf16.mxu0 0
  %576 = vmatmul.mubr.bf16.gmra.mrb[0].mxu0 %v518
  %v577 = vpop.f32.mrb[0].mxu0
  %v578 = vadd.f32 0.0, %v577
  %v579 = vpop.f32.mrb[0].mxu0
  %v580 = vadd.f32 0.0, %v579
  %v581 = vpop.f32.mrb[0].mxu0
  %v582 = vadd.f32 0.0, %v581
  %v583 = vpop.f32.mrb[0].mxu0
  %v584 = vadd.f32 0.0, %v583
  %585 = vdwg.mxu0
  %586 = vmatprep.subr.bf16.mxu0 %v486
  %587 = vmatpush1.bf16.msra.mxu0 %v485
  %588 = vmatprep.subr.bf16.mxu0 %v490
  %589 = vmatpush1.bf16.msra.mxu0 %v489
  %590 = vmatprep.subr.bf16.mxu0 %v494
  %591 = vmatpush1.bf16.msra.mxu0 %v493
  %592 = vmatprep.subr.bf16.mxu0 %v498
  %593 = vmatpush1.bf16.msra.mxu0 %v497
  %594 = vmatprep.subr.bf16.mxu0 %v531
  %595 = vmatpush1.bf16.msra.mxu0 %v528
  %596 = vmatprep.subr.bf16.mxu0 0
  %597 = vmatpush1.bf16.msra.mxu0 0
  %598 = vmatprep.subr.bf16.mxu0 0
  %599 = vmatpush1.bf16.msra.mxu0 0
  %600 = vmatprep.subr.bf16.mxu0 0
  %601 = vmatpush1.bf16.msra.mxu0 0
  %602 = vmatprep.subr.bf16.mxu0 0
  %603 = vmatpush1.bf16.msra.mxu0 0
  %604 = vmatprep.subr.bf16.mxu0 0
  %605 = vmatpush1.bf16.msra.mxu0 0
  %606 = vmatprep.subr.bf16.mxu0 0
  %607 = vmatpush1.bf16.msra.mxu0 0
  %608 = vmatprep.subr.bf16.mxu0 0
  %609 = vmatpush1.bf16.msra.mxu0 0
  %610 = vmatprep.subr.bf16.mxu0 0
  %611 = vmatpush1.bf16.msra.mxu0 0
  %612 = vmatprep.subr.bf16.mxu0 0
  %613 = vmatpush1.bf16.msra.mxu0 0
  %614 = vmatprep.subr.bf16.mxu0 0
  %615 = vmatpush1.bf16.msra.mxu0 0
  %616 = vmatprep.subr.bf16.mxu0 0
  %617 = vmatpush1.bf16.msra.mxu0 0
  %618 = vmatprep.mubr.bf16.mxu0 0
  %619 = vmatmul.mubr.bf16.gmra.mrb[0].mxu0 %v515
  %v620 = vpop.f32.mrb[0].mxu0
  %v621 = vadd.f32 0.0, %v620
  %v622 = vpop.f32.mrb[0].mxu0
  %v623 = vadd.f32 0.0, %v622
  %v624 = vpop.f32.mrb[0].mxu0
  %v625 = vadd.f32 0.0, %v624
  %v626 = vpop.f32.mrb[0].mxu0
  %v627 = vadd.f32 0.0, %v626
  %628 = vmatprep.mubr.bf16.mxu0 0
  %629 = vmatmul.mubr.bf16.gmra.mrb[0].mxu0 %v518
  %v630 = vpop.f32.mrb[0].mxu0
  %v631 = vadd.f32 0.0, %v630
  %v632 = vpop.f32.mrb[0].mxu0
  %v633 = vadd.f32 0.0, %v632
  %v634 = vpop.f32.mrb[0].mxu0
  %v635 = vadd.f32 0.0, %v634
  %v636 = vpop.f32.mrb[0].mxu0
  %v637 = vadd.f32 0.0, %v636
  %638 = vdwg.mxu0
  %v640 = vlaneseq
  %v641 = vshrl.u32 %v640, 7
  %v642 = vsub.s32 0, %v641
  %v643 = vrot.slane %v71, %v642
  %v644 = vlaneseq
  %v645 = vshrl.u32 %v644, 7
  %v646 = vsub.s32 1, %v645
  %v647 = vrot.slane %v71, %v646
  %v648 = vlaneseq
  %v649 = vshrl.u32 %v648, 7
  %v650 = vsub.s32 2, %v649
  %v651 = vrot.slane %v71, %v650
  %v652 = vlaneseq
  %v653 = vshrl.u32 %v652, 7
  %v654 = vsub.s32 3, %v653
  %v655 = vrot.slane %v71, %v654
  %v660 = vmul.f32 %v568, %v643
  %v661 = vmul.f32 %v570, %v647
  %v662 = vmul.f32 %v621, %v651
  %v663 = vmul.f32 %v623, %v655
  %v664 = vmul.f32 %v572, %v643
  %v665 = vmul.f32 %v574, %v647
  %v666 = vmul.f32 %v625, %v651
  %v667 = vmul.f32 %v627, %v655
  %v668 = vmul.f32 %v578, %v643
  %v669 = vmul.f32 %v580, %v647
  %v670 = vmul.f32 %v631, %v651
  %v671 = vmul.f32 %v633, %v655
  %v672 = vmul.f32 %v582, %v643
  %v673 = vmul.f32 %v584, %v647
  %v674 = vmul.f32 %v635, %v651
  %v675 = vmul.f32 %v637, %v655
  %v676 = vadd.f32 %v660, %v661
  %v677 = vadd.f32 %v676, %v662
  %v678 = vadd.f32 %v677, %v663
  %679 = vadd.xlane.f32.xlu0 %v678
  %v680 = vpop.xlane.xlu0 %679
  %v681 = vadd.f32 %v664, %v665
  %v682 = vadd.f32 %v681, %v666
  %v683 = vadd.f32 %v682, %v667
  %684 = vadd.xlane.f32.xlu0 %v683
  %v685 = vpop.xlane.xlu0 %684
  %v686 = vadd.f32 %v668, %v669
  %v687 = vadd.f32 %v686, %v670
  %v688 = vadd.f32 %v687, %v671
  %689 = vadd.xlane.f32.xlu0 %v688
  %v690 = vpop.xlane.xlu0 %689
  %v691 = vadd.f32 %v672, %v673
  %v692 = vadd.f32 %v691, %v674
  %v693 = vadd.f32 %v692, %v675
  %694 = vadd.xlane.f32.xlu0 %v693
  %v695 = vpop.xlane.xlu0 %694
  %v696 = vmul.f32 %v680, 0.001953125
  %v697 = vmul.f32 %v685, 0.001953125
  %v698 = vmul.f32 %v690, 0.001953125
  %v699 = vmul.f32 %v695, 0.001953125
  %v700 = vsub.f32 %v568, %v696
  %v701 = vsub.f32 %v570, %v696
  %v702 = vsub.f32 %v621, %v696
  %v703 = vsub.f32 %v623, %v696
  %v704 = vsub.f32 %v572, %v697
  %v705 = vsub.f32 %v574, %v697
  %v706 = vsub.f32 %v625, %v697
  %v707 = vsub.f32 %v627, %v697
  %v708 = vsub.f32 %v578, %v698
  %v709 = vsub.f32 %v580, %v698
  %v710 = vsub.f32 %v631, %v698
  %v711 = vsub.f32 %v633, %v698
  %v712 = vsub.f32 %v582, %v699
  %v713 = vsub.f32 %v584, %v699
  %v714 = vsub.f32 %v635, %v699
  %v715 = vsub.f32 %v637, %v699
  %v716 = vmul.f32 %v700, %v643
  %v717 = vmul.f32 %v701, %v647
  %v718 = vmul.f32 %v702, %v651
  %v719 = vmul.f32 %v703, %v655
  %v720 = vmul.f32 %v704, %v643
  %v721 = vmul.f32 %v705, %v647
  %v722 = vmul.f32 %v706, %v651
  %v723 = vmul.f32 %v707, %v655
  %v724 = vmul.f32 %v708, %v643
  %v725 = vmul.f32 %v709, %v647
  %v726 = vmul.f32 %v710, %v651
  %v727 = vmul.f32 %v711, %v655
  %v728 = vmul.f32 %v712, %v643
  %v729 = vmul.f32 %v713, %v647
  %v730 = vmul.f32 %v714, %v651
  %v731 = vmul.f32 %v715, %v655
  %v732 = vmul.f32 %v716, %v716
  %v733 = vmul.f32 %v717, %v717
  %v734 = vmul.f32 %v718, %v718
  %v735 = vmul.f32 %v719, %v719
  %v736 = vmul.f32 %v720, %v720
  %v737 = vmul.f32 %v721, %v721
  %v738 = vmul.f32 %v722, %v722
  %v739 = vmul.f32 %v723, %v723
  %v740 = vmul.f32 %v724, %v724
  %v741 = vmul.f32 %v725, %v725
  %v742 = vmul.f32 %v726, %v726
  %v743 = vmul.f32 %v727, %v727
  %v744 = vmul.f32 %v728, %v728
  %v745 = vmul.f32 %v729, %v729
  %v746 = vmul.f32 %v730, %v730
  %v747 = vmul.f32 %v731, %v731
  %v748 = vadd.f32 %v732, %v733
  %v749 = vadd.f32 %v748, %v734
  %v750 = vadd.f32 %v749, %v735
  %751 = vadd.xlane.f32.xlu0 %v750
  %v752 = vpop.xlane.xlu0 %751
  %v753 = vadd.f32 %v736, %v737
  %v754 = vadd.f32 %v753, %v738
  %v755 = vadd.f32 %v754, %v739
  %756 = vadd.xlane.f32.xlu0 %v755
  %v757 = vpop.xlane.xlu0 %756
  %v758 = vadd.f32 %v740, %v741
  %v759 = vadd.f32 %v758, %v742
  %v760 = vadd.f32 %v759, %v743
  %761 = vadd.xlane.f32.xlu0 %v760
  %v762 = vpop.xlane.xlu0 %761
  %v763 = vadd.f32 %v744, %v745
  %v764 = vadd.f32 %v763, %v746
  %v765 = vadd.f32 %v764, %v747
  %766 = vadd.xlane.f32.xlu0 %v765
  %v767 = vpop.xlane.xlu0 %766
  %v768 = vmul.f32 %v752, 0.001953125
  %v769 = vmul.f32 %v757, 0.001953125
  %v770 = vmul.f32 %v762, 0.001953125
  %v771 = vmul.f32 %v767, 0.001953125
  %v772 = vld [vmem:[%s3] sm:$0xff]
  %v773 = vld [vmem:[%s3 + $0x8] sm:$0xff]
  %v774 = vld [vmem:[%s3 + $0x10] sm:$0xff]
  %v775 = vld [vmem:[%s3 + $0x18] sm:$0xff]
  %v776 = vadd.f32 %v768, 1e-05
  %v777 = vadd.f32 %v769, 1e-05
  %v778 = vadd.f32 %v770, 1e-05
  %v779 = vadd.f32 %v771, 1e-05
  %v780 = vrsqrt.pop %v776
  %v781 = vrsqrt.pop %v777
  %v782 = vrsqrt.pop %v778
  %v783 = vrsqrt.pop %v779
  %v784 = vmul.f32 %v772, %v780
  %v785 = vmul.f32 %v773, %v781
  %v786 = vmul.f32 %v774, %v782
  %v787 = vmul.f32 %v775, %v783
  %v788 = vld [vmem:[%s4] sm:$0xff]
  %v789 = vld [vmem:[%s4 + $0x8] sm:$0xff]
  %v790 = vld [vmem:[%s4 + $0x10] sm:$0xff]
  %v791 = vld [vmem:[%s4 + $0x18] sm:$0xff]
  %v792 = vmul.f32 %v696, %v784
  %v793 = vmul.f32 %v697, %v785
  %v794 = vmul.f32 %v698, %v786
  %v795 = vmul.f32 %v699, %v787
  %v796 = vsub.f32 %v788, %v792
  %v797 = vsub.f32 %v789, %v793
  %v798 = vsub.f32 %v790, %v794
  %v799 = vsub.f32 %v791, %v795
  %801 = vset.pattern.permute.xlu0 0
  %802 = vperm.xlu0 %801, %v784
  %v803 = vpop.permute.xlu0 %802
  %806 = vset.pattern.permute.xlu0 0
  %807 = vperm.xlu0 %806, %v785
  %v808 = vpop.permute.xlu0 %807
  %811 = vset.pattern.permute.xlu0 0
  %812 = vperm.xlu0 %811, %v786
  %v813 = vpop.permute.xlu0 %812
  %816 = vset.pattern.permute.xlu0 0
  %817 = vperm.xlu0 %816, %v787
  %v818 = vpop.permute.xlu0 %817
  %v820 = vmul.f32 %v568, %v803
  %v821 = vmul.f32 %v570, %v803
  %v822 = vmul.f32 %v621, %v803
  %v823 = vmul.f32 %v623, %v803
  %v824 = vmul.f32 %v572, %v808
  %v825 = vmul.f32 %v574, %v808
  %v826 = vmul.f32 %v625, %v808
  %v827 = vmul.f32 %v627, %v808
  %v828 = vmul.f32 %v578, %v813
  %v829 = vmul.f32 %v580, %v813
  %v830 = vmul.f32 %v631, %v813
  %v831 = vmul.f32 %v633, %v813
  %v832 = vmul.f32 %v582, %v818
  %v833 = vmul.f32 %v584, %v818
  %v834 = vmul.f32 %v635, %v818
  %v835 = vmul.f32 %v637, %v818
  %837 = vset.pattern.permute.xlu0 0
  %838 = vperm.xlu0 %837, %v796
  %v839 = vpop.permute.xlu0 %838
  %842 = vset.pattern.permute.xlu0 0
  %843 = vperm.xlu0 %842, %v797
  %v844 = vpop.permute.xlu0 %843
  %847 = vset.pattern.permute.xlu0 0
  %848 = vperm.xlu0 %847, %v798
  %v849 = vpop.permute.xlu0 %848
  %852 = vset.pattern.permute.xlu0 0
  %853 = vperm.xlu0 %852, %v799
  %v854 = vpop.permute.xlu0 %853
  %v856 = vadd.f32 %v820, %v839
  %v857 = vadd.f32 %v821, %v839
  %v858 = vadd.f32 %v822, %v839
  %v859 = vadd.f32 %v823, %v839
  %v860 = vadd.f32 %v824, %v844
  %v861 = vadd.f32 %v825, %v844
  %v862 = vadd.f32 %v826, %v844
  %v863 = vadd.f32 %v827, %v844
  %v864 = vadd.f32 %v828, %v849
  %v865 = vadd.f32 %v829, %v849
  %v866 = vadd.f32 %v830, %v849
  %v867 = vadd.f32 %v831, %v849
  %v868 = vadd.f32 %v832, %v854
  %v869 = vadd.f32 %v833, %v854
  %v870 = vadd.f32 %v834, %v854
  %v871 = vadd.f32 %v835, %v854
  %v872 = vmax.f32 %v856, 0.0
  %v873 = vmax.f32 %v857, 0.0
  %v874 = vmax.f32 %v858, 0.0
  %v875 = vmax.f32 %v859, 0.0
  %v876 = vmax.f32 %v860, 0.0
  %v877 = vmax.f32 %v861, 0.0
  %v878 = vmax.f32 %v862, 0.0
  %v879 = vmax.f32 %v863, 0.0
  %v880 = vmax.f32 %v864, 0.0
  %v881 = vmax.f32 %v865, 0.0
  %v882 = vmax.f32 %v866, 0.0
  %v883 = vmax.f32 %v867, 0.0
  %v884 = vmax.f32 %v868, 0.0
  %v885 = vmax.f32 %v869, 0.0
  %v886 = vmax.f32 %v870, 0.0
  %v887 = vmax.f32 %v871, 0.0
  %888 = vrot.lane.b32.xlu0 %v872, 17
  %v889 = vpop.permute.xlu0 %888
  %890 = vrot.lane.b32.xlu0 %v876, 17
  %v891 = vpop.permute.xlu0 %890
  %892 = vrot.lane.b32.xlu0 %v880, 17
  %v893 = vpop.permute.xlu0 %892
  %894 = vrot.lane.b32.xlu0 %v884, 17
  %v895 = vpop.permute.xlu0 %894
  %896 = vrot.lane.b32.xlu0 %v873, 17
  %v897 = vpop.permute.xlu0 %896
  %898 = vrot.lane.b32.xlu0 %v877, 17
  %v899 = vpop.permute.xlu0 %898
  %900 = vrot.lane.b32.xlu0 %v881, 17
  %v901 = vpop.permute.xlu0 %900
  %902 = vrot.lane.b32.xlu0 %v885, 17
  %v903 = vpop.permute.xlu0 %902
  %904 = vrot.lane.b32.xlu0 %v874, 17
  %v905 = vpop.permute.xlu0 %904
  %906 = vrot.lane.b32.xlu0 %v878, 17
  %v907 = vpop.permute.xlu0 %906
  %908 = vrot.lane.b32.xlu0 %v882, 17
  %v909 = vpop.permute.xlu0 %908
  %910 = vrot.lane.b32.xlu0 %v886, 17
  %v911 = vpop.permute.xlu0 %910
  %912 = vrot.lane.b32.xlu0 %v875, 17
  %v913 = vpop.permute.xlu0 %912
  %914 = vrot.lane.b32.xlu0 %v879, 17
  %v915 = vpop.permute.xlu0 %914
  %916 = vrot.lane.b32.xlu0 %v883, 17
  %v917 = vpop.permute.xlu0 %916
  %918 = vrot.lane.b32.xlu0 %v887, 17
  %v919 = vpop.permute.xlu0 %918
  %v920 = vsel %vm86, %v905, %v913
  %v921 = vsel %vm86, %v907, %v915
  %v922 = vsel %vm86, %v909, %v917
  %v923 = vsel %vm86, %v911, %v919
  %v924 = vsel %vm86, %v897, %v905
  %v925 = vsel %vm86, %v899, %v907
  %v926 = vsel %vm86, %v901, %v909
  %v927 = vsel %vm86, %v903, %v911
  %v928 = vsel %vm86, %v889, %v897
  %v929 = vsel %vm86, %v891, %v899
  %v930 = vsel %vm86, %v893, %v901
  %v931 = vsel %vm86, %v895, %v903
  %v932 = vsel %vm86, %v913, %v889
  %v933 = vsel %vm86, %v915, %v891
  %v934 = vsel %vm86, %v917, %v893
  %v935 = vsel %vm86, %v919, %v895
  %v936 = vsel %vm108, %v932, 0.0
  %v937 = vsel %vm109, %v928, 0.0
  %v938 = vsel %vm110, %v924, 0.0
  %v939 = vsel %vm111, %v920, 0.0
  %v940 = vsel %vm108, %v933, 0.0
  %v941 = vsel %vm109, %v929, 0.0
  %v942 = vsel %vm110, %v925, 0.0
  %v943 = vsel %vm111, %v921, 0.0
  %v944 = vsel %vm108, %v934, 0.0
  %v945 = vsel %vm109, %v930, 0.0
  %v946 = vsel %vm110, %v926, 0.0
  %v947 = vsel %vm111, %v922, 0.0
  %v948 = vsel %vm108, %v935, 0.0
  %v949 = vsel %vm109, %v931, 0.0
  %v950 = vsel %vm110, %v927, 0.0
  %v951 = vsel %vm111, %v923, 0.0
  %952 = vst [vmem:[#allocation3] sm:$0xff] %v936
  %953 = vst [vmem:[#allocation3 + $0x8] sm:$0xff] %v937
  %954 = vst [vmem:[#allocation3 + $0x10] sm:$0xff] %v938
  %955 = vst [vmem:[#allocation3 + $0x18] sm:$0xff] %v939
  %956 = vst [vmem:[#allocation3 + $0x20] sm:$0xff] %v940
  %957 = vst [vmem:[#allocation3 + $0x28] sm:$0xff] %v941
  %958 = vst [vmem:[#allocation3 + $0x30] sm:$0xff] %v942
  %959 = vst [vmem:[#allocation3 + $0x38] sm:$0xff] %v943
  %960 = vst [vmem:[#allocation3 + $0x40] sm:$0xff] %v944
  %961 = vst [vmem:[#allocation3 + $0x48] sm:$0xff] %v945
  %962 = vst [vmem:[#allocation3 + $0x50] sm:$0xff] %v946
  %963 = vst [vmem:[#allocation3 + $0x58] sm:$0xff] %v947
  %964 = vst [vmem:[#allocation3 + $0x60] sm:$0xff] %v948
  %965 = vst [vmem:[#allocation3 + $0x68] sm:$0xff] %v949
  %966 = vst [vmem:[#allocation3 + $0x70] sm:$0xff] %v950
  %967 = vst [vmem:[#allocation3 + $0x78] sm:$0xff] %v951
  %968 = vrot.lane.b32.xlu0 %v872, 16
  %v969 = vpop.permute.xlu0 %968
  %970 = vrot.lane.b32.xlu0 %v876, 16
  %v971 = vpop.permute.xlu0 %970
  %972 = vrot.lane.b32.xlu0 %v880, 16
  %v973 = vpop.permute.xlu0 %972
  %974 = vrot.lane.b32.xlu0 %v884, 16
  %v975 = vpop.permute.xlu0 %974
  %976 = vrot.lane.b32.xlu0 %v873, 16
  %v977 = vpop.permute.xlu0 %976
  %978 = vrot.lane.b32.xlu0 %v877, 16
  %v979 = vpop.permute.xlu0 %978
  %980 = vrot.lane.b32.xlu0 %v881, 16
  %v981 = vpop.permute.xlu0 %980
  %982 = vrot.lane.b32.xlu0 %v885, 16
  %v983 = vpop.permute.xlu0 %982
  %984 = vrot.lane.b32.xlu0 %v874, 16
  %v985 = vpop.permute.xlu0 %984
  %986 = vrot.lane.b32.xlu0 %v878, 16
  %v987 = vpop.permute.xlu0 %986
  %988 = vrot.lane.b32.xlu0 %v882, 16
  %v989 = vpop.permute.xlu0 %988
  %990 = vrot.lane.b32.xlu0 %v886, 16
  %v991 = vpop.permute.xlu0 %990
  %992 = vrot.lane.b32.xlu0 %v875, 16
  %v993 = vpop.permute.xlu0 %992
  %994 = vrot.lane.b32.xlu0 %v879, 16
  %v995 = vpop.permute.xlu0 %994
  %996 = vrot.lane.b32.xlu0 %v883, 16
  %v997 = vpop.permute.xlu0 %996
  %998 = vrot.lane.b32.xlu0 %v887, 16
  %v999 = vpop.permute.xlu0 %998
  %v1000 = vsel %vm128, %v985, %v993
  %v1001 = vsel %vm128, %v987, %v995
  %v1002 = vsel %vm128, %v989, %v997
  %v1003 = vsel %vm128, %v991, %v999
  %v1004 = vsel %vm128, %v977, %v985
  %v1005 = vsel %vm128, %v979, %v987
  %v1006 = vsel %vm128, %v981, %v989
  %v1007 = vsel %vm128, %v983, %v991
  %v1008 = vsel %vm128, %v969, %v977
  %v1009 = vsel %vm128, %v971, %v979
  %v1010 = vsel %vm128, %v973, %v981
  %v1011 = vsel %vm128, %v975, %v983
  %v1012 = vsel %vm128, %v993, %v969
  %v1013 = vsel %vm128, %v995, %v971
  %v1014 = vsel %vm128, %v997, %v973
  %v1015 = vsel %vm128, %v999, %v975
  %v1016 = vsel %vm150, %v1012, 0.0
  %v1017 = vsel %vm151, %v1008, 0.0
  %v1018 = vsel %vm152, %v1004, 0.0
  %v1019 = vsel %vm153, %v1000, 0.0
  %v1020 = vsel %vm150, %v1013, 0.0
  %v1021 = vsel %vm151, %v1009, 0.0
  %v1022 = vsel %vm152, %v1005, 0.0
  %v1023 = vsel %vm153, %v1001, 0.0
  %v1024 = vsel %vm150, %v1014, 0.0
  %v1025 = vsel %vm151, %v1010, 0.0
  %v1026 = vsel %vm152, %v1006, 0.0
  %v1027 = vsel %vm153, %v1002, 0.0
  %v1028 = vsel %vm150, %v1015, 0.0
  %v1029 = vsel %vm151, %v1011, 0.0
  %v1030 = vsel %vm152, %v1007, 0.0
  %v1031 = vsel %vm153, %v1003, 0.0
  %1032 = vst [vmem:[#allocation3 + $0x80] sm:$0xff] %v1016
  %1033 = vst [vmem:[#allocation3 + $0x88] sm:$0xff] %v1017
  %1034 = vst [vmem:[#allocation3 + $0x90] sm:$0xff] %v1018
  %1035 = vst [vmem:[#allocation3 + $0x98] sm:$0xff] %v1019
  %1036 = vst [vmem:[#allocation3 + $0xa0] sm:$0xff] %v1020
  %1037 = vst [vmem:[#allocation3 + $0xa8] sm:$0xff] %v1021
  %1038 = vst [vmem:[#allocation3 + $0xb0] sm:$0xff] %v1022
  %1039 = vst [vmem:[#allocation3 + $0xb8] sm:$0xff] %v1023
  %1040 = vst [vmem:[#allocation3 + $0xc0] sm:$0xff] %v1024
  %1041 = vst [vmem:[#allocation3 + $0xc8] sm:$0xff] %v1025
  %1042 = vst [vmem:[#allocation3 + $0xd0] sm:$0xff] %v1026
  %1043 = vst [vmem:[#allocation3 + $0xd8] sm:$0xff] %v1027
  %1044 = vst [vmem:[#allocation3 + $0xe0] sm:$0xff] %v1028
  %1045 = vst [vmem:[#allocation3 + $0xe8] sm:$0xff] %v1029
  %1046 = vst [vmem:[#allocation3 + $0xf0] sm:$0xff] %v1030
  %1047 = vst [vmem:[#allocation3 + $0xf8] sm:$0xff] %v1031
  %1048 = vrot.lane.b32.xlu0 %v872, 15
  %v1049 = vpop.permute.xlu0 %1048
  %1050 = vrot.lane.b32.xlu0 %v876, 15
  %v1051 = vpop.permute.xlu0 %1050
  %1052 = vrot.lane.b32.xlu0 %v880, 15
  %v1053 = vpop.permute.xlu0 %1052
  %1054 = vrot.lane.b32.xlu0 %v884, 15
  %v1055 = vpop.permute.xlu0 %1054
  %1056 = vrot.lane.b32.xlu0 %v873, 15
  %v1057 = vpop.permute.xlu0 %1056
  %1058 = vrot.lane.b32.xlu0 %v877, 15
  %v1059 = vpop.permute.xlu0 %1058
  %1060 = vrot.lane.b32.xlu0 %v881, 15
  %v1061 = vpop.permute.xlu0 %1060
  %1062 = vrot.lane.b32.xlu0 %v885, 15
  %v1063 = vpop.permute.xlu0 %1062
  %1064 = vrot.lane.b32.xlu0 %v874, 15
  %v1065 = vpop.permute.xlu0 %1064
  %1066 = vrot.lane.b32.xlu0 %v878, 15
  %v1067 = vpop.permute.xlu0 %1066
  %1068 = vrot.lane.b32.xlu0 %v882, 15
  %v1069 = vpop.permute.xlu0 %1068
  %1070 = vrot.lane.b32.xlu0 %v886, 15
  %v1071 = vpop.permute.xlu0 %1070
  %1072 = vrot.lane.b32.xlu0 %v875, 15
  %v1073 = vpop.permute.xlu0 %1072
  %1074 = vrot.lane.b32.xlu0 %v879, 15
  %v1075 = vpop.permute.xlu0 %1074
  %1076 = vrot.lane.b32.xlu0 %v883, 15
  %v1077 = vpop.permute.xlu0 %1076
  %1078 = vrot.lane.b32.xlu0 %v887, 15
  %v1079 = vpop.permute.xlu0 %1078
  %v1080 = vsel %vm170, %v1065, %v1073
  %v1081 = vsel %vm170, %v1067, %v1075
  %v1082 = vsel %vm170, %v1069, %v1077
  %v1083 = vsel %vm170, %v1071, %v1079
  %v1084 = vsel %vm170, %v1057, %v1065
  %v1085 = vsel %vm170, %v1059, %v1067
  %v1086 = vsel %vm170, %v1061, %v1069
  %v1087 = vsel %vm170, %v1063, %v1071
  %v1088 = vsel %vm170, %v1049, %v1057
  %v1089 = vsel %vm170, %v1051, %v1059
  %v1090 = vsel %vm170, %v1053, %v1061
  %v1091 = vsel %vm170, %v1055, %v1063
  %v1092 = vsel %vm170, %v1073, %v1049
  %v1093 = vsel %vm170, %v1075, %v1051
  %v1094 = vsel %vm170, %v1077, %v1053
  %v1095 = vsel %vm170, %v1079, %v1055
  %v1096 = vsel %vm192, %v1092, 0.0
  %v1097 = vsel %vm193, %v1088, 0.0
  %v1098 = vsel %vm194, %v1084, 0.0
  %v1099 = vsel %vm195, %v1080, 0.0
  %v1100 = vsel %vm192, %v1093, 0.0
  %v1101 = vsel %vm193, %v1089, 0.0
  %v1102 = vsel %vm194, %v1085, 0.0
  %v1103 = vsel %vm195, %v1081, 0.0
  %v1104 = vsel %vm192, %v1094, 0.0
  %v1105 = vsel %vm193, %v1090, 0.0
  %v1106 = vsel %vm194, %v1086, 0.0
  %v1107 = vsel %vm195, %v1082, 0.0
  %v1108 = vsel %vm192, %v1095, 0.0
  %v1109 = vsel %vm193, %v1091, 0.0
  %v1110 = vsel %vm194, %v1087, 0.0
  %v1111 = vsel %vm195, %v1083, 0.0
  %1112 = vst [vmem:[#allocation3 + $0x100] sm:$0xff] %v1096
  %1113 = vst [vmem:[#allocation3 + $0x108] sm:$0xff] %v1097
  %1114 = vst [vmem:[#allocation3 + $0x110] sm:$0xff] %v1098
  %1115 = vst [vmem:[#allocation3 + $0x118] sm:$0xff] %v1099
  %1116 = vst [vmem:[#allocation3 + $0x120] sm:$0xff] %v1100
  %1117 = vst [vmem:[#allocation3 + $0x128] sm:$0xff] %v1101
  %1118 = vst [vmem:[#allocation3 + $0x130] sm:$0xff] %v1102
  %1119 = vst [vmem:[#allocation3 + $0x138] sm:$0xff] %v1103
  %1120 = vst [vmem:[#allocation3 + $0x140] sm:$0xff] %v1104
  %1121 = vst [vmem:[#allocation3 + $0x148] sm:$0xff] %v1105
  %1122 = vst [vmem:[#allocation3 + $0x150] sm:$0xff] %v1106
  %1123 = vst [vmem:[#allocation3 + $0x158] sm:$0xff] %v1107
  %1124 = vst [vmem:[#allocation3 + $0x160] sm:$0xff] %v1108
  %1125 = vst [vmem:[#allocation3 + $0x168] sm:$0xff] %v1109
  %1126 = vst [vmem:[#allocation3 + $0x170] sm:$0xff] %v1110
  %1127 = vst [vmem:[#allocation3 + $0x178] sm:$0xff] %v1111
  %1128 = vrot.lane.b32.xlu0 %v872, 1
  %v1129 = vpop.permute.xlu0 %1128
  %1130 = vrot.lane.b32.xlu0 %v876, 1
  %v1131 = vpop.permute.xlu0 %1130
  %1132 = vrot.lane.b32.xlu0 %v880, 1
  %v1133 = vpop.permute.xlu0 %1132
  %1134 = vrot.lane.b32.xlu0 %v884, 1
  %v1135 = vpop.permute.xlu0 %1134
  %1136 = vrot.lane.b32.xlu0 %v873, 1
  %v1137 = vpop.permute.xlu0 %1136
  %1138 = vrot.lane.b32.xlu0 %v877, 1
  %v1139 = vpop.permute.xlu0 %1138
  %1140 = vrot.lane.b32.xlu0 %v881, 1
  %v1141 = vpop.permute.xlu0 %1140
  %1142 = vrot.lane.b32.xlu0 %v885, 1
  %v1143 = vpop.permute.xlu0 %1142
  %1144 = vrot.lane.b32.xlu0 %v874, 1
  %v1145 = vpop.permute.xlu0 %1144
  %1146 = vrot.lane.b32.xlu0 %v878, 1
  %v1147 = vpop.permute.xlu0 %1146
  %1148 = vrot.lane.b32.xlu0 %v882, 1
  %v1149 = vpop.permute.xlu0 %1148
  %1150 = vrot.lane.b32.xlu0 %v886, 1
  %v1151 = vpop.permute.xlu0 %1150
  %1152 = vrot.lane.b32.xlu0 %v875, 1
  %v1153 = vpop.permute.xlu0 %1152
  %1154 = vrot.lane.b32.xlu0 %v879, 1
  %v1155 = vpop.permute.xlu0 %1154
  %1156 = vrot.lane.b32.xlu0 %v883, 1
  %v1157 = vpop.permute.xlu0 %1156
  %1158 = vrot.lane.b32.xlu0 %v887, 1
  %v1159 = vpop.permute.xlu0 %1158
  %v1160 = vsel %vm212, %v1145, %v1153
  %v1161 = vsel %vm212, %v1147, %v1155
  %v1162 = vsel %vm212, %v1149, %v1157
  %v1163 = vsel %vm212, %v1151, %v1159
  %v1164 = vsel %vm212, %v1137, %v1145
  %v1165 = vsel %vm212, %v1139, %v1147
  %v1166 = vsel %vm212, %v1141, %v1149
  %v1167 = vsel %vm212, %v1143, %v1151
  %v1168 = vsel %vm212, %v1129, %v1137
  %v1169 = vsel %vm212, %v1131, %v1139
  %v1170 = vsel %vm212, %v1133, %v1141
  %v1171 = vsel %vm212, %v1135, %v1143
  %v1172 = vsel %vm212, %v1153, %v1129
  %v1173 = vsel %vm212, %v1155, %v1131
  %v1174 = vsel %vm212, %v1157, %v1133
  %v1175 = vsel %vm212, %v1159, %v1135
  %v1176 = vsel %vm234, %v1172, 0.0
  %v1177 = vsel %vm235, %v1168, 0.0
  %v1178 = vsel %vm236, %v1164, 0.0
  %v1179 = vsel %vm237, %v1160, 0.0
  %v1180 = vsel %vm234, %v1173, 0.0
  %v1181 = vsel %vm235, %v1169, 0.0
  %v1182 = vsel %vm236, %v1165, 0.0
  %v1183 = vsel %vm237, %v1161, 0.0
  %v1184 = vsel %vm234, %v1174, 0.0
  %v1185 = vsel %vm235, %v1170, 0.0
  %v1186 = vsel %vm236, %v1166, 0.0
  %v1187 = vsel %vm237, %v1162, 0.0
  %v1188 = vsel %vm234, %v1175, 0.0
  %v1189 = vsel %vm235, %v1171, 0.0
  %v1190 = vsel %vm236, %v1167, 0.0
  %v1191 = vsel %vm237, %v1163, 0.0
  %1192 = vst [vmem:[#allocation3 + $0x180] sm:$0xff] %v1176
  %1193 = vst [vmem:[#allocation3 + $0x188] sm:$0xff] %v1177
  %1194 = vst [vmem:[#allocation3 + $0x190] sm:$0xff] %v1178
  %1195 = vst [vmem:[#allocation3 + $0x198] sm:$0xff] %v1179
  %1196 = vst [vmem:[#allocation3 + $0x1a0] sm:$0xff] %v1180
  %1197 = vst [vmem:[#allocation3 + $0x1a8] sm:$0xff] %v1181
  %1198 = vst [vmem:[#allocation3 + $0x1b0] sm:$0xff] %v1182
  %1199 = vst [vmem:[#allocation3 + $0x1b8] sm:$0xff] %v1183
  %1200 = vst [vmem:[#allocation3 + $0x1c0] sm:$0xff] %v1184
  %1201 = vst [vmem:[#allocation3 + $0x1c8] sm:$0xff] %v1185
  %1202 = vst [vmem:[#allocation3 + $0x1d0] sm:$0xff] %v1186
  %1203 = vst [vmem:[#allocation3 + $0x1d8] sm:$0xff] %v1187
  %1204 = vst [vmem:[#allocation3 + $0x1e0] sm:$0xff] %v1188
  %1205 = vst [vmem:[#allocation3 + $0x1e8] sm:$0xff] %v1189
  %1206 = vst [vmem:[#allocation3 + $0x1f0] sm:$0xff] %v1190
  %1207 = vst [vmem:[#allocation3 + $0x1f8] sm:$0xff] %v1191
  %v1208 = vsel %vm263, %v872, 0.0
  %v1209 = vsel %vm264, %v873, 0.0
  %v1210 = vsel %vm265, %v874, 0.0
  %v1211 = vsel %vm266, %v875, 0.0
  %v1212 = vsel %vm263, %v876, 0.0
  %v1213 = vsel %vm264, %v877, 0.0
  %v1214 = vsel %vm265, %v878, 0.0
  %v1215 = vsel %vm266, %v879, 0.0
  %v1216 = vsel %vm263, %v880, 0.0
  %v1217 = vsel %vm264, %v881, 0.0
  %v1218 = vsel %vm265, %v882, 0.0
  %v1219 = vsel %vm266, %v883, 0.0
  %v1220 = vsel %vm263, %v884, 0.0
  %v1221 = vsel %vm264, %v885, 0.0
  %v1222 = vsel %vm265, %v886, 0.0
  %v1223 = vsel %vm266, %v887, 0.0
  %1224 = vst [vmem:[#allocation3 + $0x200] sm:$0xff] %v1208
  %1225 = vst [vmem:[#allocation3 + $0x208] sm:$0xff] %v1209
  %1226 = vst [vmem:[#allocation3 + $0x210] sm:$0xff] %v1210
  %1227 = vst [vmem:[#allocation3 + $0x218] sm:$0xff] %v1211
  %1228 = vst [vmem:[#allocation3 + $0x220] sm:$0xff] %v1212
  %1229 = vst [vmem:[#allocation3 + $0x228] sm:$0xff] %v1213
  %1230 = vst [vmem:[#allocation3 + $0x230] sm:$0xff] %v1214
  %1231 = vst [vmem:[#allocation3 + $0x238] sm:$0xff] %v1215
  %1232 = vst [vmem:[#allocation3 + $0x240] sm:$0xff] %v1216
  %1233 = vst [vmem:[#allocation3 + $0x248] sm:$0xff] %v1217
  %1234 = vst [vmem:[#allocation3 + $0x250] sm:$0xff] %v1218
  %1235 = vst [vmem:[#allocation3 + $0x258] sm:$0xff] %v1219
  %1236 = vst [vmem:[#allocation3 + $0x260] sm:$0xff] %v1220
  %1237 = vst [vmem:[#allocation3 + $0x268] sm:$0xff] %v1221
  %1238 = vst [vmem:[#allocation3 + $0x270] sm:$0xff] %v1222
  %1239 = vst [vmem:[#allocation3 + $0x278] sm:$0xff] %v1223
  %1240 = vrot.lane.b32.xlu0 %v872, 127
  %v1241 = vpop.permute.xlu0 %1240
  %1242 = vrot.lane.b32.xlu0 %v876, 127
  %v1243 = vpop.permute.xlu0 %1242
  %1244 = vrot.lane.b32.xlu0 %v880, 127
  %v1245 = vpop.permute.xlu0 %1244
  %1246 = vrot.lane.b32.xlu0 %v884, 127
  %v1247 = vpop.permute.xlu0 %1246
  %1248 = vrot.lane.b32.xlu0 %v873, 127
  %v1249 = vpop.permute.xlu0 %1248
  %1250 = vrot.lane.b32.xlu0 %v877, 127
  %v1251 = vpop.permute.xlu0 %1250
  %1252 = vrot.lane.b32.xlu0 %v881, 127
  %v1253 = vpop.permute.xlu0 %1252
  %1254 = vrot.lane.b32.xlu0 %v885, 127
  %v1255 = vpop.permute.xlu0 %1254
  %1256 = vrot.lane.b32.xlu0 %v874, 127
  %v1257 = vpop.permute.xlu0 %1256
  %1258 = vrot.lane.b32.xlu0 %v878, 127
  %v1259 = vpop.permute.xlu0 %1258
  %1260 = vrot.lane.b32.xlu0 %v882, 127
  %v1261 = vpop.permute.xlu0 %1260
  %1262 = vrot.lane.b32.xlu0 %v886, 127
  %v1263 = vpop.permute.xlu0 %1262
  %1264 = vrot.lane.b32.xlu0 %v875, 127
  %v1265 = vpop.permute.xlu0 %1264
  %1266 = vrot.lane.b32.xlu0 %v879, 127
  %v1267 = vpop.permute.xlu0 %1266
  %1268 = vrot.lane.b32.xlu0 %v883, 127
  %v1269 = vpop.permute.xlu0 %1268
  %1270 = vrot.lane.b32.xlu0 %v887, 127
  %v1271 = vpop.permute.xlu0 %1270
  %v1272 = vsel %vm283, %v1257, %v1265
  %v1273 = vsel %vm283, %v1259, %v1267
  %v1274 = vsel %vm283, %v1261, %v1269
  %v1275 = vsel %vm283, %v1263, %v1271
  %v1276 = vsel %vm283, %v1249, %v1257
  %v1277 = vsel %vm283, %v1251, %v1259
  %v1278 = vsel %vm283, %v1253, %v1261
  %v1279 = vsel %vm283, %v1255, %v1263
  %v1280 = vsel %vm283, %v1241, %v1249
  %v1281 = vsel %vm283, %v1243, %v1251
  %v1282 = vsel %vm283, %v1245, %v1253
  %v1283 = vsel %vm283, %v1247, %v1255
  %v1284 = vsel %vm283, %v1265, %v1241
  %v1285 = vsel %vm283, %v1267, %v1243
  %v1286 = vsel %vm283, %v1269, %v1245
  %v1287 = vsel %vm283, %v1271, %v1247
  %v1288 = vsel %vm305, %v1280, 0.0
  %v1289 = vsel %vm306, %v1276, 0.0
  %v1290 = vsel %vm307, %v1272, 0.0
  %v1291 = vsel %vm308, %v1284, 0.0
  %v1292 = vsel %vm305, %v1281, 0.0
  %v1293 = vsel %vm306, %v1277, 0.0
  %v1294 = vsel %vm307, %v1273, 0.0
  %v1295 = vsel %vm308, %v1285, 0.0
  %v1296 = vsel %vm305, %v1282, 0.0
  %v1297 = vsel %vm306, %v1278, 0.0
  %v1298 = vsel %vm307, %v1274, 0.0
  %v1299 = vsel %vm308, %v1286, 0.0
  %v1300 = vsel %vm305, %v1283, 0.0
  %v1301 = vsel %vm306, %v1279, 0.0
  %v1302 = vsel %vm307, %v1275, 0.0
  %v1303 = vsel %vm308, %v1287, 0.0
  %1304 = vst [vmem:[#allocation3 + $0x280] sm:$0xff] %v1288
  %1305 = vst [vmem:[#allocation3 + $0x288] sm:$0xff] %v1289
  %1306 = vst [vmem:[#allocation3 + $0x290] sm:$0xff] %v1290
  %1307 = vst [vmem:[#allocation3 + $0x298] sm:$0xff] %v1291
  %1308 = vst [vmem:[#allocation3 + $0x2a0] sm:$0xff] %v1292
  %1309 = vst [vmem:[#allocation3 + $0x2a8] sm:$0xff] %v1293
  %1310 = vst [vmem:[#allocation3 + $0x2b0] sm:$0xff] %v1294
  %1311 = vst [vmem:[#allocation3 + $0x2b8] sm:$0xff] %v1295
  %1312 = vst [vmem:[#allocation3 + $0x2c0] sm:$0xff] %v1296
  %1313 = vst [vmem:[#allocation3 + $0x2c8] sm:$0xff] %v1297
  %1314 = vst [vmem:[#allocation3 + $0x2d0] sm:$0xff] %v1298
  %1315 = vst [vmem:[#allocation3 + $0x2d8] sm:$0xff] %v1299
  %1316 = vst [vmem:[#allocation3 + $0x2e0] sm:$0xff] %v1300
  %1317 = vst [vmem:[#allocation3 + $0x2e8] sm:$0xff] %v1301
  %1318 = vst [vmem:[#allocation3 + $0x2f0] sm:$0xff] %v1302
  %1319 = vst [vmem:[#allocation3 + $0x2f8] sm:$0xff] %v1303
  %1320 = vrot.lane.b32.xlu0 %v872, 113
  %v1321 = vpop.permute.xlu0 %1320
  %1322 = vrot.lane.b32.xlu0 %v876, 113
  %v1323 = vpop.permute.xlu0 %1322
  %1324 = vrot.lane.b32.xlu0 %v880, 113
  %v1325 = vpop.permute.xlu0 %1324
  %1326 = vrot.lane.b32.xlu0 %v884, 113
  %v1327 = vpop.permute.xlu0 %1326
  %1328 = vrot.lane.b32.xlu0 %v873, 113
  %v1329 = vpop.permute.xlu0 %1328
  %1330 = vrot.lane.b32.xlu0 %v877, 113
  %v1331 = vpop.permute.xlu0 %1330
  %1332 = vrot.lane.b32.xlu0 %v881, 113
  %v1333 = vpop.permute.xlu0 %1332
  %1334 = vrot.lane.b32.xlu0 %v885, 113
  %v1335 = vpop.permute.xlu0 %1334
  %1336 = vrot.lane.b32.xlu0 %v874, 113
  %v1337 = vpop.permute.xlu0 %1336
  %1338 = vrot.lane.b32.xlu0 %v878, 113
  %v1339 = vpop.permute.xlu0 %1338
  %1340 = vrot.lane.b32.xlu0 %v882, 113
  %v1341 = vpop.permute.xlu0 %1340
  %1342 = vrot.lane.b32.xlu0 %v886, 113
  %v1343 = vpop.permute.xlu0 %1342
  %1344 = vrot.lane.b32.xlu0 %v875, 113
  %v1345 = vpop.permute.xlu0 %1344
  %1346 = vrot.lane.b32.xlu0 %v879, 113
  %v1347 = vpop.permute.xlu0 %1346
  %1348 = vrot.lane.b32.xlu0 %v883, 113
  %v1349 = vpop.permute.xlu0 %1348
  %1350 = vrot.lane.b32.xlu0 %v887, 113
  %v1351 = vpop.permute.xlu0 %1350
  %v1352 = vsel %vm325, %v1337, %v1345
  %v1353 = vsel %vm325, %v1339, %v1347
  %v1354 = vsel %vm325, %v1341, %v1349
  %v1355 = vsel %vm325, %v1343, %v1351
  %v1356 = vsel %vm325, %v1329, %v1337
  %v1357 = vsel %vm325, %v1331, %v1339
  %v1358 = vsel %vm325, %v1333, %v1341
  %v1359 = vsel %vm325, %v1335, %v1343
  %v1360 = vsel %vm325, %v1321, %v1329
  %v1361 = vsel %vm325, %v1323, %v1331
  %v1362 = vsel %vm325, %v1325, %v1333
  %v1363 = vsel %vm325, %v1327, %v1335
  %v1364 = vsel %vm325, %v1345, %v1321
  %v1365 = vsel %vm325, %v1347, %v1323
  %v1366 = vsel %vm325, %v1349, %v1325
  %v1367 = vsel %vm325, %v1351, %v1327
  %v1368 = vsel %vm347, %v1360, 0.0
  %v1369 = vsel %vm348, %v1356, 0.0
  %v1370 = vsel %vm349, %v1352, 0.0
  %v1371 = vsel %vm350, %v1364, 0.0
  %v1372 = vsel %vm347, %v1361, 0.0
  %v1373 = vsel %vm348, %v1357, 0.0
  %v1374 = vsel %vm349, %v1353, 0.0
  %v1375 = vsel %vm350, %v1365, 0.0
  %v1376 = vsel %vm347, %v1362, 0.0
  %v1377 = vsel %vm348, %v1358, 0.0
  %v1378 = vsel %vm349, %v1354, 0.0
  %v1379 = vsel %vm350, %v1366, 0.0
  %v1380 = vsel %vm347, %v1363, 0.0
  %v1381 = vsel %vm348, %v1359, 0.0
  %v1382 = vsel %vm349, %v1355, 0.0
  %v1383 = vsel %vm350, %v1367, 0.0
  %1384 = vst [vmem:[#allocation3 + $0x300] sm:$0xff] %v1368
  %1385 = vst [vmem:[#allocation3 + $0x308] sm:$0xff] %v1369
  %1386 = vst [vmem:[#allocation3 + $0x310] sm:$0xff] %v1370
  %1387 = vst [vmem:[#allocation3 + $0x318] sm:$0xff] %v1371
  %1388 = vst [vmem:[#allocation3 + $0x320] sm:$0xff] %v1372
  %1389 = vst [vmem:[#allocation3 + $0x328] sm:$0xff] %v1373
  %1390 = vst [vmem:[#allocation3 + $0x330] sm:$0xff] %v1374
  %1391 = vst [vmem:[#allocation3 + $0x338] sm:$0xff] %v1375
  %1392 = vst [vmem:[#allocation3 + $0x340] sm:$0xff] %v1376
  %1393 = vst [vmem:[#allocation3 + $0x348] sm:$0xff] %v1377
  %1394 = vst [vmem:[#allocation3 + $0x350] sm:$0xff] %v1378
  %1395 = vst [vmem:[#allocation3 + $0x358] sm:$0xff] %v1379
  %1396 = vst [vmem:[#allocation3 + $0x360] sm:$0xff] %v1380
  %1397 = vst [vmem:[#allocation3 + $0x368] sm:$0xff] %v1381
  %1398 = vst [vmem:[#allocation3 + $0x370] sm:$0xff] %v1382
  %1399 = vst [vmem:[#allocation3 + $0x378] sm:$0xff] %v1383
  %1400 = vrot.lane.b32.xlu0 %v872, 112
  %v1401 = vpop.permute.xlu0 %1400
  %1402 = vrot.lane.b32.xlu0 %v876, 112
  %v1403 = vpop.permute.xlu0 %1402
  %1404 = vrot.lane.b32.xlu0 %v880, 112
  %v1405 = vpop.permute.xlu0 %1404
  %1406 = vrot.lane.b32.xlu0 %v884, 112
  %v1407 = vpop.permute.xlu0 %1406
  %1408 = vrot.lane.b32.xlu0 %v873, 112
  %v1409 = vpop.permute.xlu0 %1408
  %1410 = vrot.lane.b32.xlu0 %v877, 112
  %v1411 = vpop.permute.xlu0 %1410
  %1412 = vrot.lane.b32.xlu0 %v881, 112
  %v1413 = vpop.permute.xlu0 %1412
  %1414 = vrot.lane.b32.xlu0 %v885, 112
  %v1415 = vpop.permute.xlu0 %1414
  %1416 = vrot.lane.b32.xlu0 %v874, 112
  %v1417 = vpop.permute.xlu0 %1416
  %1418 = vrot.lane.b32.xlu0 %v878, 112
  %v1419 = vpop.permute.xlu0 %1418
  %1420 = vrot.lane.b32.xlu0 %v882, 112
  %v1421 = vpop.permute.xlu0 %1420
  %1422 = vrot.lane.b32.xlu0 %v886, 112
  %v1423 = vpop.permute.xlu0 %1422
  %1424 = vrot.lane.b32.xlu0 %v875, 112
  %v1425 = vpop.permute.xlu0 %1424
  %1426 = vrot.lane.b32.xlu0 %v879, 112
  %v1427 = vpop.permute.xlu0 %1426
  %1428 = vrot.lane.b32.xlu0 %v883, 112
  %v1429 = vpop.permute.xlu0 %1428
  %1430 = vrot.lane.b32.xlu0 %v887, 112
  %v1431 = vpop.permute.xlu0 %1430
  %v1432 = vsel %vm367, %v1417, %v1425
  %v1433 = vsel %vm367, %v1419, %v1427
  %v1434 = vsel %vm367, %v1421, %v1429
  %v1435 = vsel %vm367, %v1423, %v1431
  %v1436 = vsel %vm367, %v1409, %v1417
  %v1437 = vsel %vm367, %v1411, %v1419
  %v1438 = vsel %vm367, %v1413, %v1421
  %v1439 = vsel %vm367, %v1415, %v1423
  %v1440 = vsel %vm367, %v1401, %v1409
  %v1441 = vsel %vm367, %v1403, %v1411
  %v1442 = vsel %vm367, %v1405, %v1413
  %v1443 = vsel %vm367, %v1407, %v1415
  %v1444 = vsel %vm367, %v1425, %v1401
  %v1445 = vsel %vm367, %v1427, %v1403
  %v1446 = vsel %vm367, %v1429, %v1405
  %v1447 = vsel %vm367, %v1431, %v1407
  %v1448 = vsel %vm389, %v1440, 0.0
  %v1449 = vsel %vm390, %v1436, 0.0
  %v1450 = vsel %vm391, %v1432, 0.0
  %v1451 = vsel %vm392, %v1444, 0.0
  %v1452 = vsel %vm389, %v1441, 0.0
  %v1453 = vsel %vm390, %v1437, 0.0
  %v1454 = vsel %vm391, %v1433, 0.0
  %v1455 = vsel %vm392, %v1445, 0.0
  %v1456 = vsel %vm389, %v1442, 0.0
  %v1457 = vsel %vm390, %v1438, 0.0
  %v1458 = vsel %vm391, %v1434, 0.0
  %v1459 = vsel %vm392, %v1446, 0.0
  %v1460 = vsel %vm389, %v1443, 0.0
  %v1461 = vsel %vm390, %v1439, 0.0
  %v1462 = vsel %vm391, %v1435, 0.0
  %v1463 = vsel %vm392, %v1447, 0.0
  %1464 = vst [vmem:[#allocation3 + $0x380] sm:$0xff] %v1448
  %1465 = vst [vmem:[#allocation3 + $0x388] sm:$0xff] %v1449
  %1466 = vst [vmem:[#allocation3 + $0x390] sm:$0xff] %v1450
  %1467 = vst [vmem:[#allocation3 + $0x398] sm:$0xff] %v1451
  %1468 = vst [vmem:[#allocation3 + $0x3a0] sm:$0xff] %v1452
  %1469 = vst [vmem:[#allocation3 + $0x3a8] sm:$0xff] %v1453
  %1470 = vst [vmem:[#allocation3 + $0x3b0] sm:$0xff] %v1454
  %1471 = vst [vmem:[#allocation3 + $0x3b8] sm:$0xff] %v1455
  %1472 = vst [vmem:[#allocation3 + $0x3c0] sm:$0xff] %v1456
  %1473 = vst [vmem:[#allocation3 + $0x3c8] sm:$0xff] %v1457
  %1474 = vst [vmem:[#allocation3 + $0x3d0] sm:$0xff] %v1458
  %1475 = vst [vmem:[#allocation3 + $0x3d8] sm:$0xff] %v1459
  %1476 = vst [vmem:[#allocation3 + $0x3e0] sm:$0xff] %v1460
  %1477 = vst [vmem:[#allocation3 + $0x3e8] sm:$0xff] %v1461
  %1478 = vst [vmem:[#allocation3 + $0x3f0] sm:$0xff] %v1462
  %1479 = vst [vmem:[#allocation3 + $0x3f8] sm:$0xff] %v1463
  %1480 = vrot.lane.b32.xlu0 %v872, 111
  %v1481 = vpop.permute.xlu0 %1480
  %1482 = vrot.lane.b32.xlu0 %v876, 111
  %v1483 = vpop.permute.xlu0 %1482
  %1484 = vrot.lane.b32.xlu0 %v880, 111
  %v1485 = vpop.permute.xlu0 %1484
  %1486 = vrot.lane.b32.xlu0 %v884, 111
  %v1487 = vpop.permute.xlu0 %1486
  %1488 = vrot.lane.b32.xlu0 %v873, 111
  %v1489 = vpop.permute.xlu0 %1488
  %1490 = vrot.lane.b32.xlu0 %v877, 111
  %v1491 = vpop.permute.xlu0 %1490
  %1492 = vrot.lane.b32.xlu0 %v881, 111
  %v1493 = vpop.permute.xlu0 %1492
  %1494 = vrot.lane.b32.xlu0 %v885, 111
  %v1495 = vpop.permute.xlu0 %1494
  %1496 = vrot.lane.b32.xlu0 %v874, 111
  %v1497 = vpop.permute.xlu0 %1496
  %1498 = vrot.lane.b32.xlu0 %v878, 111
  %v1499 = vpop.permute.xlu0 %1498
  %1500 = vrot.lane.b32.xlu0 %v882, 111
  %v1501 = vpop.permute.xlu0 %1500
  %1502 = vrot.lane.b32.xlu0 %v886, 111
  %v1503 = vpop.permute.xlu0 %1502
  %1504 = vrot.lane.b32.xlu0 %v875, 111
  %v1505 = vpop.permute.xlu0 %1504
  %1506 = vrot.lane.b32.xlu0 %v879, 111
  %v1507 = vpop.permute.xlu0 %1506
  %1508 = vrot.lane.b32.xlu0 %v883, 111
  %v1509 = vpop.permute.xlu0 %1508
  %1510 = vrot.lane.b32.xlu0 %v887, 111
  %v1511 = vpop.permute.xlu0 %1510
  %v1512 = vsel %vm409, %v1497, %v1505
  %v1513 = vsel %vm409, %v1499, %v1507
  %v1514 = vsel %vm409, %v1501, %v1509
  %v1515 = vsel %vm409, %v1503, %v1511
  %v1516 = vsel %vm409, %v1489, %v1497
  %v1517 = vsel %vm409, %v1491, %v1499
  %v1518 = vsel %vm409, %v1493, %v1501
  %v1519 = vsel %vm409, %v1495, %v1503
  %v1520 = vsel %vm409, %v1481, %v1489
  %v1521 = vsel %vm409, %v1483, %v1491
  %v1522 = vsel %vm409, %v1485, %v1493
  %v1523 = vsel %vm409, %v1487, %v1495
  %v1524 = vsel %vm409, %v1505, %v1481
  %v1525 = vsel %vm409, %v1507, %v1483
  %v1526 = vsel %vm409, %v1509, %v1485
  %v1527 = vsel %vm409, %v1511, %v1487
  %v1528 = vsel %vm431, %v1520, 0.0
  %v1529 = vsel %vm432, %v1516, 0.0
  %v1530 = vsel %vm433, %v1512, 0.0
  %v1531 = vsel %vm434, %v1524, 0.0
  %v1532 = vsel %vm431, %v1521, 0.0
  %v1533 = vsel %vm432, %v1517, 0.0
  %v1534 = vsel %vm433, %v1513, 0.0
  %v1535 = vsel %vm434, %v1525, 0.0
  %v1536 = vsel %vm431, %v1522, 0.0
  %v1537 = vsel %vm432, %v1518, 0.0
  %v1538 = vsel %vm433, %v1514, 0.0
  %v1539 = vsel %vm434, %v1526, 0.0
  %v1540 = vsel %vm431, %v1523, 0.0
  %v1541 = vsel %vm432, %v1519, 0.0
  %v1542 = vsel %vm433, %v1515, 0.0
  %v1543 = vsel %vm434, %v1527, 0.0
  %1544 = vst [vmem:[#allocation3 + $0x400] sm:$0xff] %v1528
  %1545 = vst [vmem:[#allocation3 + $0x408] sm:$0xff] %v1529
  %1546 = vst [vmem:[#allocation3 + $0x410] sm:$0xff] %v1530
  %1547 = vst [vmem:[#allocation3 + $0x418] sm:$0xff] %v1531
  %1548 = vst [vmem:[#allocation3 + $0x420] sm:$0xff] %v1532
  %1549 = vst [vmem:[#allocation3 + $0x428] sm:$0xff] %v1533
  %1550 = vst [vmem:[#allocation3 + $0x430] sm:$0xff] %v1534
  %1551 = vst [vmem:[#allocation3 + $0x438] sm:$0xff] %v1535
  %1552 = vst [vmem:[#allocation3 + $0x440] sm:$0xff] %v1536
  %1553 = vst [vmem:[#allocation3 + $0x448] sm:$0xff] %v1537
  %1554 = vst [vmem:[#allocation3 + $0x450] sm:$0xff] %v1538
  %1555 = vst [vmem:[#allocation3 + $0x458] sm:$0xff] %v1539
  %1556 = vst [vmem:[#allocation3 + $0x460] sm:$0xff] %v1540
  %1557 = vst [vmem:[#allocation3 + $0x468] sm:$0xff] %v1541
  %1558 = vst [vmem:[#allocation3 + $0x470] sm:$0xff] %v1542
  %1559 = vst [vmem:[#allocation3 + $0x478] sm:$0xff] %v1543
  %v1560 = vld [vmem:[%s5] sm:$0xff]
  %v1561 = vld [vmem:[%s5 + $0x8] sm:$0xf]
  %v1562 = vld [vmem:[%s5 + $0xc] sm:$0xff]
  %v1563 = vld [vmem:[%s5 + $0x14] sm:$0xf]
  %v1564 = vld [vmem:[%s5 + $0x18] sm:$0xff]
  %v1565 = vld [vmem:[%s5 + $0x20] sm:$0xf]
  %v1566 = vld [vmem:[%s5 + $0x24] sm:$0xff]
  %v1567 = vld [vmem:[%s5 + $0x2c] sm:$0xf]
  %v1568 = vld [vmem:[#allocation3] sm:$0xff]
  %v1569 = vld [vmem:[#allocation3 + $0x8] sm:$0xff]
  %v1570 = vld [vmem:[#allocation3 + $0x10] sm:$0xff]
  %v1571 = vld [vmem:[#allocation3 + $0x18] sm:$0xff]
  %v1572 = vld [vmem:[#allocation3 + $0x20] sm:$0xff]
  %v1573 = vld [vmem:[#allocation3 + $0x28] sm:$0xff]
  %v1574 = vld [vmem:[#allocation3 + $0x30] sm:$0xff]
  %v1575 = vld [vmem:[#allocation3 + $0x38] sm:$0xff]
  %v1576 = vld [vmem:[#allocation3 + $0x40] sm:$0xff]
  %v1577 = vld [vmem:[#allocation3 + $0x48] sm:$0xff]
  %v1578 = vld [vmem:[#allocation3 + $0x50] sm:$0xff]
  %v1579 = vld [vmem:[#allocation3 + $0x58] sm:$0xff]
  %v1580 = vld [vmem:[#allocation3 + $0x60] sm:$0xff]
  %v1581 = vld [vmem:[#allocation3 + $0x68] sm:$0xff]
  %v1582 = vld [vmem:[#allocation3 + $0x70] sm:$0xff]
  %v1583 = vld [vmem:[#allocation3 + $0x78] sm:$0xff]
  %v1584 = vld [vmem:[#allocation3 + $0x80] sm:$0xff]
  %v1585 = vld [vmem:[#allocation3 + $0x88] sm:$0xff]
  %v1586 = vld [vmem:[#allocation3 + $0x90] sm:$0xff]
  %v1587 = vld [vmem:[#allocation3 + $0x98] sm:$0xff]
  %v1588 = vld [vmem:[#allocation3 + $0xa0] sm:$0xff]
  %v1589 = vld [vmem:[#allocation3 + $0xa8] sm:$0xff]
  %v1590 = vld [vmem:[#allocation3 + $0xb0] sm:$0xff]
  %v1591 = vld [vmem:[#allocation3 + $0xb8] sm:$0xff]
  %v1592 = vld [vmem:[#allocation3 + $0xc0] sm:$0xff]
  %v1593 = vld [vmem:[#allocation3 + $0xc8] sm:$0xff]
  %v1594 = vld [vmem:[#allocation3 + $0xd0] sm:$0xff]
  %v1595 = vld [vmem:[#allocation3 + $0xd8] sm:$0xff]
  %v1596 = vld [vmem:[#allocation3 + $0xe0] sm:$0xff]
  %v1597 = vld [vmem:[#allocation3 + $0xe8] sm:$0xff]
  %v1598 = vld [vmem:[#allocation3 + $0xf0] sm:$0xff]
  %v1599 = vld [vmem:[#allocation3 + $0xf8] sm:$0xff]
  %v1600 = vld [vmem:[#allocation3 + $0x100] sm:$0xff]
  %v1601 = vld [vmem:[#allocation3 + $0x108] sm:$0xff]
  %v1602 = vld [vmem:[#allocation3 + $0x110] sm:$0xff]
  %v1603 = vld [vmem:[#allocation3 + $0x118] sm:$0xff]
  %v1604 = vld [vmem:[#allocation3 + $0x120] sm:$0xff]
  %v1605 = vld [vmem:[#allocation3 + $0x128] sm:$0xff]
  %v1606 = vld [vmem:[#allocation3 + $0x130] sm:$0xff]
  %v1607 = vld [vmem:[#allocation3 + $0x138] sm:$0xff]
  %v1608 = vld [vmem:[#allocation3 + $0x140] sm:$0xff]
  %v1609 = vld [vmem:[#allocation3 + $0x148] sm:$0xff]
  %v1610 = vld [vmem:[#allocation3 + $0x150] sm:$0xff]
  %v1611 = vld [vmem:[#allocation3 + $0x158] sm:$0xff]
  %v1612 = vld [vmem:[#allocation3 + $0x160] sm:$0xff]
  %v1613 = vld [vmem:[#allocation3 + $0x168] sm:$0xff]
  %v1614 = vld [vmem:[#allocation3 + $0x170] sm:$0xff]
  %v1615 = vld [vmem:[#allocation3 + $0x178] sm:$0xff]
  %v1616 = vld [vmem:[#allocation3 + $0x180] sm:$0xff]
  %v1617 = vld [vmem:[#allocation3 + $0x188] sm:$0xff]
  %v1618 = vld [vmem:[#allocation3 + $0x190] sm:$0xff]
  %v1619 = vld [vmem:[#allocation3 + $0x198] sm:$0xff]
  %v1620 = vld [vmem:[#allocation3 + $0x1a0] sm:$0xff]
  %v1621 = vld [vmem:[#allocation3 + $0x1a8] sm:$0xff]
  %v1622 = vld [vmem:[#allocation3 + $0x1b0] sm:$0xff]
  %v1623 = vld [vmem:[#allocation3 + $0x1b8] sm:$0xff]
  %v1624 = vld [vmem:[#allocation3 + $0x1c0] sm:$0xff]
  %v1625 = vld [vmem:[#allocation3 + $0x1c8] sm:$0xff]
  %v1626 = vld [vmem:[#allocation3 + $0x1d0] sm:$0xff]
  %v1627 = vld [vmem:[#allocation3 + $0x1d8] sm:$0xff]
  %v1628 = vld [vmem:[#allocation3 + $0x1e0] sm:$0xff]
  %v1629 = vld [vmem:[#allocation3 + $0x1e8] sm:$0xff]
  %v1630 = vld [vmem:[#allocation3 + $0x1f0] sm:$0xff]
  %v1631 = vld [vmem:[#allocation3 + $0x1f8] sm:$0xff]
  %v1632 = vld [vmem:[#allocation3 + $0x200] sm:$0xff]
  %v1633 = vld [vmem:[#allocation3 + $0x208] sm:$0xff]
  %v1634 = vld [vmem:[#allocation3 + $0x210] sm:$0xff]
  %v1635 = vld [vmem:[#allocation3 + $0x218] sm:$0xff]
  %v1636 = vld [vmem:[#allocation3 + $0x220] sm:$0xff]
  %v1637 = vld [vmem:[#allocation3 + $0x228] sm:$0xff]
  %v1638 = vld [vmem:[#allocation3 + $0x230] sm:$0xff]
  %v1639 = vld [vmem:[#allocation3 + $0x238] sm:$0xff]
  %v1640 = vld [vmem:[#allocation3 + $0x240] sm:$0xff]
  %v1641 = vld [vmem:[#allocation3 + $0x248] sm:$0xff]
  %v1642 = vld [vmem:[#allocation3 + $0x250] sm:$0xff]
  %v1643 = vld [vmem:[#allocation3 + $0x258] sm:$0xff]
  %v1644 = vld [vmem:[#allocation3 + $0x260] sm:$0xff]
  %v1645 = vld [vmem:[#allocation3 + $0x268] sm:$0xff]
  %v1646 = vld [vmem:[#allocation3 + $0x270] sm:$0xff]
  %v1647 = vld [vmem:[#allocation3 + $0x278] sm:$0xff]
  %v1648 = vld [vmem:[#allocation3 + $0x280] sm:$0xff]
  %v1649 = vld [vmem:[#allocation3 + $0x288] sm:$0xff]
  %v1650 = vld [vmem:[#allocation3 + $0x290] sm:$0xff]
  %v1651 = vld [vmem:[#allocation3 + $0x298] sm:$0xff]
  %v1652 = vld [vmem:[#allocation3 + $0x2a0] sm:$0xff]
  %v1653 = vld [vmem:[#allocation3 + $0x2a8] sm:$0xff]
  %v1654 = vld [vmem:[#allocation3 + $0x2b0] sm:$0xff]
  %v1655 = vld [vmem:[#allocation3 + $0x2b8] sm:$0xff]
  %v1656 = vld [vmem:[#allocation3 + $0x2c0] sm:$0xff]
  %v1657 = vld [vmem:[#allocation3 + $0x2c8] sm:$0xff]
  %v1658 = vld [vmem:[#allocation3 + $0x2d0] sm:$0xff]
  %v1659 = vld [vmem:[#allocation3 + $0x2d8] sm:$0xff]
  %v1660 = vld [vmem:[#allocation3 + $0x2e0] sm:$0xff]
  %v1661 = vld [vmem:[#allocation3 + $0x2e8] sm:$0xff]
  %v1662 = vld [vmem:[#allocation3 + $0x2f0] sm:$0xff]
  %v1663 = vld [vmem:[#allocation3 + $0x2f8] sm:$0xff]
  %v1664 = vld [vmem:[#allocation3 + $0x300] sm:$0xff]
  %v1665 = vld [vmem:[#allocation3 + $0x308] sm:$0xff]
  %v1666 = vld [vmem:[#allocation3 + $0x310] sm:$0xff]
  %v1667 = vld [vmem:[#allocation3 + $0x318] sm:$0xff]
  %v1668 = vld [vmem:[#allocation3 + $0x320] sm:$0xff]
  %v1669 = vld [vmem:[#allocation3 + $0x328] sm:$0xff]
  %v1670 = vld [vmem:[#allocation3 + $0x330] sm:$0xff]
  %v1671 = vld [vmem:[#allocation3 + $0x338] sm:$0xff]
  %v1672 = vld [vmem:[#allocation3 + $0x340] sm:$0xff]
  %v1673 = vld [vmem:[#allocation3 + $0x348] sm:$0xff]
  %v1674 = vld [vmem:[#allocation3 + $0x350] sm:$0xff]
  %v1675 = vld [vmem:[#allocation3 + $0x358] sm:$0xff]
  %v1676 = vld [vmem:[#allocation3 + $0x360] sm:$0xff]
  %v1677 = vld [vmem:[#allocation3 + $0x368] sm:$0xff]
  %v1678 = vld [vmem:[#allocation3 + $0x370] sm:$0xff]
  %v1679 = vld [vmem:[#allocation3 + $0x378] sm:$0xff]
  %v1680 = vld [vmem:[#allocation3 + $0x380] sm:$0xff]
  %v1681 = vld [vmem:[#allocation3 + $0x388] sm:$0xff]
  %v1682 = vld [vmem:[#allocation3 + $0x390] sm:$0xff]
  %v1683 = vld [vmem:[#allocation3 + $0x398] sm:$0xff]
  %v1684 = vld [vmem:[#allocation3 + $0x3a0] sm:$0xff]
  %v1685 = vld [vmem:[#allocation3 + $0x3a8] sm:$0xff]
  %v1686 = vld [vmem:[#allocation3 + $0x3b0] sm:$0xff]
  %v1687 = vld [vmem:[#allocation3 + $0x3b8] sm:$0xff]
  %v1688 = vld [vmem:[#allocation3 + $0x3c0] sm:$0xff]
  %v1689 = vld [vmem:[#allocation3 + $0x3c8] sm:$0xff]
  %v1690 = vld [vmem:[#allocation3 + $0x3d0] sm:$0xff]
  %v1691 = vld [vmem:[#allocation3 + $0x3d8] sm:$0xff]
  %v1692 = vld [vmem:[#allocation3 + $0x3e0] sm:$0xff]
  %v1693 = vld [vmem:[#allocation3 + $0x3e8] sm:$0xff]
  %v1694 = vld [vmem:[#allocation3 + $0x3f0] sm:$0xff]
  %v1695 = vld [vmem:[#allocation3 + $0x3f8] sm:$0xff]
  %v1696 = vld [vmem:[#allocation3 + $0x400] sm:$0xff]
  %v1697 = vld [vmem:[#allocation3 + $0x408] sm:$0xff]
  %v1698 = vld [vmem:[#allocation3 + $0x410] sm:$0xff]
  %v1699 = vld [vmem:[#allocation3 + $0x418] sm:$0xff]
  %v1700 = vld [vmem:[#allocation3 + $0x420] sm:$0xff]
  %v1701 = vld [vmem:[#allocation3 + $0x428] sm:$0xff]
  %v1702 = vld [vmem:[#allocation3 + $0x430] sm:$0xff]
  %v1703 = vld [vmem:[#allocation3 + $0x438] sm:$0xff]
  %v1704 = vld [vmem:[#allocation3 + $0x440] sm:$0xff]
  %v1705 = vld [vmem:[#allocation3 + $0x448] sm:$0xff]
  %v1706 = vld [vmem:[#allocation3 + $0x450] sm:$0xff]
  %v1707 = vld [vmem:[#allocation3 + $0x458] sm:$0xff]
  %v1708 = vld [vmem:[#allocation3 + $0x460] sm:$0xff]
  %v1709 = vld [vmem:[#allocation3 + $0x468] sm:$0xff]
  %v1710 = vld [vmem:[#allocation3 + $0x470] sm:$0xff]
  %v1711 = vld [vmem:[#allocation3 + $0x478] sm:$0xff]
  %v1712 = vpack.c.bf16 %v1572, %v1568
  %v1713 = vpack.c.bf16 %v1573, %v1569
  %v1714 = vpack.c.bf16 %v1574, %v1570
  %v1715 = vpack.c.bf16 %v1575, %v1571
  %v1716 = vpack.c.bf16 %v1580, %v1576
  %v1717 = vpack.c.bf16 %v1581, %v1577
  %v1718 = vpack.c.bf16 %v1582, %v1578
  %v1719 = vpack.c.bf16 %v1583, %v1579
  %v1720 = vpack.c.bf16 %v1588, %v1584
  %v1721 = vpack.c.bf16 %v1589, %v1585
  %v1722 = vpack.c.bf16 %v1590, %v1586
  %v1723 = vpack.c.bf16 %v1591, %v1587
  %v1724 = vpack.c.bf16 %v1596, %v1592
  %v1725 = vpack.c.bf16 %v1597, %v1593
  %v1726 = vpack.c.bf16 %v1598, %v1594
  %v1727 = vpack.c.bf16 %v1599, %v1595
  %v1728 = vpack.c.bf16 %v1604, %v1600
  %v1729 = vpack.c.bf16 %v1605, %v1601
  %v1730 = vpack.c.bf16 %v1606, %v1602
  %v1731 = vpack.c.bf16 %v1607, %v1603
  %v1732 = vpack.c.bf16 %v1612, %v1608
  %v1733 = vpack.c.bf16 %v1613, %v1609
  %v1734 = vpack.c.bf16 %v1614, %v1610
  %v1735 = vpack.c.bf16 %v1615, %v1611
  %v1736 = vpack.c.bf16 %v1620, %v1616
  %v1737 = vpack.c.bf16 %v1621, %v1617
  %v1738 = vpack.c.bf16 %v1622, %v1618
  %v1739 = vpack.c.bf16 %v1623, %v1619
  %v1740 = vpack.c.bf16 %v1628, %v1624
  %v1741 = vpack.c.bf16 %v1629, %v1625
  %v1742 = vpack.c.bf16 %v1630, %v1626
  %v1743 = vpack.c.bf16 %v1631, %v1627
  %v1744 = vpack.c.bf16 %v1636, %v1632
  %v1745 = vpack.c.bf16 %v1637, %v1633
  %v1746 = vpack.c.bf16 %v1638, %v1634
  %v1747 = vpack.c.bf16 %v1639, %v1635
  %v1748 = vpack.c.bf16 %v1644, %v1640
  %v1749 = vpack.c.bf16 %v1645, %v1641
  %v1750 = vpack.c.bf16 %v1646, %v1642
  %v1751 = vpack.c.bf16 %v1647, %v1643
  %v1752 = vpack.c.bf16 %v1652, %v1648
  %v1753 = vpack.c.bf16 %v1653, %v1649
  %v1754 = vpack.c.bf16 %v1654, %v1650
  %v1755 = vpack.c.bf16 %v1655, %v1651
  %v1756 = vpack.c.bf16 %v1660, %v1656
  %v1757 = vpack.c.bf16 %v1661, %v1657
  %v1758 = vpack.c.bf16 %v1662, %v1658
  %v1759 = vpack.c.bf16 %v1663, %v1659
  %v1760 = vpack.c.bf16 %v1668, %v1664
  %v1761 = vpack.c.bf16 %v1669, %v1665
  %v1762 = vpack.c.bf16 %v1670, %v1666
  %v1763 = vpack.c.bf16 %v1671, %v1667
  %v1764 = vpack.c.bf16 %v1676, %v1672
  %v1765 = vpack.c.bf16 %v1677, %v1673
  %v1766 = vpack.c.bf16 %v1678, %v1674
  %v1767 = vpack.c.bf16 %v1679, %v1675
  %v1768 = vpack.c.bf16 %v1684, %v1680
  %v1769 = vpack.c.bf16 %v1685, %v1681
  %v1770 = vpack.c.bf16 %v1686, %v1682
  %v1771 = vpack.c.bf16 %v1687, %v1683
  %v1772 = vpack.c.bf16 %v1692, %v1688
  %v1773 = vpack.c.bf16 %v1693, %v1689
  %v1774 = vpack.c.bf16 %v1694, %v1690
  %v1775 = vpack.c.bf16 %v1695, %v1691
  %v1776 = vpack.c.bf16 %v1700, %v1696
  %v1777 = vpack.c.bf16 %v1701, %v1697
  %v1778 = vpack.c.bf16 %v1702, %v1698
  %v1779 = vpack.c.bf16 %v1703, %v1699
  %v1780 = vpack.c.bf16 %v1708, %v1704
  %v1781 = vpack.c.bf16 %v1709, %v1705
  %v1782 = vpack.c.bf16 %v1710, %v1706
  %v1783 = vpack.c.bf16 %v1711, %v1707
  %v1792 = vunpack.c.l.b16 %v1560
  %v1793 = vunpack.c.h.b16 %v1560
  %v1794 = vunpack.c.l.b16 %v1561
  %v1795 = vunpack.c.l.b16 %v1562
  %v1796 = vunpack.c.h.b16 %v1562
  %v1797 = vunpack.c.l.b16 %v1563
  %v1798 = vunpack.c.l.b16 %v1564
  %v1799 = vunpack.c.h.b16 %v1564
  %v1800 = vunpack.c.l.b16 %v1565
  %v1801 = vunpack.c.l.b16 %v1566
  %v1802 = vunpack.c.h.b16 %v1566
  %v1803 = vunpack.c.l.b16 %v1567
  %v1804 = vpack.c.b16 %v1795, %v1792
  %v1805 = vpack.c.b16 %v1796, %v1793
  %v1806 = vpack.c.b16 %v1797, %v1794
  %v1807 = vpack.c.b16 %v1801, %v1798
  %v1808 = vpack.c.b16 %v1802, %v1799
  %v1809 = vpack.c.b16 %v1803, %v1800
  %vm1814 = vcmask 261120
  %v1816 = vsel %vm1814, %v1806, 0
  %v1819 = vsel %vm1814, %v1809, 0
  %1821 = vmatprep.subr.bf16.mxu0 %v1713
  %1822 = vmatpush1.bf16.msra.mxu0 %v1712
  %1823 = vmatprep.subr.bf16.mxu0 %v1717
  %1824 = vmatpush1.bf16.msra.mxu0 %v1716
  %1825 = vmatprep.subr.bf16.mxu0 %v1721
  %1826 = vmatpush1.bf16.msra.mxu0 %v1720
  %1827 = vmatprep.subr.bf16.mxu0 %v1725
  %1828 = vmatpush1.bf16.msra.mxu0 %v1724
  %1829 = vmatprep.subr.bf16.mxu0 %v1729
  %1830 = vmatpush1.bf16.msra.mxu0 %v1728
  %1831 = vmatprep.subr.bf16.mxu0 %v1733
  %1832 = vmatpush1.bf16.msra.mxu0 %v1732
  %1833 = vmatprep.subr.bf16.mxu0 %v1737
  %1834 = vmatpush1.bf16.msra.mxu0 %v1736
  %1835 = vmatprep.subr.bf16.mxu0 %v1741
  %1836 = vmatpush1.bf16.msra.mxu0 %v1740
  %1837 = vmatprep.subr.bf16.mxu0 %v1745
  %1838 = vmatpush1.bf16.msra.mxu0 %v1744
  %1839 = vmatprep.subr.bf16.mxu0 %v1749
  %1840 = vmatpush1.bf16.msra.mxu0 %v1748
  %1841 = vmatprep.subr.bf16.mxu0 %v1753
  %1842 = vmatpush1.bf16.msra.mxu0 %v1752
  %1843 = vmatprep.subr.bf16.mxu0 %v1757
  %1844 = vmatpush1.bf16.msra.mxu0 %v1756
  %1845 = vmatprep.subr.bf16.mxu0 %v1761
  %1846 = vmatpush1.bf16.msra.mxu0 %v1760
  %1847 = vmatprep.subr.bf16.mxu0 %v1765
  %1848 = vmatpush1.bf16.msra.mxu0 %v1764
  %1849 = vmatprep.subr.bf16.mxu0 %v1769
  %1850 = vmatpush1.bf16.msra.mxu0 %v1768
  %1851 = vmatprep.subr.bf16.mxu0 %v1773
  %1852 = vmatpush1.bf16.msra.mxu0 %v1772
  %1853 = vmatprep.mubr.bf16.mxu0 %v1805
  %1854 = vmatmul.mubr.bf16.gmra.mrb[0].mxu0 %v1804
  %v1855 = vpop.f32.mrb[0].mxu0
  %v1856 = vadd.f32 0.0, %v1855
  %v1857 = vpop.f32.mrb[0].mxu0
  %v1858 = vadd.f32 0.0, %v1857
  %v1859 = vpop.f32.mrb[0].mxu0
  %v1860 = vadd.f32 0.0, %v1859
  %v1861 = vpop.f32.mrb[0].mxu0
  %v1862 = vadd.f32 0.0, %v1861
  %1863 = vmatprep.mubr.bf16.mxu0 %v1808
  %1864 = vmatmul.mubr.bf16.gmra.mrb[0].mxu0 %v1807
  %v1865 = vpop.f32.mrb[0].mxu0
  %v1866 = vadd.f32 0.0, %v1865
  %v1867 = vpop.f32.mrb[0].mxu0
  %v1868 = vadd.f32 0.0, %v1867
  %v1869 = vpop.f32.mrb[0].mxu0
  %v1870 = vadd.f32 0.0, %v1869
  %v1871 = vpop.f32.mrb[0].mxu0
  %v1872 = vadd.f32 0.0, %v1871
  %1873 = vdwg.mxu0
  %1874 = vmatprep.subr.bf16.mxu0 %v1777
  %1875 = vmatpush1.bf16.msra.mxu0 %v1776
  %1876 = vmatprep.subr.bf16.mxu0 %v1781
  %1877 = vmatpush1.bf16.msra.mxu0 %v1780
  %1878 = vmatprep.subr.bf16.mxu0 0
  %1879 = vmatpush1.bf16.msra.mxu0 0
  %1880 = vmatprep.subr.bf16.mxu0 0
  %1881 = vmatpush1.bf16.msra.mxu0 0
  %1882 = vmatprep.subr.bf16.mxu0 0
  %1883 = vmatpush1.bf16.msra.mxu0 0
  %1884 = vmatprep.subr.bf16.mxu0 0
  %1885 = vmatpush1.bf16.msra.mxu0 0
  %1886 = vmatprep.subr.bf16.mxu0 0
  %1887 = vmatpush1.bf16.msra.mxu0 0
  %1888 = vmatprep.subr.bf16.mxu0 0
  %1889 = vmatpush1.bf16.msra.mxu0 0
  %1890 = vmatprep.subr.bf16.mxu0 0
  %1891 = vmatpush1.bf16.msra.mxu0 0
  %1892 = vmatprep.subr.bf16.mxu0 0
  %1893 = vmatpush1.bf16.msra.mxu0 0
  %1894 = vmatprep.subr.bf16.mxu0 0
  %1895 = vmatpush1.bf16.msra.mxu0 0
  %1896 = vmatprep.subr.bf16.mxu0 0
  %1897 = vmatpush1.bf16.msra.mxu0 0
  %1898 = vmatprep.subr.bf16.mxu0 0
  %1899 = vmatpush1.bf16.msra.mxu0 0
  %1900 = vmatprep.subr.bf16.mxu0 0
  %1901 = vmatpush1.bf16.msra.mxu0 0
  %1902 = vmatprep.subr.bf16.mxu0 0
  %1903 = vmatpush1.bf16.msra.mxu0 0
  %1904 = vmatprep.subr.bf16.mxu0 0
  %1905 = vmatpush1.bf16.msra.mxu0 0
  %1906 = vmatprep.mubr.bf16.mxu0 0
  %1907 = vmatmul.mubr.bf16.gmra.mrb[0].mxu0 %v1816
  %v1908 = vpop.f32.mrb[0].mxu0
  %v1909 = vadd.f32 %v1856, %v1908
  %v1910 = vpop.f32.mrb[0].mxu0
  %v1911 = vadd.f32 %v1858, %v1910
  %v1912 = vpop.f32.mrb[0].mxu0
  %v1913 = vadd.f32 %v1860, %v1912
  %v1914 = vpop.f32.mrb[0].mxu0
  %v1915 = vadd.f32 %v1862, %v1914
  %1916 = vmatprep.mubr.bf16.mxu0 0
  %1917 = vmatmul.mubr.bf16.gmra.mrb[0].mxu0 %v1819
  %v1918 = vpop.f32.mrb[0].mxu0
  %v1919 = vadd.f32 %v1866, %v1918
  %v1920 = vpop.f32.mrb[0].mxu0
  %v1921 = vadd.f32 %v1868, %v1920
  %v1922 = vpop.f32.mrb[0].mxu0
  %v1923 = vadd.f32 %v1870, %v1922
  %v1924 = vpop.f32.mrb[0].mxu0
  %v1925 = vadd.f32 %v1872, %v1924
  %1926 = vdwg.mxu0
  %1927 = vmatprep.subr.bf16.mxu0 %v1715
  %1928 = vmatpush1.bf16.msra.mxu0 %v1714
  %1929 = vmatprep.subr.bf16.mxu0 %v1719
  %1930 = vmatpush1.bf16.msra.mxu0 %v1718
  %1931 = vmatprep.subr.bf16.mxu0 %v1723
  %1932 = vmatpush1.bf16.msra.mxu0 %v1722
  %1933 = vmatprep.subr.bf16.mxu0 %v1727
  %1934 = vmatpush1.bf16.msra.mxu0 %v1726
  %1935 = vmatprep.subr.bf16.mxu0 %v1731
  %1936 = vmatpush1.bf16.msra.mxu0 %v1730
  %1937 = vmatprep.subr.bf16.mxu0 %v1735
  %1938 = vmatpush1.bf16.msra.mxu0 %v1734
  %1939 = vmatprep.subr.bf16.mxu0 %v1739
  %1940 = vmatpush1.bf16.msra.mxu0 %v1738
  %1941 = vmatprep.subr.bf16.mxu0 %v1743
  %1942 = vmatpush1.bf16.msra.mxu0 %v1742
  %1943 = vmatprep.subr.bf16.mxu0 %v1747
  %1944 = vmatpush1.bf16.msra.mxu0 %v1746
  %1945 = vmatprep.subr.bf16.mxu0 %v1751
  %1946 = vmatpush1.bf16.msra.mxu0 %v1750
  %1947 = vmatprep.subr.bf16.mxu0 %v1755
  %1948 = vmatpush1.bf16.msra.mxu0 %v1754
  %1949 = vmatprep.subr.bf16.mxu0 %v1759
  %1950 = vmatpush1.bf16.msra.mxu0 %v1758
  %1951 = vmatprep.subr.bf16.mxu0 %v1763
  %1952 = vmatpush1.bf16.msra.mxu0 %v1762
  %1953 = vmatprep.subr.bf16.mxu0 %v1767
  %1954 = vmatpush1.bf16.msra.mxu0 %v1766
  %1955 = vmatprep.subr.bf16.mxu0 %v1771
  %1956 = vmatpush1.bf16.msra.mxu0 %v1770
  %1957 = vmatprep.subr.bf16.mxu0 %v1775
  %1958 = vmatpush1.bf16.msra.mxu0 %v1774
  %1959 = vmatprep.mubr.bf16.mxu0 %v1805
  %1960 = vmatmul.mubr.bf16.gmra.mrb[0].mxu0 %v1804
  %v1961 = vpop.f32.mrb[0].mxu0
  %v1962 = vadd.f32 0.0, %v1961
  %v1963 = vpop.f32.mrb[0].mxu0
  %v1964 = vadd.f32 0.0, %v1963
  %v1965 = vpop.f32.mrb[0].mxu0
  %v1966 = vadd.f32 0.0, %v1965
  %v1967 = vpop.f32.mrb[0].mxu0
  %v1968 = vadd.f32 0.0, %v1967
  %1969 = vmatprep.mubr.bf16.mxu0 %v1808
  %1970 = vmatmul.mubr.bf16.gmra.mrb[0].mxu0 %v1807
  %v1971 = vpop.f32.mrb[0].mxu0
  %v1972 = vadd.f32 0.0, %v1971
  %v1973 = vpop.f32.mrb[0].mxu0
  %v1974 = vadd.f32 0.0, %v1973
  %v1975 = vpop.f32.mrb[0].mxu0
  %v1976 = vadd.f32 0.0, %v1975
  %v1977 = vpop.f32.mrb[0].mxu0
  %v1978 = vadd.f32 0.0, %v1977
  %1979 = vdwg.mxu0
  %1980 = vmatprep.subr.bf16.mxu0 %v1779
  %1981 = vmatpush1.bf16.msra.mxu0 %v1778
  %1982 = vmatprep.subr.bf16.mxu0 %v1783
  %1983 = vmatpush1.bf16.msra.mxu0 %v1782
  %1984 = vmatprep.subr.bf16.mxu0 0
  %1985 = vmatpush1.bf16.msra.mxu0 0
  %1986 = vmatprep.subr.bf16.mxu0 0
  %1987 = vmatpush1.bf16.msra.mxu0 0
  %1988 = vmatprep.subr.bf16.mxu0 0
  %1989 = vmatpush1.bf16.msra.mxu0 0
  %1990 = vmatprep.subr.bf16.mxu0 0
  %1991 = vmatpush1.bf16.msra.mxu0 0
  %1992 = vmatprep.subr.bf16.mxu0 0
  %1993 = vmatpush1.bf16.msra.mxu0 0
  %1994 = vmatprep.subr.bf16.mxu0 0
  %1995 = vmatpush1.bf16.msra.mxu0 0
  %1996 = vmatprep.subr.bf16.mxu0 0
  %1997 = vmatpush1.bf16.msra.mxu0 0
  %1998 = vmatprep.subr.bf16.mxu0 0
  %1999 = vmatpush1.bf16.msra.mxu0 0
  %2000 = vmatprep.subr.bf16.mxu0 0
  %2001 = vmatpush1.bf16.msra.mxu0 0
  %2002 = vmatprep.subr.bf16.mxu0 0
  %2003 = vmatpush1.bf16.msra.mxu0 0
  %2004 = vmatprep.subr.bf16.mxu0 0
  %2005 = vmatpush1.bf16.msra.mxu0 0
  %2006 = vmatprep.subr.bf16.mxu0 0
  %2007 = vmatpush1.bf16.msra.mxu0 0
  %2008 = vmatprep.subr.bf16.mxu0 0
  %2009 = vmatpush1.bf16.msra.mxu0 0
  %2010 = vmatprep.subr.bf16.mxu0 0
  %2011 = vmatpush1.bf16.msra.mxu0 0
  %2012 = vmatprep.mubr.bf16.mxu0 0
  %2013 = vmatmul.mubr.bf16.gmra.mrb[0].mxu0 %v1816
  %v2014 = vpop.f32.mrb[0].mxu0
  %v2015 = vadd.f32 %v1962, %v2014
  %v2016 = vpop.f32.mrb[0].mxu0
  %v2017 = vadd.f32 %v1964, %v2016
  %v2018 = vpop.f32.mrb[0].mxu0
  %v2019 = vadd.f32 %v1966, %v2018
  %v2020 = vpop.f32.mrb[0].mxu0
  %v2021 = vadd.f32 %v1968, %v2020
  %2022 = vmatprep.mubr.bf16.mxu0 0
  %2023 = vmatmul.mubr.bf16.gmra.mrb[0].mxu0 %v1819
  %v2024 = vpop.f32.mrb[0].mxu0
  %v2025 = vadd.f32 %v1972, %v2024
  %v2026 = vpop.f32.mrb[0].mxu0
  %v2027 = vadd.f32 %v1974, %v2026
  %v2028 = vpop.f32.mrb[0].mxu0
  %v2029 = vadd.f32 %v1976, %v2028
  %v2030 = vpop.f32.mrb[0].mxu0
  %v2031 = vadd.f32 %v1978, %v2030
  %2032 = vdwg.mxu0
  %v2033 = vmul.f32 %v1909, %v643
  %v2034 = vmul.f32 %v1911, %v647
  %v2035 = vmul.f32 %v2015, %v651
  %v2036 = vmul.f32 %v2017, %v655
  %v2037 = vmul.f32 %v1913, %v643
  %v2038 = vmul.f32 %v1915, %v647
  %v2039 = vmul.f32 %v2019, %v651
  %v2040 = vmul.f32 %v2021, %v655
  %v2041 = vmul.f32 %v1919, %v643
  %v2042 = vmul.f32 %v1921, %v647
  %v2043 = vmul.f32 %v2025, %v651
  %v2044 = vmul.f32 %v2027, %v655
  %v2045 = vmul.f32 %v1923, %v643
  %v2046 = vmul.f32 %v1925, %v647
  %v2047 = vmul.f32 %v2029, %v651
  %v2048 = vmul.f32 %v2031, %v655
  %v2049 = vadd.f32 %v2033, %v2034
  %v2050 = vadd.f32 %v2049, %v2035
  %v2051 = vadd.f32 %v2050, %v2036
  %2052 = vadd.xlane.f32.xlu0 %v2051
  %v2053 = vpop.xlane.xlu0 %2052
  %v2054 = vadd.f32 %v2037, %v2038
  %v2055 = vadd.f32 %v2054, %v2039
  %v2056 = vadd.f32 %v2055, %v2040
  %2057 = vadd.xlane.f32.xlu0 %v2056
  %v2058 = vpop.xlane.xlu0 %2057
  %v2059 = vadd.f32 %v2041, %v2042
  %v2060 = vadd.f32 %v2059, %v2043
  %v2061 = vadd.f32 %v2060, %v2044
  %2062 = vadd.xlane.f32.xlu0 %v2061
  %v2063 = vpop.xlane.xlu0 %2062
  %v2064 = vadd.f32 %v2045, %v2046
  %v2065 = vadd.f32 %v2064, %v2047
  %v2066 = vadd.f32 %v2065, %v2048
  %2067 = vadd.xlane.f32.xlu0 %v2066
  %v2068 = vpop.xlane.xlu0 %2067
  %v2069 = vmul.f32 %v2053, 0.001953125
  %v2070 = vmul.f32 %v2058, 0.001953125
  %v2071 = vmul.f32 %v2063, 0.001953125
  %v2072 = vmul.f32 %v2068, 0.001953125
  %v2073 = vsub.f32 %v1909, %v2069
  %v2074 = vsub.f32 %v1911, %v2069
  %v2075 = vsub.f32 %v2015, %v2069
  %v2076 = vsub.f32 %v2017, %v2069
  %v2077 = vsub.f32 %v1913, %v2070
  %v2078 = vsub.f32 %v1915, %v2070
  %v2079 = vsub.f32 %v2019, %v2070
  %v2080 = vsub.f32 %v2021, %v2070
  %v2081 = vsub.f32 %v1919, %v2071
  %v2082 = vsub.f32 %v1921, %v2071
  %v2083 = vsub.f32 %v2025, %v2071
  %v2084 = vsub.f32 %v2027, %v2071
  %v2085 = vsub.f32 %v1923, %v2072
  %v2086 = vsub.f32 %v1925, %v2072
  %v2087 = vsub.f32 %v2029, %v2072
  %v2088 = vsub.f32 %v2031, %v2072
  %v2089 = vmul.f32 %v2073, %v643
  %v2090 = vmul.f32 %v2074, %v647
  %v2091 = vmul.f32 %v2075, %v651
  %v2092 = vmul.f32 %v2076, %v655
  %v2093 = vmul.f32 %v2077, %v643
  %v2094 = vmul.f32 %v2078, %v647
  %v2095 = vmul.f32 %v2079, %v651
  %v2096 = vmul.f32 %v2080, %v655
  %v2097 = vmul.f32 %v2081, %v643
  %v2098 = vmul.f32 %v2082, %v647
  %v2099 = vmul.f32 %v2083, %v651
  %v2100 = vmul.f32 %v2084, %v655
  %v2101 = vmul.f32 %v2085, %v643
  %v2102 = vmul.f32 %v2086, %v647
  %v2103 = vmul.f32 %v2087, %v651
  %v2104 = vmul.f32 %v2088, %v655
  %v2105 = vmul.f32 %v2089, %v2089
  %v2106 = vmul.f32 %v2090, %v2090
  %v2107 = vmul.f32 %v2091, %v2091
  %v2108 = vmul.f32 %v2092, %v2092
  %v2109 = vmul.f32 %v2093, %v2093
  %v2110 = vmul.f32 %v2094, %v2094
  %v2111 = vmul.f32 %v2095, %v2095
  %v2112 = vmul.f32 %v2096, %v2096
  %v2113 = vmul.f32 %v2097, %v2097
  %v2114 = vmul.f32 %v2098, %v2098
  %v2115 = vmul.f32 %v2099, %v2099
  %v2116 = vmul.f32 %v2100, %v2100
  %v2117 = vmul.f32 %v2101, %v2101
  %v2118 = vmul.f32 %v2102, %v2102
  %v2119 = vmul.f32 %v2103, %v2103
  %v2120 = vmul.f32 %v2104, %v2104
  %v2121 = vadd.f32 %v2105, %v2106
  %v2122 = vadd.f32 %v2121, %v2107
  %v2123 = vadd.f32 %v2122, %v2108
  %2124 = vadd.xlane.f32.xlu0 %v2123
  %v2125 = vpop.xlane.xlu0 %2124
  %v2126 = vadd.f32 %v2109, %v2110
  %v2127 = vadd.f32 %v2126, %v2111
  %v2128 = vadd.f32 %v2127, %v2112
  %2129 = vadd.xlane.f32.xlu0 %v2128
  %v2130 = vpop.xlane.xlu0 %2129
  %v2131 = vadd.f32 %v2113, %v2114
  %v2132 = vadd.f32 %v2131, %v2115
  %v2133 = vadd.f32 %v2132, %v2116
  %2134 = vadd.xlane.f32.xlu0 %v2133
  %v2135 = vpop.xlane.xlu0 %2134
  %v2136 = vadd.f32 %v2117, %v2118
  %v2137 = vadd.f32 %v2136, %v2119
  %v2138 = vadd.f32 %v2137, %v2120
  %2139 = vadd.xlane.f32.xlu0 %v2138
  %v2140 = vpop.xlane.xlu0 %2139
  %v2141 = vmul.f32 %v2125, 0.001953125
  %v2142 = vmul.f32 %v2130, 0.001953125
  %v2143 = vmul.f32 %v2135, 0.001953125
  %v2144 = vmul.f32 %v2140, 0.001953125
  %v2145 = vld [vmem:[%s6] sm:$0xff]
  %v2146 = vld [vmem:[%s6 + $0x8] sm:$0xff]
  %v2147 = vld [vmem:[%s6 + $0x10] sm:$0xff]
  %v2148 = vld [vmem:[%s6 + $0x18] sm:$0xff]
  %v2149 = vadd.f32 %v2141, 1e-05
  %v2150 = vadd.f32 %v2142, 1e-05
  %v2151 = vadd.f32 %v2143, 1e-05
  %v2152 = vadd.f32 %v2144, 1e-05
  %v2153 = vrsqrt.pop %v2149
  %v2154 = vrsqrt.pop %v2150
  %v2155 = vrsqrt.pop %v2151
  %v2156 = vrsqrt.pop %v2152
  %v2157 = vmul.f32 %v2145, %v2153
  %v2158 = vmul.f32 %v2146, %v2154
  %v2159 = vmul.f32 %v2147, %v2155
  %v2160 = vmul.f32 %v2148, %v2156
  %v2161 = vld [vmem:[%s7] sm:$0xff]
  %v2162 = vld [vmem:[%s7 + $0x8] sm:$0xff]
  %v2163 = vld [vmem:[%s7 + $0x10] sm:$0xff]
  %v2164 = vld [vmem:[%s7 + $0x18] sm:$0xff]
  %v2165 = vmul.f32 %v2069, %v2157
  %v2166 = vmul.f32 %v2070, %v2158
  %v2167 = vmul.f32 %v2071, %v2159
  %v2168 = vmul.f32 %v2072, %v2160
  %v2169 = vsub.f32 %v2161, %v2165
  %v2170 = vsub.f32 %v2162, %v2166
  %v2171 = vsub.f32 %v2163, %v2167
  %v2172 = vsub.f32 %v2164, %v2168
  %2174 = vset.pattern.permute.xlu0 0
  %2175 = vperm.xlu0 %2174, %v2157
  %v2176 = vpop.permute.xlu0 %2175
  %2179 = vset.pattern.permute.xlu0 0
  %2180 = vperm.xlu0 %2179, %v2158
  %v2181 = vpop.permute.xlu0 %2180
  %2184 = vset.pattern.permute.xlu0 0
  %2185 = vperm.xlu0 %2184, %v2159
  %v2186 = vpop.permute.xlu0 %2185
  %2189 = vset.pattern.permute.xlu0 0
  %2190 = vperm.xlu0 %2189, %v2160
  %v2191 = vpop.permute.xlu0 %2190
  %v2193 = vmul.f32 %v1909, %v2176
  %v2194 = vmul.f32 %v1911, %v2176
  %v2195 = vmul.f32 %v2015, %v2176
  %v2196 = vmul.f32 %v2017, %v2176
  %v2197 = vmul.f32 %v1913, %v2181
  %v2198 = vmul.f32 %v1915, %v2181
  %v2199 = vmul.f32 %v2019, %v2181
  %v2200 = vmul.f32 %v2021, %v2181
  %v2201 = vmul.f32 %v1919, %v2186
  %v2202 = vmul.f32 %v1921, %v2186
  %v2203 = vmul.f32 %v2025, %v2186
  %v2204 = vmul.f32 %v2027, %v2186
  %v2205 = vmul.f32 %v1923, %v2191
  %v2206 = vmul.f32 %v1925, %v2191
  %v2207 = vmul.f32 %v2029, %v2191
  %v2208 = vmul.f32 %v2031, %v2191
  %2210 = vset.pattern.permute.xlu0 0
  %2211 = vperm.xlu0 %2210, %v2169
  %v2212 = vpop.permute.xlu0 %2211
  %2215 = vset.pattern.permute.xlu0 0
  %2216 = vperm.xlu0 %2215, %v2170
  %v2217 = vpop.permute.xlu0 %2216
  %2220 = vset.pattern.permute.xlu0 0
  %2221 = vperm.xlu0 %2220, %v2171
  %v2222 = vpop.permute.xlu0 %2221
  %2225 = vset.pattern.permute.xlu0 0
  %2226 = vperm.xlu0 %2225, %v2172
  %v2227 = vpop.permute.xlu0 %2226
  %v2229 = vadd.f32 %v2193, %v2212
  %v2230 = vadd.f32 %v2194, %v2212
  %v2231 = vadd.f32 %v2195, %v2212
  %v2232 = vadd.f32 %v2196, %v2212
  %v2233 = vadd.f32 %v2197, %v2217
  %v2234 = vadd.f32 %v2198, %v2217
  %v2235 = vadd.f32 %v2199, %v2217
  %v2236 = vadd.f32 %v2200, %v2217
  %v2237 = vadd.f32 %v2201, %v2222
  %v2238 = vadd.f32 %v2202, %v2222
  %v2239 = vadd.f32 %v2203, %v2222
  %v2240 = vadd.f32 %v2204, %v2222
  %v2241 = vadd.f32 %v2205, %v2227
  %v2242 = vadd.f32 %v2206, %v2227
  %v2243 = vadd.f32 %v2207, %v2227
  %v2244 = vadd.f32 %v2208, %v2227
  %v2245 = vmax.f32 %v2229, 0.0
  %v2246 = vmax.f32 %v2230, 0.0
  %v2247 = vmax.f32 %v2231, 0.0
  %v2248 = vmax.f32 %v2232, 0.0
  %v2249 = vmax.f32 %v2233, 0.0
  %v2250 = vmax.f32 %v2234, 0.0
  %v2251 = vmax.f32 %v2235, 0.0
  %v2252 = vmax.f32 %v2236, 0.0
  %v2253 = vmax.f32 %v2237, 0.0
  %v2254 = vmax.f32 %v2238, 0.0
  %v2255 = vmax.f32 %v2239, 0.0
  %v2256 = vmax.f32 %v2240, 0.0
  %v2257 = vmax.f32 %v2241, 0.0
  %v2258 = vmax.f32 %v2242, 0.0
  %v2259 = vmax.f32 %v2243, 0.0
  %v2260 = vmax.f32 %v2244, 0.0
  %2261 = vst [vmem:[%s8] sm:$0xff] %v2245
  %2262 = vst [vmem:[%s8 + $0x8] sm:$0xff] %v2246
  %2263 = vst [vmem:[%s8 + $0x10] sm:$0xff] %v2247
  %2264 = vst [vmem:[%s8 + $0x18] sm:$0xff] %v2248
  %2265 = vst [vmem:[%s8 + $0x20] sm:$0xff] %v2249
  %2266 = vst [vmem:[%s8 + $0x28] sm:$0xff] %v2250
  %2267 = vst [vmem:[%s8 + $0x30] sm:$0xff] %v2251
  %2268 = vst [vmem:[%s8 + $0x38] sm:$0xff] %v2252
  %2269 = vst [vmem:[%s8 + $0x40] sm:$0xff] %v2253
  %2270 = vst [vmem:[%s8 + $0x48] sm:$0xff] %v2254
  %2271 = vst [vmem:[%s8 + $0x50] sm:$0xff] %v2255
  %2272 = vst [vmem:[%s8 + $0x58] sm:$0xff] %v2256
  %2273 = vst [vmem:[%s8 + $0x60] sm:$0xff] %v2257
  %2274 = vst [vmem:[%s8 + $0x68] sm:$0xff] %v2258
  %2275 = vst [vmem:[%s8 + $0x70] sm:$0xff] %v2259
  %2276 = vst [vmem:[%s8 + $0x78] sm:$0xff] %v2260
  // Predicated region
  $region34: #{double_conv_forward.1} parent=0 // pred_check
    _
  $region35: #{double_conv_forward.1} parent=0 // pred_check_branch
    %2278 = sbr.rel (0) target = $region37
  $region36: #{double_conv_forward.1} parent=0 // pred_region
    _
  $region37: #{double_conv_forward.1} parent=0 // pred_fallthru
    _
  // Predicated region
  $region38: #{double_conv_forward.1} parent=0 // pred_check
    _
  $region39: #{double_conv_forward.1} parent=0 // pred_check_branch
    %2280 = sbr.rel (0) target = $region41
  $region40: #{double_conv_forward.1} parent=0 // pred_region
    _
  $region41: #{double_conv_forward.1} parent=0 // pred_fallthru
    _

</llo_original>
